<compile_context>
chip_gen: v7x
topology: tpu7x:2x2x1
jax: 0.10.0
libtpu: 0.0.40
codegen_flags: <defaults>
</compile_context>

<pallas_src>
import functools
import math

import numpy as np
import jax
import jax.numpy as jnp
from jax.experimental import pallas as pl
from jax.experimental.pallas import tpu as pltpu

EPS = 1e-5
LEAKY_SLOPE = 0.01


def _default_vmem_limit():
    # Generation-aware scoped-VMEM budget: ~3/4 of physical VMEM, capped.
    # v7x (64 MiB) -> 48 MiB, v6e/v5e (128 MiB) -> 96 MiB.
    try:
        cap = getattr(pltpu.get_tpu_info(), "vmem_capacity_bytes", None)
        if cap:
            return int(min(cap * 3 // 4, 112 * 1024 * 1024))
    except Exception:
        pass
    return 48 * 1024 * 1024


VMEM_LIMIT = _default_vmem_limit()


def _leaky(x):
    return jnp.where(x >= 0, x, LEAKY_SLOPE * x)


def _norm(x, axis):
    mu = jnp.mean(x, axis=axis, keepdims=True)
    var = jnp.mean(jnp.square(x - mu), axis=axis, keepdims=True)
    return (x - mu) * jax.lax.rsqrt(var + EPS)


def _round_up(x, m):
    return ((x + m - 1) // m) * m


# --------------------------------------------------------------------------- kernel 1
# norm_embed (InstanceNorm over L) + linear_proj (2x Linear+InstanceNorm-over-feat+
# LeakyReLU, final Linear) + concat(attention features) + `normalize` (over L).
def _embed_kernel(x_ref, a_ref, w1_ref, b1_ref, w2_ref, b2_ref, w3_ref, b3_ref, o_ref):
    x = x_ref[0]                                   # (L, F) f32
    x = _norm(x, axis=0)                           # InstanceNorm over L (sublane axis)
    h = jnp.dot(x.astype(jnp.bfloat16), w1_ref[...],
                preferred_element_type=jnp.float32) + b1_ref[...]
    h = _leaky(_norm(h, axis=-1))
    h = jnp.dot(h.astype(jnp.bfloat16), w2_ref[...],
                preferred_element_type=jnp.float32) + b2_ref[...]
    h = _leaky(_norm(h, axis=-1))
    proj = jnp.dot(h.astype(jnp.bfloat16), w3_ref[...],
                   preferred_element_type=jnp.float32) + b3_ref[...]
    cat = jnp.concatenate([proj, a_ref[0]], axis=-1)       # (L, D)
    o_ref[0] = _norm(cat, axis=0)                  # `normalize`: InstanceNorm over L


def embed_proj(x, a, p):
    n, l, f = x.shape
    aa = a.shape[-1]
    f2 = p["lp_w1"].shape[1]
    f4 = p["lp_w3"].shape[1]
    d = f4 + aa
    return pl.pallas_call(
        _embed_kernel,
        out_shape=jax.ShapeDtypeStruct((n, l, d), jnp.float32),
        grid=(n,),
        in_specs=[
            pl.BlockSpec((1, l, f), lambda i: (i, 0, 0)),
            pl.BlockSpec((1, l, aa), lambda i: (i, 0, 0)),
            pl.BlockSpec((f, f2), lambda i: (0, 0)),
            pl.BlockSpec((1, f2), lambda i: (0, 0)),
            pl.BlockSpec((f2, f4), lambda i: (0, 0)),
            pl.BlockSpec((1, f4), lambda i: (0, 0)),
            pl.BlockSpec((f4, f4), lambda i: (0, 0)),
            pl.BlockSpec((1, f4), lambda i: (0, 0)),
        ],
        out_specs=pl.BlockSpec((1, l, d), lambda i: (i, 0, 0)),
        compiler_params=pltpu.CompilerParams(
            dimension_semantics=("parallel",), vmem_limit_bytes=VMEM_LIMIT),
    )(x, a, p["lp_w1"], p["lp_b1"], p["lp_w2"], p["lp_b2"], p["lp_w3"], p["lp_b3"])


# --------------------------------------------------------------------------- kernel 2
# Full TransformerEncoder stack in one pallas_call: grid=(batch, layer).  Layer weights
# (stacked on the leading axis) are streamed per grid step; the activation is carried
# layer-to-layer in an f32 VMEM scratch and only the final layer writes the output.
def _encoder_stack_kernel(x_ref, wqkv_ref, bqkv_ref, wo_ref, bo_ref, g1_ref, b1_ref,
                          ffw1_ref, ffb1_ref, ffw2_ref, ffb2_ref, g2_ref, b2_ref,
                          o_ref, xc_ref, attn_ref, *, nhead, head_dim, hd_pad):
    lyr = pl.program_id(1)

    @pl.when(lyr == 0)
    def _():
        xc_ref[...] = x_ref[0]

    x = xc_ref[...]                                 # (L, D) f32 carried activation
    dp = nhead * hd_pad

    # Fused, head-padded QKV projection: padded columns are exact zeros.
    qkv = jnp.dot(x.astype(jnp.bfloat16), wqkv_ref[0],
                  preferred_element_type=jnp.float32) + bqkv_ref[0]     # (L, 3*Dp)
    scale = 1.0 / math.sqrt(head_dim)
    for h in range(nhead):                          # static unroll, 64-aligned slices
        lo = h * hd_pad
        qh = qkv[:, lo:lo + hd_pad].astype(jnp.bfloat16)
        kh = qkv[:, dp + lo:dp + lo + hd_pad].astype(jnp.bfloat16)
        vh = qkv[:, 2 * dp + lo:2 * dp + lo + hd_pad].astype(jnp.bfloat16)
        s = jax.lax.dot_general(qh, kh, (((1,), (1,)), ((), ())),
                                preferred_element_type=jnp.float32) * scale
        s = s - jnp.max(s, axis=-1, keepdims=True)
        pr = jnp.exp(s)
        pr = pr * pl.reciprocal(jnp.sum(pr, axis=-1, keepdims=True), approx=True)
        attn_ref[:, lo:lo + hd_pad] = jnp.dot(pr.astype(jnp.bfloat16), vh,
                                              preferred_element_type=jnp.float32)

    y = jnp.dot(attn_ref[...].astype(jnp.bfloat16), wo_ref[0],
                preferred_element_type=jnp.float32) + bo_ref[0]
    z = _norm(x + y, axis=-1) * g1_ref[0] + b1_ref[0]          # residual + LayerNorm1

    hmid = jnp.maximum(jnp.dot(z.astype(jnp.bfloat16), ffw1_ref[0],
                               preferred_element_type=jnp.float32) + ffb1_ref[0], 0.0)
    y2 = jnp.dot(hmid.astype(jnp.bfloat16), ffw2_ref[0],
                 preferred_element_type=jnp.float32) + ffb2_ref[0]
    zo = _norm(z + y2, axis=-1) * g2_ref[0] + b2_ref[0]        # residual + LayerNorm2

    xc_ref[...] = zo

    @pl.when(lyr == pl.num_programs(1) - 1)
    def _():
        o_ref[0] = zo


def encoder_stack(x, enc, *, nhead, head_dim, hd_pad):
    n, l, d = x.shape
    nl = enc["wqkv"].shape[0]
    dp = nhead * hd_pad
    dff = enc["ffw1"].shape[2]
    kern = functools.partial(_encoder_stack_kernel,
                             nhead=nhead, head_dim=head_dim, hd_pad=hd_pad)

    def wspec(shape):
        return pl.BlockSpec((1,) + shape, lambda i, ll: (ll, 0, 0))

    # NOTE: the layer-carry makes L-tiling (v7x dual-TC load balance at N==1) impossible
    # inside this call; batch-axis "parallel" covers megacore when N >= 2.
    return pl.pallas_call(
        kern,
        out_shape=jax.ShapeDtypeStruct((n, l, d), jnp.float32),
        grid=(n, nl),
        in_specs=[
            pl.BlockSpec((1, l, d), lambda i, ll: (i, 0, 0)),
            wspec((d, 3 * dp)), wspec((1, 3 * dp)),
            wspec((dp, d)), wspec((1, d)),
            wspec((1, d)), wspec((1, d)),
            wspec((d, dff)), wspec((1, dff)),
            wspec((dff, d)), wspec((1, d)),
            wspec((1, d)), wspec((1, d)),
        ],
        out_specs=pl.BlockSpec((1, l, d), lambda i, ll: (i, 0, 0)),
        scratch_shapes=[pltpu.VMEM((l, d), jnp.float32),     # carried activation
                        pltpu.VMEM((l, dp), jnp.float32)],   # head-padded attention out
        compiler_params=pltpu.CompilerParams(
            dimension_semantics=("parallel", "arbitrary"),
            vmem_limit_bytes=VMEM_LIMIT),
    )(x, enc["wqkv"], enc["bqkv"], enc["wo"], enc["bo"], enc["g1"], enc["b1"],
      enc["ffw1"], enc["ffb1"], enc["ffw2"], enc["ffb2"], enc["g2"], enc["b2"])


# --------------------------------------------------------------------------- kernel 3
# to_residue_small + Conv1d(valid, no bias) as ONE im2col dot + eval-BatchNorm fold.
def _residue_conv_kernel(x_ref, rw1_ref, rb1_ref, rw2_ref, rb2_ref,
                         cw_ref, scale_ref, shift_ref, o_ref, *, ksize, lout):
    x = x_ref[0]                                   # (L, D)
    r = _leaky(jnp.dot(x.astype(jnp.bfloat16), rw1_ref[...],
                       preferred_element_type=jnp.float32) + rb1_ref[...])
    label = (jnp.dot(r.astype(jnp.bfloat16), rw2_ref[...],
                     preferred_element_type=jnp.float32) + rb2_ref[...]).astype(jnp.bfloat16)
    # im2col: (Lout, ksize*C) from sublane-shifted slices, single K=ksize*C contraction.
    cols = jnp.concatenate([label[k:k + lout, :] for k in range(ksize)], axis=-1)
    acc = jnp.dot(cols, cw_ref[...], preferred_element_type=jnp.float32)   # (Lout, Co)
    o_ref[0] = acc * scale_ref[...] + shift_ref[...]


def residue_conv(x, p, *, ksize):
    n, l, d = x.shape
    c = p["res_w2"].shape[1]
    co = p["conv_w"].shape[1]
    lout = l + 1 - ksize
    kern = functools.partial(_residue_conv_kernel, ksize=ksize, lout=lout)
    return pl.pallas_call(
        kern,
        out_shape=jax.ShapeDtypeStruct((n, lout, co), jnp.float32),
        grid=(n,),
        in_specs=[
            pl.BlockSpec((1, l, d), lambda i: (i, 0, 0)),
            pl.BlockSpec((d, d), lambda i: (0, 0)),
            pl.BlockSpec((1, d), lambda i: (0, 0)),
            pl.BlockSpec((d, c), lambda i: (0, 0)),
            pl.BlockSpec((1, c), lambda i: (0, 0)),
            pl.BlockSpec((ksize * c, co), lambda i: (0, 0)),
            pl.BlockSpec((1, co), lambda i: (0, 0)),
            pl.BlockSpec((1, co), lambda i: (0, 0)),
        ],
        out_specs=pl.BlockSpec((1, lout, co), lambda i: (i, 0, 0)),
        compiler_params=pltpu.CompilerParams(
            dimension_semantics=("parallel",), vmem_limit_bytes=VMEM_LIMIT),
    )(x, p["res_w1"], p["res_b1"], p["res_w2"], p["res_b2"],
      p["conv_w"], p["bn_scale"], p["bn_shift"])


# --------------------------------------------------------------------------- kernel 4
def _tiled_linear_kernel(x_ref, w_ref, b_ref, o_ref, acc_ref, *, act):
    @pl.when(pl.program_id(1) == 0)
    def _():
        acc_ref[...] = jnp.zeros_like(acc_ref)

    acc_ref[...] += jnp.dot(x_ref[...].astype(jnp.bfloat16), w_ref[...],
                            preferred_element_type=jnp.float32)

    @pl.when(pl.program_id(1) == pl.num_programs(1) - 1)
    def _():
        y = acc_ref[...] + b_ref[...]
        if act == "leaky":
            y = jnp.where(y >= 0, y, LEAKY_SLOPE * y)
        o_ref[...] = y.astype(o_ref.dtype)


def linear_tiled(x, w, b, *, act=None, tk=2048, tn=2048):
    """y = act(x @ w + b) with the weight streamed in (tk, tn) tiles.

    Weights/biases are pre-padded to tile multiples at init (no runtime jnp.pad of the
    large stability weight); small dims fall back to a single full block.
    """
    m, k = x.shape
    kw, n = w.shape
    assert k == kw, (k, kw)
    tke = tk if (k > tk and k % tk == 0) else k
    tne = tn if (n > tn and n % tn == 0) else n
    return pl.pallas_call(
        functools.partial(_tiled_linear_kernel, act=act),
        out_shape=jax.ShapeDtypeStruct((m, n), jnp.float32),
        grid=(n // tne, k // tke),
        in_specs=[
            pl.BlockSpec((m, tke), lambda j, kk: (0, kk)),
            pl.BlockSpec((tke, tne), lambda j, kk: (kk, j)),
            pl.BlockSpec((1, tne), lambda j, kk: (0, j)),
        ],
        out_specs=pl.BlockSpec((m, tne), lambda j, kk: (0, j)),
        scratch_shapes=[pltpu.VMEM((m, tne), jnp.float32)],
        compiler_params=pltpu.CompilerParams(
            dimension_semantics=("parallel", "arbitrary"),
            vmem_limit_bytes=VMEM_LIMIT),
    )(x, w, b)


# --------------------------------------------------------------------------- params
def _dense(key, fan_in, fan_out):
    kw, kb = jax.random.split(key)
    bound = 1.0 / np.sqrt(fan_in)
    w = jax.random.uniform(kw, (fan_in, fan_out), jnp.float32, -bound, bound)
    b = jax.random.uniform(kb, (1, fan_out), jnp.float32, -bound, bound)
    return w.astype(jnp.bfloat16), b      # weights bf16 (MXU operands), biases f32


def init_params(key, cfg):
    F, A, L = cfg["F"], cfg["A"], cfg["L"]
    D = F // 4 + A
    nhead = cfg["nhead"]
    assert D % nhead == 0
    head_dim = D // nhead
    hd_pad = _round_up(head_dim, 64)       # 60 -> 64 at prod shapes; exact-zero padding
    Dp = nhead * hd_pad
    dff = cfg["dff"]
    nl = cfg["numlayers"]
    ks, cc, co = cfg["kernel_size"], cfg["condense_channels"], cfg["conv_out_channels"]
    lout = L + 1 - ks
    keys = iter(jax.random.split(key, 4 * nl + 16))
    p = {}

    # linear_proj
    p["lp_w1"], p["lp_b1"] = _dense(next(keys), F, F // 2)
    p["lp_w2"], p["lp_b2"] = _dense(next(keys), F // 2, F // 4)
    p["lp_w3"], p["lp_b3"] = _dense(next(keys), F // 4, F // 4)

    # Transformer encoder layers, head-padded and stacked over the layer axis.
    def pad_head_cols(w, b):
        w = w.reshape(D, nhead, head_dim)
        w = jnp.pad(w, ((0, 0), (0, 0), (0, hd_pad - head_dim))).reshape(D, Dp)
        b = b.reshape(1, nhead, head_dim)
        b = jnp.pad(b, ((0, 0), (0, 0), (0, hd_pad - head_dim))).reshape(1, Dp)
        return w, b

    names = ("wqkv", "bqkv", "wo", "bo", "ffw1", "ffb1", "ffw2", "ffb2",
             "g1", "b1", "g2", "b2")
    stk = {k: [] for k in names}
    for _ in range(nl):
        w, b = _dense(next(keys), D, 3 * D)
        wq, bq = pad_head_cols(w[:, :D], b[:, :D])
        wk, bk = pad_head_cols(w[:, D:2 * D], b[:, D:2 * D])
        wv, bv = pad_head_cols(w[:, 2 * D:], b[:, 2 * D:])
        stk["wqkv"].append(jnp.concatenate([wq, wk, wv], axis=1))     # (D, 3*Dp)
        stk["bqkv"].append(jnp.concatenate([bq, bk, bv], axis=1))     # (1, 3*Dp)
        wo, bo = _dense(next(keys), D, D)
        wo = wo.reshape(nhead, head_dim, D)
        wo = jnp.pad(wo, ((0, 0), (0, hd_pad - head_dim), (0, 0))).reshape(Dp, D)
        stk["wo"].append(wo)
        stk["bo"].append(bo)
        fw1, fb1 = _dense(next(keys), D, dff)
        fw2, fb2 = _dense(next(keys), dff, D)
        stk["ffw1"].append(fw1); stk["ffb1"].append(fb1)
        stk["ffw2"].append(fw2); stk["ffb2"].append(fb2)
        stk["g1"].append(jnp.ones((1, D), jnp.float32))
        stk["b1"].append(jnp.zeros((1, D), jnp.float32))
        stk["g2"].append(jnp.ones((1, D), jnp.float32))
        stk["b2"].append(jnp.zeros((1, D), jnp.float32))
    p["enc"] = {k: jnp.stack(v) for k, v in stk.items()}

    # to_residue_small
    p["res_w1"], p["res_b1"] = _dense(next(keys), D, D)
    p["res_w2"], p["res_b2"] = _dense(next(keys), D, cc)

    # conv_to_stability_small: Conv1d weight stored pre-reshaped for im2col (k*C+c, Co)
    bound = 1.0 / np.sqrt(cc * ks)
    conv_w = jax.random.uniform(next(keys), (ks, cc, co), jnp.float32, -bound, bound)
    p["conv_w"] = conv_w.reshape(ks * cc, co).astype(jnp.bfloat16)
    # BatchNorm1d eval-mode (default stats) folded to per-channel scale/shift
    gamma, beta = jnp.ones((co,), jnp.float32), jnp.zeros((co,), jnp.float32)
    r_mean, r_var = jnp.zeros((co,), jnp.float32), jnp.ones((co,), jnp.float32)
    scale = gamma / jnp.sqrt(r_var + EPS)
    p["bn_scale"] = scale.reshape(1, co)
    p["bn_shift"] = (beta - r_mean * scale).reshape(1, co)

    # stability MLP head: permute w1 rows (fold PyTorch channel-major flatten) and
    # pre-pad weights/biases to the streaming tile grid (done once, at init).
    flat = co * lout
    hid = cfg["stab_hidden"]
    TK = TN = cfg["stab_tile"]
    k1p = _round_up(flat, TK) if flat > TK else flat
    n1p = _round_up(flat, TN) if flat > TN else flat
    w1, b1 = _dense(next(keys), flat, flat)
    nat = np.arange(flat)
    perm = (nat % co) * lout + (nat // co)        # natural (l*Co+co) -> torch (co*Lout+l)
    w1 = w1[perm]
    w1 = jnp.pad(w1, ((0, k1p - flat), (0, n1p - flat)))
    b1 = jnp.pad(b1, ((0, 0), (0, n1p - flat)))
    w2, b2 = _dense(next(keys), flat, hid)
    w2 = jnp.pad(w2, ((0, n1p - flat), (0, 0)))
    w3, b3 = _dense(next(keys), hid, 1)
    p["stab"] = [(w1, b1), (w2, b2), (w3, b3)]
    return p


# --------------------------------------------------------------------------- forward
def transformer_forward(params, cfg, msa_query_embeddings, msa_attention_features):
    N = msa_query_embeddings.shape[0]
    nhead = cfg["nhead"]
    D = cfg["F"] // 4 + cfg["A"]
    head_dim = D // nhead
    hd_pad = _round_up(head_dim, 64)

    attn_feat = msa_attention_features[:, 0, :, :]               # (N, L, A)

    # norm_embed + linear_proj + concat + normalize, fused per batch element
    x = embed_proj(msa_query_embeddings, attn_feat, params)      # (N, L, D)

    # Full TransformerEncoder stack (post-norm, ReLU FFN) in one pallas_call
    x = encoder_stack(x, params["enc"], nhead=nhead, head_dim=head_dim, hd_pad=hd_pad)

    # to_residue_small + Conv1d(im2col) + BatchNorm fold, conv result in (N, Lout, Co)
    conv = residue_conv(x, params, ksize=cfg["kernel_size"])
    # st_w1 rows were permuted at init, so the natural flatten is already correct.
    s = conv.reshape(N, -1)

    # stability head: weight-streaming tiled linears over pre-padded weights
    for (w, b), act in zip(params["stab"], ("leaky", "leaky", None)):
        if s.shape[1] < w.shape[0]:
            s = jnp.pad(s, ((0, 0), (0, w.shape[0] - s.shape[1])))   # cheap (N, K) pad
        s = linear_tiled(s, w, b, act=act, tk=cfg["stab_tile"], tn=cfg["stab_tile"])
    return s.reshape(N, 1)


# --------------------------------------------------------------------------- main
if __name__ == "__main__":
    # Small, shape-consistent configuration (prod would be F=768, L=511, A=288,
    # d_model=480, nhead=8, numlayers=3, dff=2048, condense=8, ksize=25, hidden=512;
    # the same code path handles those shapes via the padded/streamed stability head).
    cfg = dict(F=32, L=16, A=8, nhead=2, numlayers=2, dff=32,
               condense_channels=4, kernel_size=5, conv_out_channels=10,
               stab_hidden=32, stab_tile=2048)

    key = jax.random.PRNGKey(0)
    kp, ke, ka = jax.random.split(key, 3)
    params = init_params(kp, cfg)

    N = 2
    msa_query_embeddings = jax.random.normal(ke, (N, cfg["L"], cfg["F"]), jnp.float32)
    msa_attention_features = jax.random.normal(ka, (N, 3, cfg["L"], cfg["A"]), jnp.float32)

    fwd = jax.jit(lambda p, q, a: transformer_forward(p, cfg, q, a))
    out = jax.block_until_ready(fwd(params, msa_query_embeddings, msa_attention_features))
    assert out.shape == (N, 1) and out.dtype == jnp.float32
    print("KERNEL_OK")
</pallas_src>

<mosaic_0001>
module attributes {stable_mosaic.version = 11 : i64} {
  func.func @_embed_kernel(%arg0: i32, %arg1: memref<1x16x32xf32, #tpu.memory_space<vmem>>, %arg2: memref<1x16x8xf32, #tpu.memory_space<vmem>>, %arg3: memref<32x16xbf16, #tpu.memory_space<vmem>>, %arg4: memref<1x16xf32, #tpu.memory_space<vmem>>, %arg5: memref<16x8xbf16, #tpu.memory_space<vmem>>, %arg6: memref<1x8xf32, #tpu.memory_space<vmem>>, %arg7: memref<8x8xbf16, #tpu.memory_space<vmem>>, %arg8: memref<1x8xf32, #tpu.memory_space<vmem>>, %arg9: memref<1x16x16xf32, #tpu.memory_space<vmem>>) attributes {dimension_semantics = [#tpu.dimension_semantics<parallel>], iteration_bounds = array<i64: 2>, scalar_prefetch = 0 : i64, scratch_operands = 0 : i64, tpu.core_type = #tpu.core_type<tc>, window_params = [{transform_indices = @transform_0, window_bounds = array<i64: 1, 16, 32>}, {transform_indices = @transform_1, window_bounds = array<i64: 1, 16, 8>}, {pipeline_mode = #tpu.pipeline_mode<synchronous>, transform_indices = @transform_2, window_bounds = array<i64: 32, 16>}, {pipeline_mode = #tpu.pipeline_mode<synchronous>, transform_indices = @transform_3, window_bounds = array<i64: 1, 16>}, {pipeline_mode = #tpu.pipeline_mode<synchronous>, transform_indices = @transform_4, window_bounds = array<i64: 16, 8>}, {pipeline_mode = #tpu.pipeline_mode<synchronous>, transform_indices = @transform_5, window_bounds = array<i64: 1, 8>}, {pipeline_mode = #tpu.pipeline_mode<synchronous>, transform_indices = @transform_6, window_bounds = array<i64: 8, 8>}, {pipeline_mode = #tpu.pipeline_mode<synchronous>, transform_indices = @transform_7, window_bounds = array<i64: 1, 8>}, {transform_indices = @transform_8, window_bounds = array<i64: 1, 16, 16>}]} {
    %c0 = arith.constant 0 : index
    %c0_0 = arith.constant 0 : index
    %c0_1 = arith.constant 0 : index
    %0 = vector.load %arg1[%c0, %c0_0, %c0_1] : memref<1x16x32xf32, #tpu.memory_space<vmem>>, vector<1x16x32xf32>
    %1 = vector.shape_cast %0 : vector<1x16x32xf32> to vector<16x32xf32>
    %cst = arith.constant dense<0.000000e+00> : vector<32xf32>
    %2 = vector.multi_reduction <add>, %1, %cst [0] : vector<16x32xf32> to vector<32xf32>
    %3 = vector.shape_cast %2 : vector<32xf32> to vector<1x32xf32>
    %cst_2 = arith.constant 1.600000e+01 : f32
    %4 = vector.broadcast %cst_2 : f32 to vector<1x32xf32>
    %5 = arith.divf %3, %4 : vector<1x32xf32>
    %6 = vector.broadcast %5 : vector<1x32xf32> to vector<16x32xf32>
    %7 = arith.subf %1, %6 : vector<16x32xf32>
    %8 = arith.mulf %7, %7 : vector<16x32xf32>
    %cst_3 = arith.constant dense<0.000000e+00> : vector<32xf32>
    %9 = vector.multi_reduction <add>, %8, %cst_3 [0] : vector<16x32xf32> to vector<32xf32>
    %10 = vector.shape_cast %9 : vector<32xf32> to vector<1x32xf32>
    %cst_4 = arith.constant 1.600000e+01 : f32
    %11 = vector.broadcast %cst_4 : f32 to vector<1x32xf32>
    %12 = arith.divf %10, %11 : vector<1x32xf32>
    %13 = vector.broadcast %5 : vector<1x32xf32> to vector<16x32xf32>
    %14 = arith.subf %1, %13 : vector<16x32xf32>
    %cst_5 = arith.constant 9.99999974E-6 : f32
    %15 = vector.broadcast %cst_5 : f32 to vector<1x32xf32>
    %16 = arith.addf %12, %15 : vector<1x32xf32>
    %17 = math.rsqrt %16 : vector<1x32xf32>
    %18 = vector.broadcast %17 : vector<1x32xf32> to vector<16x32xf32>
    %19 = arith.mulf %14, %18 : vector<16x32xf32>
    %20 = arith.truncf %19 : vector<16x32xf32> to vector<16x32xbf16>
    %c0_6 = arith.constant 0 : index
    %c0_7 = arith.constant 0 : index
    %21 = vector.load %arg3[%c0_6, %c0_7] : memref<32x16xbf16, #tpu.memory_space<vmem>>, vector<32x16xbf16>
    %cst_8 = arith.constant dense<0.000000e+00> : vector<16x16xf32>
    %22 = tpu.matmul %20, %21, %cst_8 {dimension_numbers = #tpu.dot_dimension_numbers<[1], [0], [0], [1], [0, 0, 1, 1], [], []>} : vector<16x32xbf16>, vector<32x16xbf16>, vector<16x16xf32> -> vector<16x16xf32>
    %c0_9 = arith.constant 0 : index
    %c0_10 = arith.constant 0 : index
    %23 = vector.load %arg4[%c0_9, %c0_10] : memref<1x16xf32, #tpu.memory_space<vmem>>, vector<1x16xf32>
    %24 = vector.broadcast %23 : vector<1x16xf32> to vector<16x16xf32>
    %25 = arith.addf %22, %24 : vector<16x16xf32>
    %cst_11 = arith.constant dense<0.000000e+00> : vector<16xf32>
    %26 = vector.multi_reduction <add>, %25, %cst_11 [1] : vector<16x16xf32> to vector<16xf32>
    %27 = vector.shape_cast %26 : vector<16xf32> to vector<16x1xf32>
    %cst_12 = arith.constant 1.600000e+01 : f32
    %28 = vector.broadcast %cst_12 : f32 to vector<16x1xf32>
    %29 = arith.divf %27, %28 : vector<16x1xf32>
    %30 = vector.broadcast %29 : vector<16x1xf32> to vector<16x16xf32>
    %31 = arith.subf %25, %30 : vector<16x16xf32>
    %32 = arith.mulf %31, %31 : vector<16x16xf32>
    %cst_13 = arith.constant dense<0.000000e+00> : vector<16xf32>
    %33 = vector.multi_reduction <add>, %32, %cst_13 [1] : vector<16x16xf32> to vector<16xf32>
    %34 = vector.shape_cast %33 : vector<16xf32> to vector<16x1xf32>
    %cst_14 = arith.constant 1.600000e+01 : f32
    %35 = vector.broadcast %cst_14 : f32 to vector<16x1xf32>
    %36 = arith.divf %34, %35 : vector<16x1xf32>
    %37 = vector.broadcast %29 : vector<16x1xf32> to vector<16x16xf32>
    %38 = arith.subf %25, %37 : vector<16x16xf32>
    %cst_15 = arith.constant 9.99999974E-6 : f32
    %39 = vector.broadcast %cst_15 : f32 to vector<16x1xf32>
    %40 = arith.addf %36, %39 : vector<16x1xf32>
    %41 = math.rsqrt %40 : vector<16x1xf32>
    %42 = vector.broadcast %41 : vector<16x1xf32> to vector<16x16xf32>
    %43 = arith.mulf %38, %42 : vector<16x16xf32>
    %cst_16 = arith.constant 0.000000e+00 : f32
    %44 = vector.broadcast %cst_16 : f32 to vector<16x16xf32>
    %45 = arith.cmpf oge, %43, %44 : vector<16x16xf32>
    %cst_17 = arith.constant 0.00999999977 : f32
    %46 = vector.broadcast %cst_17 : f32 to vector<16x16xf32>
    %47 = arith.mulf %46, %43 : vector<16x16xf32>
    %48 = arith.select %45, %43, %47 : vector<16x16xi1>, vector<16x16xf32>
    %49 = arith.truncf %48 : vector<16x16xf32> to vector<16x16xbf16>
    %c0_18 = arith.constant 0 : index
    %c0_19 = arith.constant 0 : index
    %50 = vector.load %arg5[%c0_18, %c0_19] : memref<16x8xbf16, #tpu.memory_space<vmem>>, vector<16x8xbf16>
    %cst_20 = arith.constant dense<0.000000e+00> : vector<16x8xf32>
    %51 = tpu.matmul %49, %50, %cst_20 {dimension_numbers = #tpu.dot_dimension_numbers<[1], [0], [0], [1], [0, 0, 1, 1], [], []>} : vector<16x16xbf16>, vector<16x8xbf16>, vector<16x8xf32> -> vector<16x8xf32>
    %c0_21 = arith.constant 0 : index
    %c0_22 = arith.constant 0 : index
    %52 = vector.load %arg6[%c0_21, %c0_22] : memref<1x8xf32, #tpu.memory_space<vmem>>, vector<1x8xf32>
    %53 = vector.broadcast %52 : vector<1x8xf32> to vector<16x8xf32>
    %54 = arith.addf %51, %53 : vector<16x8xf32>
    %cst_23 = arith.constant dense<0.000000e+00> : vector<16xf32>
    %55 = vector.multi_reduction <add>, %54, %cst_23 [1] : vector<16x8xf32> to vector<16xf32>
    %56 = vector.shape_cast %55 : vector<16xf32> to vector<16x1xf32>
    %cst_24 = arith.constant 8.000000e+00 : f32
    %57 = vector.broadcast %cst_24 : f32 to vector<16x1xf32>
    %58 = arith.divf %56, %57 : vector<16x1xf32>
    %59 = vector.broadcast %58 : vector<16x1xf32> to vector<16x8xf32>
    %60 = arith.subf %54, %59 : vector<16x8xf32>
    %61 = arith.mulf %60, %60 : vector<16x8xf32>
    %cst_25 = arith.constant dense<0.000000e+00> : vector<16xf32>
    %62 = vector.multi_reduction <add>, %61, %cst_25 [1] : vector<16x8xf32> to vector<16xf32>
    %63 = vector.shape_cast %62 : vector<16xf32> to vector<16x1xf32>
    %cst_26 = arith.constant 8.000000e+00 : f32
    %64 = vector.broadcast %cst_26 : f32 to vector<16x1xf32>
    %65 = arith.divf %63, %64 : vector<16x1xf32>
    %66 = vector.broadcast %58 : vector<16x1xf32> to vector<16x8xf32>
    %67 = arith.subf %54, %66 : vector<16x8xf32>
    %cst_27 = arith.constant 9.99999974E-6 : f32
    %68 = vector.broadcast %cst_27 : f32 to vector<16x1xf32>
    %69 = arith.addf %65, %68 : vector<16x1xf32>
    %70 = math.rsqrt %69 : vector<16x1xf32>
    %71 = vector.broadcast %70 : vector<16x1xf32> to vector<16x8xf32>
    %72 = arith.mulf %67, %71 : vector<16x8xf32>
    %cst_28 = arith.constant 0.000000e+00 : f32
    %73 = vector.broadcast %cst_28 : f32 to vector<16x8xf32>
    %74 = arith.cmpf oge, %72, %73 : vector<16x8xf32>
    %cst_29 = arith.constant 0.00999999977 : f32
    %75 = vector.broadcast %cst_29 : f32 to vector<16x8xf32>
    %76 = arith.mulf %75, %72 : vector<16x8xf32>
    %77 = arith.select %74, %72, %76 : vector<16x8xi1>, vector<16x8xf32>
    %78 = arith.truncf %77 : vector<16x8xf32> to vector<16x8xbf16>
    %c0_30 = arith.constant 0 : index
    %c0_31 = arith.constant 0 : index
    %79 = vector.load %arg7[%c0_30, %c0_31] : memref<8x8xbf16, #tpu.memory_space<vmem>>, vector<8x8xbf16>
    %cst_32 = arith.constant dense<0.000000e+00> : vector<16x8xf32>
    %80 = tpu.matmul %78, %79, %cst_32 {dimension_numbers = #tpu.dot_dimension_numbers<[1], [0], [0], [1], [0, 0, 1, 1], [], []>} : vector<16x8xbf16>, vector<8x8xbf16>, vector<16x8xf32> -> vector<16x8xf32>
    %c0_33 = arith.constant 0 : index
    %c0_34 = arith.constant 0 : index
    %81 = vector.load %arg8[%c0_33, %c0_34] : memref<1x8xf32, #tpu.memory_space<vmem>>, vector<1x8xf32>
    %82 = vector.broadcast %81 : vector<1x8xf32> to vector<16x8xf32>
    %83 = arith.addf %80, %82 : vector<16x8xf32>
    %c0_35 = arith.constant 0 : index
    %c0_36 = arith.constant 0 : index
    %c0_37 = arith.constant 0 : index
    %84 = vector.load %arg2[%c0_35, %c0_36, %c0_37] : memref<1x16x8xf32, #tpu.memory_space<vmem>>, vector<1x16x8xf32>
    %85 = vector.shape_cast %84 : vector<1x16x8xf32> to vector<16x8xf32>
    %86 = tpu.concatenate %83, %85 in 1 : vector<16x8xf32>, vector<16x8xf32> -> vector<16x16xf32>
    %cst_38 = arith.constant dense<0.000000e+00> : vector<16xf32>
    %87 = vector.multi_reduction <add>, %86, %cst_38 [0] : vector<16x16xf32> to vector<16xf32>
    %88 = vector.shape_cast %87 : vector<16xf32> to vector<1x16xf32>
    %cst_39 = arith.constant 1.600000e+01 : f32
    %89 = vector.broadcast %cst_39 : f32 to vector<1x16xf32>
    %90 = arith.divf %88, %89 : vector<1x16xf32>
    %91 = vector.broadcast %90 : vector<1x16xf32> to vector<16x16xf32>
    %92 = arith.subf %86, %91 : vector<16x16xf32>
    %93 = arith.mulf %92, %92 : vector<16x16xf32>
    %cst_40 = arith.constant dense<0.000000e+00> : vector<16xf32>
    %94 = vector.multi_reduction <add>, %93, %cst_40 [0] : vector<16x16xf32> to vector<16xf32>
    %95 = vector.shape_cast %94 : vector<16xf32> to vector<1x16xf32>
    %cst_41 = arith.constant 1.600000e+01 : f32
    %96 = vector.broadcast %cst_41 : f32 to vector<1x16xf32>
    %97 = arith.divf %95, %96 : vector<1x16xf32>
    %98 = vector.broadcast %90 : vector<1x16xf32> to vector<16x16xf32>
    %99 = arith.subf %86, %98 : vector<16x16xf32>
    %cst_42 = arith.constant 9.99999974E-6 : f32
    %100 = vector.broadcast %cst_42 : f32 to vector<1x16xf32>
    %101 = arith.addf %97, %100 : vector<1x16xf32>
    %102 = math.rsqrt %101 : vector<1x16xf32>
    %103 = vector.broadcast %102 : vector<1x16xf32> to vector<16x16xf32>
    %104 = arith.mulf %99, %103 : vector<16x16xf32>
    %c0_43 = arith.constant 0 : index
    %c0_44 = arith.constant 0 : index
    %c0_45 = arith.constant 0 : index
    %105 = vector.load %arg9[%c0_43, %c0_44, %c0_45] : memref<1x16x16xf32, #tpu.memory_space<vmem>>, vector<1x16x16xf32>
    %106 = vector.shape_cast %105 : vector<1x16x16xf32> to vector<16x16xf32>
    %107 = vector.shape_cast %104 : vector<16x16xf32> to vector<1x16x16xf32>
    tpu.vector_store %arg9[%c0_43, %c0_44, %c0_45], %107 {strides = array<i32>} : memref<1x16x16xf32, #tpu.memory_space<vmem>>, vector<1x16x16xf32>,
    return
  }
  func.func @transform_0(%arg0: i32) -> (i32, i32, i32) {
    %c0_i32 = arith.constant 0 : i32
    %c0_i32_0 = arith.constant 0 : i32
    %c0_i32_1 = arith.constant 0 : i32
    return %arg0, %c0_i32, %c0_i32_0 : i32, i32, i32
  }
  func.func @transform_1(%arg0: i32) -> (i32, i32, i32) {
    %c0_i32 = arith.constant 0 : i32
    %c0_i32_0 = arith.constant 0 : i32
    %c0_i32_1 = arith.constant 0 : i32
    return %arg0, %c0_i32, %c0_i32_0 : i32, i32, i32
  }
  func.func @transform_2(%arg0: i32) -> (i32, i32) {
    %c0_i32 = arith.constant 0 : i32
    %c0_i32_0 = arith.constant 0 : i32
    %c0_i32_1 = arith.constant 0 : i32
    return %c0_i32, %c0_i32_0 : i32, i32
  }
  func.func @transform_3(%arg0: i32) -> (i32, i32) {
    %c0_i32 = arith.constant 0 : i32
    %c0_i32_0 = arith.constant 0 : i32
    %c0_i32_1 = arith.constant 0 : i32
    return %c0_i32, %c0_i32_0 : i32, i32
  }
  func.func @transform_4(%arg0: i32) -> (i32, i32) {
    %c0_i32 = arith.constant 0 : i32
    %c0_i32_0 = arith.constant 0 : i32
    %c0_i32_1 = arith.constant 0 : i32
    return %c0_i32, %c0_i32_0 : i32, i32
  }
  func.func @transform_5(%arg0: i32) -> (i32, i32) {
    %c0_i32 = arith.constant 0 : i32
    %c0_i32_0 = arith.constant 0 : i32
    %c0_i32_1 = arith.constant 0 : i32
    return %c0_i32, %c0_i32_0 : i32, i32
  }
  func.func @transform_6(%arg0: i32) -> (i32, i32) {
    %c0_i32 = arith.constant 0 : i32
    %c0_i32_0 = arith.constant 0 : i32
    %c0_i32_1 = arith.constant 0 : i32
    return %c0_i32, %c0_i32_0 : i32, i32
  }
  func.func @transform_7(%arg0: i32) -> (i32, i32) {
    %c0_i32 = arith.constant 0 : i32
    %c0_i32_0 = arith.constant 0 : i32
    %c0_i32_1 = arith.constant 0 : i32
    return %c0_i32, %c0_i32_0 : i32, i32
  }
  func.func @transform_8(%arg0: i32) -> (i32, i32, i32) {
    %c0_i32 = arith.constant 0 : i32
    %c0_i32_0 = arith.constant 0 : i32
    %c0_i32_1 = arith.constant 0 : i32
    return %arg0, %c0_i32, %c0_i32_0 : i32, i32, i32
  }
}

module attributes {stable_mosaic.version = 11 : i64} {
  func.func @_encoder_stack_kernel(%arg0: i32, %arg1: i32, %arg2: memref<1x16x16xf32, #tpu.memory_space<vmem>>, %arg3: memref<1x16x384xbf16, #tpu.memory_space<vmem>>, %arg4: memref<1x1x384xf32, #tpu.memory_space<vmem>>, %arg5: memref<1x128x16xbf16, #tpu.memory_space<vmem>>, %arg6: memref<1x1x16xf32, #tpu.memory_space<vmem>>, %arg7: memref<1x1x16xf32, #tpu.memory_space<vmem>>, %arg8: memref<1x1x16xf32, #tpu.memory_space<vmem>>, %arg9: memref<1x16x32xbf16, #tpu.memory_space<vmem>>, %arg10: memref<1x1x32xf32, #tpu.memory_space<vmem>>, %arg11: memref<1x32x16xbf16, #tpu.memory_space<vmem>>, %arg12: memref<1x1x16xf32, #tpu.memory_space<vmem>>, %arg13: memref<1x1x16xf32, #tpu.memory_space<vmem>>, %arg14: memref<1x1x16xf32, #tpu.memory_space<vmem>>, %arg15: memref<1x16x16xf32, #tpu.memory_space<vmem>>, %arg16: memref<16x16xf32, #tpu.memory_space<vmem>>, %arg17: memref<16x128xf32, #tpu.memory_space<vmem>>) attributes {dimension_semantics = [#tpu.dimension_semantics<parallel>, #tpu.dimension_semantics<arbitrary>], iteration_bounds = array<i64: 2, 2>, scalar_prefetch = 0 : i64, scratch_operands = 2 : i64, tpu.core_type = #tpu.core_type<tc>, window_params = [{transform_indices = @transform_0, window_bounds = array<i64: 1, 16, 16>}, {transform_indices = @transform_1, window_bounds = array<i64: 1, 16, 384>}, {transform_indices = @transform_2, window_bounds = array<i64: 1, 1, 384>}, {transform_indices = @transform_3, window_bounds = array<i64: 1, 128, 16>}, {transform_indices = @transform_4, window_bounds = array<i64: 1, 1, 16>}, {transform_indices = @transform_5, window_bounds = array<i64: 1, 1, 16>}, {transform_indices = @transform_6, window_bounds = array<i64: 1, 1, 16>}, {transform_indices = @transform_7, window_bounds = array<i64: 1, 16, 32>}, {transform_indices = @transform_8, window_bounds = array<i64: 1, 1, 32>}, {transform_indices = @transform_9, window_bounds = array<i64: 1, 32, 16>}, {transform_indices = @transform_10, window_bounds = array<i64: 1, 1, 16>}, {transform_indices = @transform_11, window_bounds = array<i64: 1, 1, 16>}, {transform_indices = @transform_12, window_bounds = array<i64: 1, 1, 16>}, {transform_indices = @transform_13, window_bounds = array<i64: 1, 16, 16>}]} {
    %c0_i32 = arith.constant 0 : i32
    %0 = arith.cmpi eq, %arg1, %c0_i32 : i32
    %1 = arith.extui %0 : i1 to i32
    %c0_i32_0 = arith.constant 0 : i32
    %2 = arith.cmpi ne, %1, %c0_i32_0 : i32
    scf.if %2 {
      %c0_70 = arith.constant 0 : index
      %c0_71 = arith.constant 0 : index
      %c0_72 = arith.constant 0 : index
      %141 = vector.load %arg2[%c0_70, %c0_71, %c0_72] : memref<1x16x16xf32, #tpu.memory_space<vmem>>, vector<1x16x16xf32>
      %142 = vector.shape_cast %141 : vector<1x16x16xf32> to vector<16x16xf32>
      %c0_73 = arith.constant 0 : index
      %c0_74 = arith.constant 0 : index
      %143 = vector.load %arg16[%c0_73, %c0_74] : memref<16x16xf32, #tpu.memory_space<vmem>>, vector<16x16xf32>
      tpu.vector_store %arg16[%c0_73, %c0_74], %142 {strides = array<i32>} : memref<16x16xf32, #tpu.memory_space<vmem>>, vector<16x16xf32>,
    } else {
    }
    %c0 = arith.constant 0 : index
    %c0_1 = arith.constant 0 : index
    %3 = vector.load %arg16[%c0, %c0_1] : memref<16x16xf32, #tpu.memory_space<vmem>>, vector<16x16xf32>
    %4 = arith.truncf %3 : vector<16x16xf32> to vector<16x16xbf16>
    %c0_2 = arith.constant 0 : index
    %c0_3 = arith.constant 0 : index
    %c0_4 = arith.constant 0 : index
    %5 = vector.load %arg3[%c0_2, %c0_3, %c0_4] : memref<1x16x384xbf16, #tpu.memory_space<vmem>>, vector<1x16x384xbf16>
    %6 = vector.shape_cast %5 : vector<1x16x384xbf16> to vector<16x384xbf16>
    %cst = arith.constant dense<0.000000e+00> : vector<16x384xf32>
    %7 = tpu.matmul %4, %6, %cst {dimension_numbers = #tpu.dot_dimension_numbers<[1], [0], [0], [1], [0, 0, 1, 1], [], []>} : vector<16x16xbf16>, vector<16x384xbf16>, vector<16x384xf32> -> vector<16x384xf32>
    %c0_5 = arith.constant 0 : index
    %c0_6 = arith.constant 0 : index
    %c0_7 = arith.constant 0 : index
    %8 = vector.load %arg4[%c0_5, %c0_6, %c0_7] : memref<1x1x384xf32, #tpu.memory_space<vmem>>, vector<1x1x384xf32>
    %9 = vector.shape_cast %8 : vector<1x1x384xf32> to vector<1x384xf32>
    %10 = vector.broadcast %9 : vector<1x384xf32> to vector<16x384xf32>
    %11 = arith.addf %7, %10 : vector<16x384xf32>
    %12 = vector.extract_strided_slice %11 {offsets = [0, 0], sizes = [16, 64], strides = [1, 1]} : vector<16x384xf32> to vector<16x64xf32>
    %13 = arith.truncf %12 : vector<16x64xf32> to vector<16x64xbf16>
    %14 = vector.extract_strided_slice %11 {offsets = [0, 128], sizes = [16, 64], strides = [1, 1]} : vector<16x384xf32> to vector<16x64xf32>
    %15 = arith.truncf %14 : vector<16x64xf32> to vector<16x64xbf16>
    %16 = vector.extract_strided_slice %11 {offsets = [0, 256], sizes = [16, 64], strides = [1, 1]} : vector<16x384xf32> to vector<16x64xf32>
    %17 = arith.truncf %16 : vector<16x64xf32> to vector<16x64xbf16>
    %cst_8 = arith.constant dense<0.000000e+00> : vector<16x16xf32>
    %18 = tpu.matmul %13, %15, %cst_8 {dimension_numbers = #tpu.dot_dimension_numbers<[1], [1], [0], [0], [0, 0, 1, 0], [], []>} : vector<16x64xbf16>, vector<16x64xbf16>, vector<16x16xf32> -> vector<16x16xf32>
    %cst_9 = arith.constant 0.353553385 : f32
    %19 = vector.broadcast %cst_9 : f32 to vector<16x16xf32>
    %20 = arith.mulf %18, %19 : vector<16x16xf32>
    %cst_10 = arith.constant dense<0xFF800000> : vector<16xf32>
    %21 = vector.multi_reduction <maximumf>, %20, %cst_10 [1] : vector<16x16xf32> to vector<16xf32>
    %22 = vector.shape_cast %21 : vector<16xf32> to vector<16x1xf32>
    %23 = vector.broadcast %22 : vector<16x1xf32> to vector<16x16xf32>
    %24 = arith.subf %20, %23 : vector<16x16xf32>
    %25 = math.exp %24 : vector<16x16xf32>
    %cst_11 = arith.constant dense<0.000000e+00> : vector<16xf32>
    %26 = vector.multi_reduction <add>, %25, %cst_11 [1] : vector<16x16xf32> to vector<16xf32>
    %27 = vector.shape_cast %26 : vector<16xf32> to vector<16x1xf32>
    %28 = tpu.reciprocal %27 {approx = true} : vector<16x1xf32> -> vector<16x1xf32>
    %29 = vector.broadcast %28 : vector<16x1xf32> to vector<16x16xf32>
    %30 = arith.mulf %25, %29 : vector<16x16xf32>
    %31 = arith.truncf %30 : vector<16x16xf32> to vector<16x16xbf16>
    %cst_12 = arith.constant dense<0.000000e+00> : vector<16x64xf32>
    %32 = tpu.matmul %31, %17, %cst_12 {dimension_numbers = #tpu.dot_dimension_numbers<[1], [0], [0], [1], [0, 0, 1, 1], [], []>} : vector<16x16xbf16>, vector<16x64xbf16>, vector<16x64xf32> -> vector<16x64xf32>
    %c0_13 = arith.constant 0 : index
    %c0_14 = arith.constant 0 : index
    %33 = vector.load %arg17[%c0_13, %c0_14] : memref<16x128xf32, #tpu.memory_space<vmem>>, vector<16x64xf32>
    tpu.vector_store %arg17[%c0_13, %c0_14], %32 {strides = array<i32>} : memref<16x128xf32, #tpu.memory_space<vmem>>, vector<16x64xf32>,
    %34 = vector.extract_strided_slice %11 {offsets = [0, 64], sizes = [16, 64], strides = [1, 1]} : vector<16x384xf32> to vector<16x64xf32>
    %35 = arith.truncf %34 : vector<16x64xf32> to vector<16x64xbf16>
    %36 = vector.extract_strided_slice %11 {offsets = [0, 192], sizes = [16, 64], strides = [1, 1]} : vector<16x384xf32> to vector<16x64xf32>
    %37 = arith.truncf %36 : vector<16x64xf32> to vector<16x64xbf16>
    %38 = vector.extract_strided_slice %11 {offsets = [0, 320], sizes = [16, 64], strides = [1, 1]} : vector<16x384xf32> to vector<16x64xf32>
    %39 = arith.truncf %38 : vector<16x64xf32> to vector<16x64xbf16>
    %cst_15 = arith.constant dense<0.000000e+00> : vector<16x16xf32>
    %40 = tpu.matmul %35, %37, %cst_15 {dimension_numbers = #tpu.dot_dimension_numbers<[1], [1], [0], [0], [0, 0, 1, 0], [], []>} : vector<16x64xbf16>, vector<16x64xbf16>, vector<16x16xf32> -> vector<16x16xf32>
    %cst_16 = arith.constant 0.353553385 : f32
    %41 = vector.broadcast %cst_16 : f32 to vector<16x16xf32>
    %42 = arith.mulf %40, %41 : vector<16x16xf32>
    %cst_17 = arith.constant dense<0xFF800000> : vector<16xf32>
    %43 = vector.multi_reduction <maximumf>, %42, %cst_17 [1] : vector<16x16xf32> to vector<16xf32>
    %44 = vector.shape_cast %43 : vector<16xf32> to vector<16x1xf32>
    %45 = vector.broadcast %44 : vector<16x1xf32> to vector<16x16xf32>
    %46 = arith.subf %42, %45 : vector<16x16xf32>
    %47 = math.exp %46 : vector<16x16xf32>
    %cst_18 = arith.constant dense<0.000000e+00> : vector<16xf32>
    %48 = vector.multi_reduction <add>, %47, %cst_18 [1] : vector<16x16xf32> to vector<16xf32>
    %49 = vector.shape_cast %48 : vector<16xf32> to vector<16x1xf32>
    %50 = tpu.reciprocal %49 {approx = true} : vector<16x1xf32> -> vector<16x1xf32>
    %51 = vector.broadcast %50 : vector<16x1xf32> to vector<16x16xf32>
    %52 = arith.mulf %47, %51 : vector<16x16xf32>
    %53 = arith.truncf %52 : vector<16x16xf32> to vector<16x16xbf16>
    %cst_19 = arith.constant dense<0.000000e+00> : vector<16x64xf32>
    %54 = tpu.matmul %53, %39, %cst_19 {dimension_numbers = #tpu.dot_dimension_numbers<[1], [0], [0], [1], [0, 0, 1, 1], [], []>} : vector<16x16xbf16>, vector<16x64xbf16>, vector<16x64xf32> -> vector<16x64xf32>
    %c0_20 = arith.constant 0 : index
    %c64 = arith.constant 64 : index
    %55 = vector.load %arg17[%c0_20, %c64] : memref<16x128xf32, #tpu.memory_space<vmem>>, vector<16x64xf32>
    tpu.vector_store %arg17[%c0_20, %c64], %54 {strides = array<i32>} : memref<16x128xf32, #tpu.memory_space<vmem>>, vector<16x64xf32>,
    %c0_21 = arith.constant 0 : index
    %c0_22 = arith.constant 0 : index
    %56 = vector.load %arg17[%c0_21, %c0_22] : memref<16x128xf32, #tpu.memory_space<vmem>>, vector<16x128xf32>
    %57 = arith.truncf %56 : vector<16x128xf32> to vector<16x128xbf16>
    %c0_23 = arith.constant 0 : index
    %c0_24 = arith.constant 0 : index
    %c0_25 = arith.constant 0 : index
    %58 = vector.load %arg5[%c0_23, %c0_24, %c0_25] : memref<1x128x16xbf16, #tpu.memory_space<vmem>>, vector<1x128x16xbf16>
    %59 = vector.shape_cast %58 : vector<1x128x16xbf16> to vector<128x16xbf16>
    %cst_26 = arith.constant dense<0.000000e+00> : vector<16x16xf32>
    %60 = tpu.matmul %57, %59, %cst_26 {dimension_numbers = #tpu.dot_dimension_numbers<[1], [0], [0], [1], [0, 0, 1, 1], [], []>} : vector<16x128xbf16>, vector<128x16xbf16>, vector<16x16xf32> -> vector<16x16xf32>
    %c0_27 = arith.constant 0 : index
    %c0_28 = arith.constant 0 : index
    %c0_29 = arith.constant 0 : index
    %61 = vector.load %arg6[%c0_27, %c0_28, %c0_29] : memref<1x1x16xf32, #tpu.memory_space<vmem>>, vector<1x1x16xf32>
    %62 = vector.shape_cast %61 : vector<1x1x16xf32> to vector<1x16xf32>
    %63 = vector.broadcast %62 : vector<1x16xf32> to vector<16x16xf32>
    %64 = arith.addf %60, %63 : vector<16x16xf32>
    %65 = arith.addf %3, %64 : vector<16x16xf32>
    %cst_30 = arith.constant dense<0.000000e+00> : vector<16xf32>
    %66 = vector.multi_reduction <add>, %65, %cst_30 [1] : vector<16x16xf32> to vector<16xf32>
    %67 = vector.shape_cast %66 : vector<16xf32> to vector<16x1xf32>
    %cst_31 = arith.constant 1.600000e+01 : f32
    %68 = vector.broadcast %cst_31 : f32 to vector<16x1xf32>
    %69 = arith.divf %67, %68 : vector<16x1xf32>
    %70 = vector.broadcast %69 : vector<16x1xf32> to vector<16x16xf32>
    %71 = arith.subf %65, %70 : vector<16x16xf32>
    %72 = arith.mulf %71, %71 : vector<16x16xf32>
    %cst_32 = arith.constant dense<0.000000e+00> : vector<16xf32>
    %73 = vector.multi_reduction <add>, %72, %cst_32 [1] : vector<16x16xf32> to vector<16xf32>
    %74 = vector.shape_cast %73 : vector<16xf32> to vector<16x1xf32>
    %cst_33 = arith.constant 1.600000e+01 : f32
    %75 = vector.broadcast %cst_33 : f32 to vector<16x1xf32>
    %76 = arith.divf %74, %75 : vector<16x1xf32>
    %77 = vector.broadcast %69 : vector<16x1xf32> to vector<16x16xf32>
    %78 = arith.subf %65, %77 : vector<16x16xf32>
    %cst_34 = arith.constant 9.99999974E-6 : f32
    %79 = vector.broadcast %cst_34 : f32 to vector<16x1xf32>
    %80 = arith.addf %76, %79 : vector<16x1xf32>
    %81 = math.rsqrt %80 : vector<16x1xf32>
    %82 = vector.broadcast %81 : vector<16x1xf32> to vector<16x16xf32>
    %83 = arith.mulf %78, %82 : vector<16x16xf32>
    %c0_35 = arith.constant 0 : index
    %c0_36 = arith.constant 0 : index
    %c0_37 = arith.constant 0 : index
    %84 = vector.load %arg7[%c0_35, %c0_36, %c0_37] : memref<1x1x16xf32, #tpu.memory_space<vmem>>, vector<1x1x16xf32>
    %85 = vector.shape_cast %84 : vector<1x1x16xf32> to vector<1x16xf32>
    %86 = vector.broadcast %85 : vector<1x16xf32> to vector<16x16xf32>
    %87 = arith.mulf %83, %86 : vector<16x16xf32>
    %c0_38 = arith.constant 0 : index
    %c0_39 = arith.constant 0 : index
    %c0_40 = arith.constant 0 : index
    %88 = vector.load %arg8[%c0_38, %c0_39, %c0_40] : memref<1x1x16xf32, #tpu.memory_space<vmem>>, vector<1x1x16xf32>
    %89 = vector.shape_cast %88 : vector<1x1x16xf32> to vector<1x16xf32>
    %90 = vector.broadcast %89 : vector<1x16xf32> to vector<16x16xf32>
    %91 = arith.addf %87, %90 : vector<16x16xf32>
    %92 = arith.truncf %91 : vector<16x16xf32> to vector<16x16xbf16>
    %c0_41 = arith.constant 0 : index
    %c0_42 = arith.constant 0 : index
    %c0_43 = arith.constant 0 : index
    %93 = vector.load %arg9[%c0_41, %c0_42, %c0_43] : memref<1x16x32xbf16, #tpu.memory_space<vmem>>, vector<1x16x32xbf16>
    %94 = vector.shape_cast %93 : vector<1x16x32xbf16> to vector<16x32xbf16>
    %cst_44 = arith.constant dense<0.000000e+00> : vector<16x32xf32>
    %95 = tpu.matmul %92, %94, %cst_44 {dimension_numbers = #tpu.dot_dimension_numbers<[1], [0], [0], [1], [0, 0, 1, 1], [], []>} : vector<16x16xbf16>, vector<16x32xbf16>, vector<16x32xf32> -> vector<16x32xf32>
    %c0_45 = arith.constant 0 : index
    %c0_46 = arith.constant 0 : index
    %c0_47 = arith.constant 0 : index
    %96 = vector.load %arg10[%c0_45, %c0_46, %c0_47] : memref<1x1x32xf32, #tpu.memory_space<vmem>>, vector<1x1x32xf32>
    %97 = vector.shape_cast %96 : vector<1x1x32xf32> to vector<1x32xf32>
    %98 = vector.broadcast %97 : vector<1x32xf32> to vector<16x32xf32>
    %99 = arith.addf %95, %98 : vector<16x32xf32>
    %cst_48 = arith.constant 0.000000e+00 : f32
    %100 = vector.broadcast %cst_48 : f32 to vector<16x32xf32>
    %101 = arith.maximumf %99, %100 : vector<16x32xf32>
    %102 = arith.truncf %101 : vector<16x32xf32> to vector<16x32xbf16>
    %c0_49 = arith.constant 0 : index
    %c0_50 = arith.constant 0 : index
    %c0_51 = arith.constant 0 : index
    %103 = vector.load %arg11[%c0_49, %c0_50, %c0_51] : memref<1x32x16xbf16, #tpu.memory_space<vmem>>, vector<1x32x16xbf16>
    %104 = vector.shape_cast %103 : vector<1x32x16xbf16> to vector<32x16xbf16>
    %cst_52 = arith.constant dense<0.000000e+00> : vector<16x16xf32>
    %105 = tpu.matmul %102, %104, %cst_52 {dimension_numbers = #tpu.dot_dimension_numbers<[1], [0], [0], [1], [0, 0, 1, 1], [], []>} : vector<16x32xbf16>, vector<32x16xbf16>, vector<16x16xf32> -> vector<16x16xf32>
    %c0_53 = arith.constant 0 : index
    %c0_54 = arith.constant 0 : index
    %c0_55 = arith.constant 0 : index
    %106 = vector.load %arg12[%c0_53, %c0_54, %c0_55] : memref<1x1x16xf32, #tpu.memory_space<vmem>>, vector<1x1x16xf32>
    %107 = vector.shape_cast %106 : vector<1x1x16xf32> to vector<1x16xf32>
    %108 = vector.broadcast %107 : vector<1x16xf32> to vector<16x16xf32>
    %109 = arith.addf %105, %108 : vector<16x16xf32>
    %110 = arith.addf %91, %109 : vector<16x16xf32>
    %cst_56 = arith.constant dense<0.000000e+00> : vector<16xf32>
    %111 = vector.multi_reduction <add>, %110, %cst_56 [1] : vector<16x16xf32> to vector<16xf32>
    %112 = vector.shape_cast %111 : vector<16xf32> to vector<16x1xf32>
    %cst_57 = arith.constant 1.600000e+01 : f32
    %113 = vector.broadcast %cst_57 : f32 to vector<16x1xf32>
    %114 = arith.divf %112, %113 : vector<16x1xf32>
    %115 = vector.broadcast %114 : vector<16x1xf32> to vector<16x16xf32>
    %116 = arith.subf %110, %115 : vector<16x16xf32>
    %117 = arith.mulf %116, %116 : vector<16x16xf32>
    %cst_58 = arith.constant dense<0.000000e+00> : vector<16xf32>
    %118 = vector.multi_reduction <add>, %117, %cst_58 [1] : vector<16x16xf32> to vector<16xf32>
    %119 = vector.shape_cast %118 : vector<16xf32> to vector<16x1xf32>
    %cst_59 = arith.constant 1.600000e+01 : f32
    %120 = vector.broadcast %cst_59 : f32 to vector<16x1xf32>
    %121 = arith.divf %119, %120 : vector<16x1xf32>
    %122 = vector.broadcast %114 : vector<16x1xf32> to vector<16x16xf32>
    %123 = arith.subf %110, %122 : vector<16x16xf32>
    %cst_60 = arith.constant 9.99999974E-6 : f32
    %124 = vector.broadcast %cst_60 : f32 to vector<16x1xf32>
    %125 = arith.addf %121, %124 : vector<16x1xf32>
    %126 = math.rsqrt %125 : vector<16x1xf32>
    %127 = vector.broadcast %126 : vector<16x1xf32> to vector<16x16xf32>
    %128 = arith.mulf %123, %127 : vector<16x16xf32>
    %c0_61 = arith.constant 0 : index
    %c0_62 = arith.constant 0 : index
    %c0_63 = arith.constant 0 : index
    %129 = vector.load %arg13[%c0_61, %c0_62, %c0_63] : memref<1x1x16xf32, #tpu.memory_space<vmem>>, vector<1x1x16xf32>
    %130 = vector.shape_cast %129 : vector<1x1x16xf32> to vector<1x16xf32>
    %131 = vector.broadcast %130 : vector<1x16xf32> to vector<16x16xf32>
    %132 = arith.mulf %128, %131 : vector<16x16xf32>
    %c0_64 = arith.constant 0 : index
    %c0_65 = arith.constant 0 : index
    %c0_66 = arith.constant 0 : index
    %133 = vector.load %arg14[%c0_64, %c0_65, %c0_66] : memref<1x1x16xf32, #tpu.memory_space<vmem>>, vector<1x1x16xf32>
    %134 = vector.shape_cast %133 : vector<1x1x16xf32> to vector<1x16xf32>
    %135 = vector.broadcast %134 : vector<1x16xf32> to vector<16x16xf32>
    %136 = arith.addf %132, %135 : vector<16x16xf32>
    %c0_67 = arith.constant 0 : index
    %c0_68 = arith.constant 0 : index
    %137 = vector.load %arg16[%c0_67, %c0_68] : memref<16x16xf32, #tpu.memory_space<vmem>>, vector<16x16xf32>
    tpu.vector_store %arg16[%c0_67, %c0_68], %136 {strides = array<i32>} : memref<16x16xf32, #tpu.memory_space<vmem>>, vector<16x16xf32>,
    %c1_i32 = arith.constant 1 : i32
    %138 = arith.cmpi eq, %arg1, %c1_i32 : i32
    %139 = arith.extui %138 : i1 to i32
    %c0_i32_69 = arith.constant 0 : i32
    %140 = arith.cmpi ne, %139, %c0_i32_69 : i32
    scf.if %140 {
      %c0_70 = arith.constant 0 : index
      %c0_71 = arith.constant 0 : index
      %c0_72 = arith.constant 0 : index
      %141 = vector.load %arg15[%c0_70, %c0_71, %c0_72] : memref<1x16x16xf32, #tpu.memory_space<vmem>>, vector<1x16x16xf32>
      %142 = vector.shape_cast %141 : vector<1x16x16xf32> to vector<16x16xf32>
      %143 = vector.shape_cast %136 : vector<16x16xf32> to vector<1x16x16xf32>
      tpu.vector_store %arg15[%c0_70, %c0_71, %c0_72], %143 {strides = array<i32>} : memref<1x16x16xf32, #tpu.memory_space<vmem>>, vector<1x16x16xf32>,
    } else {
    }
    return
  }
  func.func @transform_0(%arg0: i32, %arg1: i32) -> (i32, i32, i32) {
    %c0_i32 = arith.constant 0 : i32
    %c0_i32_0 = arith.constant 0 : i32
    %c0_i32_1 = arith.constant 0 : i32
    return %arg0, %c0_i32, %c0_i32_0 : i32, i32, i32
  }
  func.func @transform_1(%arg0: i32, %arg1: i32) -> (i32, i32, i32) {
    %c0_i32 = arith.constant 0 : i32
    %c0_i32_0 = arith.constant 0 : i32
    %c0_i32_1 = arith.constant 0 : i32
    return %arg1, %c0_i32, %c0_i32_0 : i32, i32, i32
  }
  func.func @transform_2(%arg0: i32, %arg1: i32) -> (i32, i32, i32) {
    %c0_i32 = arith.constant 0 : i32
    %c0_i32_0 = arith.constant 0 : i32
    %c0_i32_1 = arith.constant 0 : i32
    return %arg1, %c0_i32, %c0_i32_0 : i32, i32, i32
  }
  func.func @transform_3(%arg0: i32, %arg1: i32) -> (i32, i32, i32) {
    %c0_i32 = arith.constant 0 : i32
    %c0_i32_0 = arith.constant 0 : i32
    %c0_i32_1 = arith.constant 0 : i32
    return %arg1, %c0_i32, %c0_i32_0 : i32, i32, i32
  }
  func.func @transform_4(%arg0: i32, %arg1: i32) -> (i32, i32, i32) {
    %c0_i32 = arith.constant 0 : i32
    %c0_i32_0 = arith.constant 0 : i32
    %c0_i32_1 = arith.constant 0 : i32
    return %arg1, %c0_i32, %c0_i32_0 : i32, i32, i32
  }
  func.func @transform_5(%arg0: i32, %arg1: i32) -> (i32, i32, i32) {
    %c0_i32 = arith.constant 0 : i32
    %c0_i32_0 = arith.constant 0 : i32
    %c0_i32_1 = arith.constant 0 : i32
    return %arg1, %c0_i32, %c0_i32_0 : i32, i32, i32
  }
  func.func @transform_6(%arg0: i32, %arg1: i32) -> (i32, i32, i32) {
    %c0_i32 = arith.constant 0 : i32
    %c0_i32_0 = arith.constant 0 : i32
    %c0_i32_1 = arith.constant 0 : i32
    return %arg1, %c0_i32, %c0_i32_0 : i32, i32, i32
  }
  func.func @transform_7(%arg0: i32, %arg1: i32) -> (i32, i32, i32) {
    %c0_i32 = arith.constant 0 : i32
    %c0_i32_0 = arith.constant 0 : i32
    %c0_i32_1 = arith.constant 0 : i32
    return %arg1, %c0_i32, %c0_i32_0 : i32, i32, i32
  }
  func.func @transform_8(%arg0: i32, %arg1: i32) -> (i32, i32, i32) {
    %c0_i32 = arith.constant 0 : i32
    %c0_i32_0 = arith.constant 0 : i32
    %c0_i32_1 = arith.constant 0 : i32
    return %arg1, %c0_i32, %c0_i32_0 : i32, i32, i32
  }
  func.func @transform_9(%arg0: i32, %arg1: i32) -> (i32, i32, i32) {
    %c0_i32 = arith.constant 0 : i32
    %c0_i32_0 = arith.constant 0 : i32
    %c0_i32_1 = arith.constant 0 : i32
    return %arg1, %c0_i32, %c0_i32_0 : i32, i32, i32
  }
  func.func @transform_10(%arg0: i32, %arg1: i32) -> (i32, i32, i32) {
    %c0_i32 = arith.constant 0 : i32
    %c0_i32_0 = arith.constant 0 : i32
    %c0_i32_1 = arith.constant 0 : i32
    return %arg1, %c0_i32, %c0_i32_0 : i32, i32, i32
  }
  func.func @transform_11(%arg0: i32, %arg1: i32) -> (i32, i32, i32) {
    %c0_i32 = arith.constant 0 : i32
    %c0_i32_0 = arith.constant 0 : i32
    %c0_i32_1 = arith.constant 0 : i32
    return %arg1, %c0_i32, %c0_i32_0 : i32, i32, i32
  }
  func.func @transform_12(%arg0: i32, %arg1: i32) -> (i32, i32, i32) {
    %c0_i32 = arith.constant 0 : i32
    %c0_i32_0 = arith.constant 0 : i32
    %c0_i32_1 = arith.constant 0 : i32
    return %arg1, %c0_i32, %c0_i32_0 : i32, i32, i32
  }
  func.func @transform_13(%arg0: i32, %arg1: i32) -> (i32, i32, i32) {
    %c0_i32 = arith.constant 0 : i32
    %c0_i32_0 = arith.constant 0 : i32
    %c0_i32_1 = arith.constant 0 : i32
    return %arg0, %c0_i32, %c0_i32_0 : i32, i32, i32
  }
}

module attributes {stable_mosaic.version = 11 : i64} {
  func.func @_residue_conv_kernel(%arg0: i32, %arg1: memref<1x16x16xf32, #tpu.memory_space<vmem>>, %arg2: memref<16x16xbf16, #tpu.memory_space<vmem>>, %arg3: memref<1x16xf32, #tpu.memory_space<vmem>>, %arg4: memref<16x4xbf16, #tpu.memory_space<vmem>>, %arg5: memref<1x4xf32, #tpu.memory_space<vmem>>, %arg6: memref<20x10xbf16, #tpu.memory_space<vmem>>, %arg7: memref<1x10xf32, #tpu.memory_space<vmem>>, %arg8: memref<1x10xf32, #tpu.memory_space<vmem>>, %arg9: memref<1x12x10xf32, #tpu.memory_space<vmem>>) attributes {dimension_semantics = [#tpu.dimension_semantics<parallel>], iteration_bounds = array<i64: 2>, scalar_prefetch = 0 : i64, scratch_operands = 0 : i64, tpu.core_type = #tpu.core_type<tc>, window_params = [{transform_indices = @transform_0, window_bounds = array<i64: 1, 16, 16>}, {pipeline_mode = #tpu.pipeline_mode<synchronous>, transform_indices = @transform_1, window_bounds = array<i64: 16, 16>}, {pipeline_mode = #tpu.pipeline_mode<synchronous>, transform_indices = @transform_2, window_bounds = array<i64: 1, 16>}, {pipeline_mode = #tpu.pipeline_mode<synchronous>, transform_indices = @transform_3, window_bounds = array<i64: 16, 4>}, {pipeline_mode = #tpu.pipeline_mode<synchronous>, transform_indices = @transform_4, window_bounds = array<i64: 1, 4>}, {pipeline_mode = #tpu.pipeline_mode<synchronous>, transform_indices = @transform_5, window_bounds = array<i64: 20, 10>}, {pipeline_mode = #tpu.pipeline_mode<synchronous>, transform_indices = @transform_6, window_bounds = array<i64: 1, 10>}, {pipeline_mode = #tpu.pipeline_mode<synchronous>, transform_indices = @transform_7, window_bounds = array<i64: 1, 10>}, {transform_indices = @transform_8, window_bounds = array<i64: 1, 12, 10>}]} {
    %c0 = arith.constant 0 : index
    %c0_0 = arith.constant 0 : index
    %c0_1 = arith.constant 0 : index
    %0 = vector.load %arg1[%c0, %c0_0, %c0_1] : memref<1x16x16xf32, #tpu.memory_space<vmem>>, vector<1x16x16xf32>
    %1 = vector.shape_cast %0 : vector<1x16x16xf32> to vector<16x16xf32>
    %2 = arith.truncf %1 : vector<16x16xf32> to vector<16x16xbf16>
    %c0_2 = arith.constant 0 : index
    %c0_3 = arith.constant 0 : index
    %3 = vector.load %arg2[%c0_2, %c0_3] : memref<16x16xbf16, #tpu.memory_space<vmem>>, vector<16x16xbf16>
    %cst = arith.constant dense<0.000000e+00> : vector<16x16xf32>
    %4 = tpu.matmul %2, %3, %cst {dimension_numbers = #tpu.dot_dimension_numbers<[1], [0], [0], [1], [0, 0, 1, 1], [], []>} : vector<16x16xbf16>, vector<16x16xbf16>, vector<16x16xf32> -> vector<16x16xf32>
    %c0_4 = arith.constant 0 : index
    %c0_5 = arith.constant 0 : index
    %5 = vector.load %arg3[%c0_4, %c0_5] : memref<1x16xf32, #tpu.memory_space<vmem>>, vector<1x16xf32>
    %6 = vector.broadcast %5 : vector<1x16xf32> to vector<16x16xf32>
    %7 = arith.addf %4, %6 : vector<16x16xf32>
    %cst_6 = arith.constant 0.000000e+00 : f32
    %8 = vector.broadcast %cst_6 : f32 to vector<16x16xf32>
    %9 = arith.cmpf oge, %7, %8 : vector<16x16xf32>
    %cst_7 = arith.constant 0.00999999977 : f32
    %10 = vector.broadcast %cst_7 : f32 to vector<16x16xf32>
    %11 = arith.mulf %10, %7 : vector<16x16xf32>
    %12 = arith.select %9, %7, %11 : vector<16x16xi1>, vector<16x16xf32>
    %13 = arith.truncf %12 : vector<16x16xf32> to vector<16x16xbf16>
    %c0_8 = arith.constant 0 : index
    %c0_9 = arith.constant 0 : index
    %14 = vector.load %arg4[%c0_8, %c0_9] : memref<16x4xbf16, #tpu.memory_space<vmem>>, vector<16x4xbf16>
    %cst_10 = arith.constant dense<0.000000e+00> : vector<16x4xf32>
    %15 = tpu.matmul %13, %14, %cst_10 {dimension_numbers = #tpu.dot_dimension_numbers<[1], [0], [0], [1], [0, 0, 1, 1], [], []>} : vector<16x16xbf16>, vector<16x4xbf16>, vector<16x4xf32> -> vector<16x4xf32>
    %c0_11 = arith.constant 0 : index
    %c0_12 = arith.constant 0 : index
    %16 = vector.load %arg5[%c0_11, %c0_12] : memref<1x4xf32, #tpu.memory_space<vmem>>, vector<1x4xf32>
    %17 = vector.broadcast %16 : vector<1x4xf32> to vector<16x4xf32>
    %18 = arith.addf %15, %17 : vector<16x4xf32>
    %19 = arith.truncf %18 : vector<16x4xf32> to vector<16x4xbf16>
    %20 = vector.extract_strided_slice %19 {offsets = [0, 0], sizes = [12, 4], strides = [1, 1]} : vector<16x4xbf16> to vector<12x4xbf16>
    %21 = vector.extract_strided_slice %19 {offsets = [1, 0], sizes = [12, 4], strides = [1, 1]} : vector<16x4xbf16> to vector<12x4xbf16>
    %22 = vector.extract_strided_slice %19 {offsets = [2, 0], sizes = [12, 4], strides = [1, 1]} : vector<16x4xbf16> to vector<12x4xbf16>
    %23 = vector.extract_strided_slice %19 {offsets = [3, 0], sizes = [12, 4], strides = [1, 1]} : vector<16x4xbf16> to vector<12x4xbf16>
    %24 = vector.extract_strided_slice %19 {offsets = [4, 0], sizes = [12, 4], strides = [1, 1]} : vector<16x4xbf16> to vector<12x4xbf16>
    %25 = tpu.concatenate %20, %21, %22, %23, %24 in 1 : vector<12x4xbf16>, vector<12x4xbf16>, vector<12x4xbf16>, vector<12x4xbf16>, vector<12x4xbf16> -> vector<12x20xbf16>
    %c0_13 = arith.constant 0 : index
    %c0_14 = arith.constant 0 : index
    %26 = vector.load %arg6[%c0_13, %c0_14] : memref<20x10xbf16, #tpu.memory_space<vmem>>, vector<20x10xbf16>
    %cst_15 = arith.constant dense<0.000000e+00> : vector<12x10xf32>
    %27 = tpu.matmul %25, %26, %cst_15 {dimension_numbers = #tpu.dot_dimension_numbers<[1], [0], [0], [1], [0, 0, 1, 1], [], []>} : vector<12x20xbf16>, vector<20x10xbf16>, vector<12x10xf32> -> vector<12x10xf32>
    %c0_16 = arith.constant 0 : index
    %c0_17 = arith.constant 0 : index
    %28 = vector.load %arg7[%c0_16, %c0_17] : memref<1x10xf32, #tpu.memory_space<vmem>>, vector<1x10xf32>
    %29 = vector.broadcast %28 : vector<1x10xf32> to vector<12x10xf32>
    %30 = arith.mulf %27, %29 : vector<12x10xf32>
    %c0_18 = arith.constant 0 : index
    %c0_19 = arith.constant 0 : index
    %31 = vector.load %arg8[%c0_18, %c0_19] : memref<1x10xf32, #tpu.memory_space<vmem>>, vector<1x10xf32>
    %32 = vector.broadcast %31 : vector<1x10xf32> to vector<12x10xf32>
    %33 = arith.addf %30, %32 : vector<12x10xf32>
    %c0_20 = arith.constant 0 : index
    %c0_21 = arith.constant 0 : index
    %c0_22 = arith.constant 0 : index
    %34 = vector.load %arg9[%c0_20, %c0_21, %c0_22] : memref<1x12x10xf32, #tpu.memory_space<vmem>>, vector<1x12x10xf32>
    %35 = vector.shape_cast %34 : vector<1x12x10xf32> to vector<12x10xf32>
    %36 = vector.shape_cast %33 : vector<12x10xf32> to vector<1x12x10xf32>
    tpu.vector_store %arg9[%c0_20, %c0_21, %c0_22], %36 {strides = array<i32>} : memref<1x12x10xf32, #tpu.memory_space<vmem>>, vector<1x12x10xf32>,
    return
  }
  func.func @transform_0(%arg0: i32) -> (i32, i32, i32) {
    %c0_i32 = arith.constant 0 : i32
    %c0_i32_0 = arith.constant 0 : i32
    %c0_i32_1 = arith.constant 0 : i32
    return %arg0, %c0_i32, %c0_i32_0 : i32, i32, i32
  }
  func.func @transform_1(%arg0: i32) -> (i32, i32) {
    %c0_i32 = arith.constant 0 : i32
    %c0_i32_0 = arith.constant 0 : i32
    %c0_i32_1 = arith.constant 0 : i32
    return %c0_i32, %c0_i32_0 : i32, i32
  }
  func.func @transform_2(%arg0: i32) -> (i32, i32) {
    %c0_i32 = arith.constant 0 : i32
    %c0_i32_0 = arith.constant 0 : i32
    %c0_i32_1 = arith.constant 0 : i32
    return %c0_i32, %c0_i32_0 : i32, i32
  }
  func.func @transform_3(%arg0: i32) -> (i32, i32) {
    %c0_i32 = arith.constant 0 : i32
    %c0_i32_0 = arith.constant 0 : i32
    %c0_i32_1 = arith.constant 0 : i32
    return %c0_i32, %c0_i32_0 : i32, i32
  }
  func.func @transform_4(%arg0: i32) -> (i32, i32) {
    %c0_i32 = arith.constant 0 : i32
    %c0_i32_0 = arith.constant 0 : i32
    %c0_i32_1 = arith.constant 0 : i32
    return %c0_i32, %c0_i32_0 : i32, i32
  }
  func.func @transform_5(%arg0: i32) -> (i32, i32) {
    %c0_i32 = arith.constant 0 : i32
    %c0_i32_0 = arith.constant 0 : i32
    %c0_i32_1 = arith.constant 0 : i32
    return %c0_i32, %c0_i32_0 : i32, i32
  }
  func.func @transform_6(%arg0: i32) -> (i32, i32) {
    %c0_i32 = arith.constant 0 : i32
    %c0_i32_0 = arith.constant 0 : i32
    %c0_i32_1 = arith.constant 0 : i32
    return %c0_i32, %c0_i32_0 : i32, i32
  }
  func.func @transform_7(%arg0: i32) -> (i32, i32) {
    %c0_i32 = arith.constant 0 : i32
    %c0_i32_0 = arith.constant 0 : i32
    %c0_i32_1 = arith.constant 0 : i32
    return %c0_i32, %c0_i32_0 : i32, i32
  }
  func.func @transform_8(%arg0: i32) -> (i32, i32, i32) {
    %c0_i32 = arith.constant 0 : i32
    %c0_i32_0 = arith.constant 0 : i32
    %c0_i32_1 = arith.constant 0 : i32
    return %arg0, %c0_i32, %c0_i32_0 : i32, i32, i32
  }
}

module attributes {stable_mosaic.version = 11 : i64} {
  func.func @_tiled_linear_kernel(%arg0: i32, %arg1: i32, %arg2: memref<2x120xf32, #tpu.memory_space<vmem>>, %arg3: memref<120x120xbf16, #tpu.memory_space<vmem>>, %arg4: memref<1x120xf32, #tpu.memory_space<vmem>>, %arg5: memref<2x120xf32, #tpu.memory_space<vmem>>, %arg6: memref<2x120xf32, #tpu.memory_space<vmem>>) attributes {dimension_semantics = [#tpu.dimension_semantics<parallel>, #tpu.dimension_semantics<arbitrary>], iteration_bounds = array<i64: 1, 1>, scalar_prefetch = 0 : i64, scratch_operands = 1 : i64, tpu.core_type = #tpu.core_type<tc>, window_params = [{transform_indices = @transform_0, window_bounds = array<i64: 2, 120>}, {transform_indices = @transform_1, window_bounds = array<i64: 120, 120>}, {transform_indices = @transform_2, window_bounds = array<i64: 1, 120>}, {transform_indices = @transform_3, window_bounds = array<i64: 2, 120>}]} {
    %c0_i32 = arith.constant 0 : i32
    %0 = arith.cmpi eq, %arg1, %c0_i32 : i32
    %1 = arith.extui %0 : i1 to i32
    %c0_i32_0 = arith.constant 0 : i32
    %2 = arith.cmpi ne, %1, %c0_i32_0 : i32
    scf.if %2 {
      %cst_10 = arith.constant 0.000000e+00 : f32
      %13 = vector.broadcast %cst_10 : f32 to vector<2x120xf32>
      %c0_11 = arith.constant 0 : index
      %c0_12 = arith.constant 0 : index
      %14 = vector.load %arg6[%c0_11, %c0_12] : memref<2x120xf32, #tpu.memory_space<vmem>>, vector<2x120xf32>
      tpu.vector_store %arg6[%c0_11, %c0_12], %13 {strides = array<i32>} : memref<2x120xf32, #tpu.memory_space<vmem>>, vector<2x120xf32>,
    } else {
    }
    %c0 = arith.constant 0 : index
    %c0_1 = arith.constant 0 : index
    %3 = vector.load %arg6[%c0, %c0_1] : memref<2x120xf32, #tpu.memory_space<vmem>>, vector<2x120xf32>
    %c0_2 = arith.constant 0 : index
    %c0_3 = arith.constant 0 : index
    %4 = vector.load %arg2[%c0_2, %c0_3] : memref<2x120xf32, #tpu.memory_space<vmem>>, vector<2x120xf32>
    %5 = arith.truncf %4 : vector<2x120xf32> to vector<2x120xbf16>
    %c0_4 = arith.constant 0 : index
    %c0_5 = arith.constant 0 : index
    %6 = vector.load %arg3[%c0_4, %c0_5] : memref<120x120xbf16, #tpu.memory_space<vmem>>, vector<120x120xbf16>
    %cst = arith.constant dense<0.000000e+00> : vector<2x120xf32>
    %7 = tpu.matmul %5, %6, %cst {dimension_numbers = #tpu.dot_dimension_numbers<[1], [0], [0], [1], [0, 0, 1, 1], [], []>} : vector<2x120xbf16>, vector<120x120xbf16>, vector<2x120xf32> -> vector<2x120xf32>
    %8 = arith.addf %3, %7 : vector<2x120xf32>
    %c0_6 = arith.constant 0 : index
    %c0_7 = arith.constant 0 : index
    %9 = vector.load %arg6[%c0_6, %c0_7] : memref<2x120xf32, #tpu.memory_space<vmem>>, vector<2x120xf32>
    tpu.vector_store %arg6[%c0_6, %c0_7], %8 {strides = array<i32>} : memref<2x120xf32, #tpu.memory_space<vmem>>, vector<2x120xf32>,
    %c0_i32_8 = arith.constant 0 : i32
    %10 = arith.cmpi eq, %arg1, %c0_i32_8 : i32
    %11 = arith.extui %10 : i1 to i32
    %c0_i32_9 = arith.constant 0 : i32
    %12 = arith.cmpi ne, %11, %c0_i32_9 : i32
    scf.if %12 {
      %c0_10 = arith.constant 0 : index
      %c0_11 = arith.constant 0 : index
      %13 = vector.load %arg6[%c0_10, %c0_11] : memref<2x120xf32, #tpu.memory_space<vmem>>, vector<2x120xf32>
      %c0_12 = arith.constant 0 : index
      %c0_13 = arith.constant 0 : index
      %14 = vector.load %arg4[%c0_12, %c0_13] : memref<1x120xf32, #tpu.memory_space<vmem>>, vector<1x120xf32>
      %15 = vector.broadcast %14 : vector<1x120xf32> to vector<2x120xf32>
      %16 = arith.addf %13, %15 : vector<2x120xf32>
      %cst_14 = arith.constant 0.000000e+00 : f32
      %17 = vector.broadcast %cst_14 : f32 to vector<2x120xf32>
      %18 = arith.cmpf oge, %16, %17 : vector<2x120xf32>
      %cst_15 = arith.constant 0.00999999977 : f32
      %19 = vector.broadcast %cst_15 : f32 to vector<2x120xf32>
      %20 = arith.mulf %19, %16 : vector<2x120xf32>
      %21 = arith.select %18, %16, %20 : vector<2x120xi1>, vector<2x120xf32>
      %c0_16 = arith.constant 0 : index
      %c0_17 = arith.constant 0 : index
      %22 = vector.load %arg5[%c0_16, %c0_17] : memref<2x120xf32, #tpu.memory_space<vmem>>, vector<2x120xf32>
      tpu.vector_store %arg5[%c0_16, %c0_17], %21 {strides = array<i32>} : memref<2x120xf32, #tpu.memory_space<vmem>>, vector<2x120xf32>,
    } else {
    }
    return
  }
  func.func @transform_0(%arg0: i32, %arg1: i32) -> (i32, i32) {
    %c0_i32 = arith.constant 0 : i32
    %c0_i32_0 = arith.constant 0 : i32
    return %c0_i32, %arg1 : i32, i32
  }
  func.func @transform_1(%arg0: i32, %arg1: i32) -> (i32, i32) {
    %c0_i32 = arith.constant 0 : i32
    return %arg1, %arg0 : i32, i32
  }
  func.func @transform_2(%arg0: i32, %arg1: i32) -> (i32, i32) {
    %c0_i32 = arith.constant 0 : i32
    %c0_i32_0 = arith.constant 0 : i32
    return %c0_i32, %arg0 : i32, i32
  }
  func.func @transform_3(%arg0: i32, %arg1: i32) -> (i32, i32) {
    %c0_i32 = arith.constant 0 : i32
    %c0_i32_0 = arith.constant 0 : i32
    return %c0_i32, %arg0 : i32, i32
  }
}

module attributes {stable_mosaic.version = 11 : i64} {
  func.func @_tiled_linear_kernel(%arg0: i32, %arg1: i32, %arg2: memref<2x120xf32, #tpu.memory_space<vmem>>, %arg3: memref<120x32xbf16, #tpu.memory_space<vmem>>, %arg4: memref<1x32xf32, #tpu.memory_space<vmem>>, %arg5: memref<2x32xf32, #tpu.memory_space<vmem>>, %arg6: memref<2x32xf32, #tpu.memory_space<vmem>>) attributes {dimension_semantics = [#tpu.dimension_semantics<parallel>, #tpu.dimension_semantics<arbitrary>], iteration_bounds = array<i64: 1, 1>, scalar_prefetch = 0 : i64, scratch_operands = 1 : i64, tpu.core_type = #tpu.core_type<tc>, window_params = [{transform_indices = @transform_0, window_bounds = array<i64: 2, 120>}, {transform_indices = @transform_1, window_bounds = array<i64: 120, 32>}, {transform_indices = @transform_2, window_bounds = array<i64: 1, 32>}, {transform_indices = @transform_3, window_bounds = array<i64: 2, 32>}]} {
    %c0_i32 = arith.constant 0 : i32
    %0 = arith.cmpi eq, %arg1, %c0_i32 : i32
    %1 = arith.extui %0 : i1 to i32
    %c0_i32_0 = arith.constant 0 : i32
    %2 = arith.cmpi ne, %1, %c0_i32_0 : i32
    scf.if %2 {
      %cst_10 = arith.constant 0.000000e+00 : f32
      %13 = vector.broadcast %cst_10 : f32 to vector<2x32xf32>
      %c0_11 = arith.constant 0 : index
      %c0_12 = arith.constant 0 : index
      %14 = vector.load %arg6[%c0_11, %c0_12] : memref<2x32xf32, #tpu.memory_space<vmem>>, vector<2x32xf32>
      tpu.vector_store %arg6[%c0_11, %c0_12], %13 {strides = array<i32>} : memref<2x32xf32, #tpu.memory_space<vmem>>, vector<2x32xf32>,
    } else {
    }
    %c0 = arith.constant 0 : index
    %c0_1 = arith.constant 0 : index
    %3 = vector.load %arg6[%c0, %c0_1] : memref<2x32xf32, #tpu.memory_space<vmem>>, vector<2x32xf32>
    %c0_2 = arith.constant 0 : index
    %c0_3 = arith.constant 0 : index
    %4 = vector.load %arg2[%c0_2, %c0_3] : memref<2x120xf32, #tpu.memory_space<vmem>>, vector<2x120xf32>
    %5 = arith.truncf %4 : vector<2x120xf32> to vector<2x120xbf16>
    %c0_4 = arith.constant 0 : index
    %c0_5 = arith.constant 0 : index
    %6 = vector.load %arg3[%c0_4, %c0_5] : memref<120x32xbf16, #tpu.memory_space<vmem>>, vector<120x32xbf16>
    %cst = arith.constant dense<0.000000e+00> : vector<2x32xf32>
    %7 = tpu.matmul %5, %6, %cst {dimension_numbers = #tpu.dot_dimension_numbers<[1], [0], [0], [1], [0, 0, 1, 1], [], []>} : vector<2x120xbf16>, vector<120x32xbf16>, vector<2x32xf32> -> vector<2x32xf32>
    %8 = arith.addf %3, %7 : vector<2x32xf32>
    %c0_6 = arith.constant 0 : index
    %c0_7 = arith.constant 0 : index
    %9 = vector.load %arg6[%c0_6, %c0_7] : memref<2x32xf32, #tpu.memory_space<vmem>>, vector<2x32xf32>
    tpu.vector_store %arg6[%c0_6, %c0_7], %8 {strides = array<i32>} : memref<2x32xf32, #tpu.memory_space<vmem>>, vector<2x32xf32>,
    %c0_i32_8 = arith.constant 0 : i32
    %10 = arith.cmpi eq, %arg1, %c0_i32_8 : i32
    %11 = arith.extui %10 : i1 to i32
    %c0_i32_9 = arith.constant 0 : i32
    %12 = arith.cmpi ne, %11, %c0_i32_9 : i32
    scf.if %12 {
      %c0_10 = arith.constant 0 : index
      %c0_11 = arith.constant 0 : index
      %13 = vector.load %arg6[%c0_10, %c0_11] : memref<2x32xf32, #tpu.memory_space<vmem>>, vector<2x32xf32>
      %c0_12 = arith.constant 0 : index
      %c0_13 = arith.constant 0 : index
      %14 = vector.load %arg4[%c0_12, %c0_13] : memref<1x32xf32, #tpu.memory_space<vmem>>, vector<1x32xf32>
      %15 = vector.broadcast %14 : vector<1x32xf32> to vector<2x32xf32>
      %16 = arith.addf %13, %15 : vector<2x32xf32>
      %cst_14 = arith.constant 0.000000e+00 : f32
      %17 = vector.broadcast %cst_14 : f32 to vector<2x32xf32>
      %18 = arith.cmpf oge, %16, %17 : vector<2x32xf32>
      %cst_15 = arith.constant 0.00999999977 : f32
      %19 = vector.broadcast %cst_15 : f32 to vector<2x32xf32>
      %20 = arith.mulf %19, %16 : vector<2x32xf32>
      %21 = arith.select %18, %16, %20 : vector<2x32xi1>, vector<2x32xf32>
      %c0_16 = arith.constant 0 : index
      %c0_17 = arith.constant 0 : index
      %22 = vector.load %arg5[%c0_16, %c0_17] : memref<2x32xf32, #tpu.memory_space<vmem>>, vector<2x32xf32>
      tpu.vector_store %arg5[%c0_16, %c0_17], %21 {strides = array<i32>} : memref<2x32xf32, #tpu.memory_space<vmem>>, vector<2x32xf32>,
    } else {
    }
    return
  }
  func.func @transform_0(%arg0: i32, %arg1: i32) -> (i32, i32) {
    %c0_i32 = arith.constant 0 : i32
    %c0_i32_0 = arith.constant 0 : i32
    return %c0_i32, %arg1 : i32, i32
  }
  func.func @transform_1(%arg0: i32, %arg1: i32) -> (i32, i32) {
    %c0_i32 = arith.constant 0 : i32
    return %arg1, %arg0 : i32, i32
  }
  func.func @transform_2(%arg0: i32, %arg1: i32) -> (i32, i32) {
    %c0_i32 = arith.constant 0 : i32
    %c0_i32_0 = arith.constant 0 : i32
    return %c0_i32, %arg0 : i32, i32
  }
  func.func @transform_3(%arg0: i32, %arg1: i32) -> (i32, i32) {
    %c0_i32 = arith.constant 0 : i32
    %c0_i32_0 = arith.constant 0 : i32
    return %c0_i32, %arg0 : i32, i32
  }
}

module attributes {stable_mosaic.version = 11 : i64} {
  func.func @_tiled_linear_kernel(%arg0: i32, %arg1: i32, %arg2: memref<2x32xf32, #tpu.memory_space<vmem>>, %arg3: memref<32x1xbf16, #tpu.memory_space<vmem>>, %arg4: memref<1x1xf32, #tpu.memory_space<vmem>>, %arg5: memref<2x1xf32, #tpu.memory_space<vmem>>, %arg6: memref<2x1xf32, #tpu.memory_space<vmem>>) attributes {dimension_semantics = [#tpu.dimension_semantics<parallel>, #tpu.dimension_semantics<arbitrary>], iteration_bounds = array<i64: 1, 1>, scalar_prefetch = 0 : i64, scratch_operands = 1 : i64, tpu.core_type = #tpu.core_type<tc>, window_params = [{transform_indices = @transform_0, window_bounds = array<i64: 2, 32>}, {transform_indices = @transform_1, window_bounds = array<i64: 32, 1>}, {transform_indices = @transform_2, window_bounds = array<i64: 1, 1>}, {transform_indices = @transform_3, window_bounds = array<i64: 2, 1>}]} {
    %c0_i32 = arith.constant 0 : i32
    %0 = arith.cmpi eq, %arg1, %c0_i32 : i32
    %1 = arith.extui %0 : i1 to i32
    %c0_i32_0 = arith.constant 0 : i32
    %2 = arith.cmpi ne, %1, %c0_i32_0 : i32
    scf.if %2 {
      %cst_10 = arith.constant 0.000000e+00 : f32
      %13 = vector.broadcast %cst_10 : f32 to vector<2x1xf32>
      %c0_11 = arith.constant 0 : index
      %c0_12 = arith.constant 0 : index
      %14 = vector.load %arg6[%c0_11, %c0_12] : memref<2x1xf32, #tpu.memory_space<vmem>>, vector<2x1xf32>
      tpu.vector_store %arg6[%c0_11, %c0_12], %13 {strides = array<i32>} : memref<2x1xf32, #tpu.memory_space<vmem>>, vector<2x1xf32>,
    } else {
    }
    %c0 = arith.constant 0 : index
    %c0_1 = arith.constant 0 : index
    %3 = vector.load %arg6[%c0, %c0_1] : memref<2x1xf32, #tpu.memory_space<vmem>>, vector<2x1xf32>
    %c0_2 = arith.constant 0 : index
    %c0_3 = arith.constant 0 : index
    %4 = vector.load %arg2[%c0_2, %c0_3] : memref<2x32xf32, #tpu.memory_space<vmem>>, vector<2x32xf32>
    %5 = arith.truncf %4 : vector<2x32xf32> to vector<2x32xbf16>
    %c0_4 = arith.constant 0 : index
    %c0_5 = arith.constant 0 : index
    %6 = vector.load %arg3[%c0_4, %c0_5] : memref<32x1xbf16, #tpu.memory_space<vmem>>, vector<32x1xbf16>
    %cst = arith.constant dense<0.000000e+00> : vector<2x1xf32>
    %7 = tpu.matmul %5, %6, %cst {dimension_numbers = #tpu.dot_dimension_numbers<[1], [0], [0], [1], [0, 0, 1, 1], [], []>} : vector<2x32xbf16>, vector<32x1xbf16>, vector<2x1xf32> -> vector<2x1xf32>
    %8 = arith.addf %3, %7 : vector<2x1xf32>
    %c0_6 = arith.constant 0 : index
    %c0_7 = arith.constant 0 : index
    %9 = vector.load %arg6[%c0_6, %c0_7] : memref<2x1xf32, #tpu.memory_space<vmem>>, vector<2x1xf32>
    tpu.vector_store %arg6[%c0_6, %c0_7], %8 {strides = array<i32>} : memref<2x1xf32, #tpu.memory_space<vmem>>, vector<2x1xf32>,
    %c0_i32_8 = arith.constant 0 : i32
    %10 = arith.cmpi eq, %arg1, %c0_i32_8 : i32
    %11 = arith.extui %10 : i1 to i32
    %c0_i32_9 = arith.constant 0 : i32
    %12 = arith.cmpi ne, %11, %c0_i32_9 : i32
    scf.if %12 {
      %c0_10 = arith.constant 0 : index
      %c0_11 = arith.constant 0 : index
      %13 = vector.load %arg6[%c0_10, %c0_11] : memref<2x1xf32, #tpu.memory_space<vmem>>, vector<2x1xf32>
      %c0_12 = arith.constant 0 : index
      %c0_13 = arith.constant 0 : index
      %14 = vector.load %arg4[%c0_12, %c0_13] : memref<1x1xf32, #tpu.memory_space<vmem>>, vector<1x1xf32>
      %15 = vector.broadcast %14 : vector<1x1xf32> to vector<2x1xf32>
      %16 = arith.addf %13, %15 : vector<2x1xf32>
      %c0_14 = arith.constant 0 : index
      %c0_15 = arith.constant 0 : index
      %17 = vector.load %arg5[%c0_14, %c0_15] : memref<2x1xf32, #tpu.memory_space<vmem>>, vector<2x1xf32>
      tpu.vector_store %arg5[%c0_14, %c0_15], %16 {strides = array<i32>} : memref<2x1xf32, #tpu.memory_space<vmem>>, vector<2x1xf32>,
    } else {
    }
    return
  }
  func.func @transform_0(%arg0: i32, %arg1: i32) -> (i32, i32) {
    %c0_i32 = arith.constant 0 : i32
    %c0_i32_0 = arith.constant 0 : i32
    return %c0_i32, %arg1 : i32, i32
  }
  func.func @transform_1(%arg0: i32, %arg1: i32) -> (i32, i32) {
    %c0_i32 = arith.constant 0 : i32
    return %arg1, %arg0 : i32, i32
  }
  func.func @transform_2(%arg0: i32, %arg1: i32) -> (i32, i32) {
    %c0_i32 = arith.constant 0 : i32
    %c0_i32_0 = arith.constant 0 : i32
    return %c0_i32, %arg0 : i32, i32
  }
  func.func @transform_3(%arg0: i32, %arg1: i32) -> (i32, i32) {
    %c0_i32 = arith.constant 0 : i32
    %c0_i32_0 = arith.constant 0 : i32
    return %c0_i32, %arg0 : i32, i32
  }
}

</mosaic_0001>

<llo_original>
// kernel: _lambda_.6
$region0: #{_lambda_.6}
  #allocation0 [shape = 'u32[]', space=smem, size = 0x4, offset = 0x4, fixed_abs, tag = 'smem constant byte address 0x4 - core index']
  #allocation1 [shape = 'u32[144,128]{1,0:T(1,128)}', space=vmem, size = 0x12000, scoped, tag = 'internal scratch']
  %s0 = inlined_call_operand.vmem [shape: f32[2,16,32], index: 0, kind: input, shape index: {}]
  %s1 = inlined_call_operand.vmem [shape: f32[2,16,8], index: 1, kind: input, shape index: {}]
  %s2 = inlined_call_operand.vmem [shape: bf16[32,16], index: 2, kind: input, shape index: {}]
  %s3 = inlined_call_operand.vmem [shape: f32[1,16], index: 3, kind: input, shape index: {}]
  %s4 = inlined_call_operand.vmem [shape: bf16[16,8], index: 4, kind: input, shape index: {}]
  %s5 = inlined_call_operand.vmem [shape: f32[1,8], index: 5, kind: input, shape index: {}]
  %s6 = inlined_call_operand.vmem [shape: bf16[8,8], index: 6, kind: input, shape index: {}]
  %s7 = inlined_call_operand.vmem [shape: f32[1,8], index: 7, kind: input, shape index: {}]
  %s8 = inlined_call_operand.vmem [shape: f32[2,16,16], index: 8, kind: output, shape index: {}]
  %s9 = sld [smem:[#allocation0]]
  $region65: #{_lambda_.6} parent=0
    _
  %s11 = ssub.s32 1, %s9
  %s12 = scalar_select 0, %s11, %s9
  loop: start=0, step=1, limit=4
  $region2: #{_lambda_.6} parent=0 // loop_pre_header
    _
  $region3: #{_lambda_.6} parent=0 // loop_header
    %s14 = sphi 0, %s18
    %p15 = scmp.ge.s32.totalorder %s14, 4
    %s24 = sphi 0, %s26
    %s27 = sphi 0, %s24
    %s28 = sphi 0, %s27
    %s44 = sphi 0, %s28
    %s50 = sphi 0, %s52
    %s53 = sphi 0, %s50
    %s54 = sphi 0, %s53
    %s70 = sphi 0, %s54
    %s74 = sphi 0, %s74
    %s76 = sphi 0, %s74
    %s77 = sphi 0, %s76
    %s91 = sphi 0, %s77
    %s95 = sphi 0, %s95
    %s97 = sphi 0, %s95
    %s98 = sphi 0, %s97
    %s112 = sphi 0, %s98
    %s116 = sphi 0, %s116
    %s118 = sphi 0, %s116
    %s119 = sphi 0, %s118
    %s133 = sphi 0, %s119
    %s137 = sphi 0, %s137
    %s139 = sphi 0, %s137
    %s140 = sphi 0, %s139
    %s154 = sphi 0, %s140
    %s158 = sphi 0, %s158
    %s160 = sphi 0, %s158
    %s161 = sphi 0, %s160
    %s175 = sphi 0, %s161
    %s179 = sphi 0, %s179
    %s181 = sphi 0, %s179
    %s182 = sphi 0, %s181
    %s196 = sphi 0, %s182
    %s202 = sphi 0, %s204
    %s205 = sphi 0, %s202
    %s206 = sphi 0, %s205
    %s222 = sphi 0, %s206
  $region4: #{_lambda_.6} parent=0 // loop_header_branch
    %17 = sbr.rel (%p15) target = $region8
  $region5: #{_lambda_.6} parent=0 // loop_body
    %s19 = ssub.s32 %s14, 1
    %s20 = ssub.s32 %s14, 2
    %s21 = sadd.s32 %s14, 1
    %s22 = ssub.s32 %s14, %s21
    %p23 = scmp.eq.s32.totalorder %s22, 0
    %s25 = sadd.s32 %s24, 1
    %s26 = scalar_select %p23, %s24, %s25
    %p29 = pneg %p23
    %p30 = scmp.eq.s32.totalorder %s14, 1
    %p31 = por %p29, %p30
    %p32 = scmp.ne.s32.totalorder %s24, %s27
    %p33 = scmp.eq.s32.totalorder %s14, 0
    %p34 = por %p32, %p33
    %p35 = scmp.ne.s32.totalorder %s24, %s27
    %p36 = scmp.eq.s32.totalorder %s19, 1
    %p37 = por %p35, %p36
    %p38 = scmp.ne.s32.totalorder %s27, %s28
    %p39 = scmp.eq.s32.totalorder %s19, 0
    %p40 = por %p38, %p39
    %p41 = scmp.ne.s32.totalorder %s27, %s28
    %p42 = scmp.eq.s32.totalorder %s20, 1
    %p43 = por %p41, %p42
    %p45 = scmp.ne.s32.totalorder %s28, %s44
    %p46 = scmp.eq.s32.totalorder %s20, 0
    %p47 = por %p45, %p46
    %s48 = ssub.s32 %s14, %s21
    %p49 = scmp.eq.s32.totalorder %s48, 0
    %s51 = sadd.s32 %s50, 1
    %s52 = scalar_select %p49, %s50, %s51
    %p55 = pneg %p49
    %p56 = scmp.eq.s32.totalorder %s14, 1
    %p57 = por %p55, %p56
    %p58 = scmp.ne.s32.totalorder %s50, %s53
    %p59 = scmp.eq.s32.totalorder %s14, 0
    %p60 = por %p58, %p59
    %p61 = scmp.ne.s32.totalorder %s50, %s53
    %p62 = scmp.eq.s32.totalorder %s19, 1
    %p63 = por %p61, %p62
    %p64 = scmp.ne.s32.totalorder %s53, %s54
    %p65 = scmp.eq.s32.totalorder %s19, 0
    %p66 = por %p64, %p65
    %p67 = scmp.ne.s32.totalorder %s53, %s54
    %p68 = scmp.eq.s32.totalorder %s20, 1
    %p69 = por %p67, %p68
    %p71 = scmp.ne.s32.totalorder %s54, %s70
    %p72 = scmp.eq.s32.totalorder %s20, 0
    %p73 = por %p71, %p72
    %s75 = sadd.s32 %s74, 1
    %p78 = scmp.eq.s32.totalorder %s14, 1
    %p79 = scmp.ne.s32.totalorder %s74, %s76
    %p80 = scmp.eq.s32.totalorder %s14, 0
    %p81 = por %p79, %p80
    %p82 = scmp.ne.s32.totalorder %s74, %s76
    %p83 = scmp.eq.s32.totalorder %s19, 1
    %p84 = por %p82, %p83
    %p85 = scmp.ne.s32.totalorder %s76, %s77
    %p86 = scmp.eq.s32.totalorder %s19, 0
    %p87 = por %p85, %p86
    %p88 = scmp.ne.s32.totalorder %s76, %s77
    %p89 = scmp.eq.s32.totalorder %s20, 1
    %p90 = por %p88, %p89
    %p92 = scmp.ne.s32.totalorder %s77, %s91
    %p93 = scmp.eq.s32.totalorder %s20, 0
    %p94 = por %p92, %p93
    %s96 = sadd.s32 %s95, 1
    %p99 = scmp.eq.s32.totalorder %s14, 1
    %p100 = scmp.ne.s32.totalorder %s95, %s97
    %p101 = scmp.eq.s32.totalorder %s14, 0
    %p102 = por %p100, %p101
    %p103 = scmp.ne.s32.totalorder %s95, %s97
    %p104 = scmp.eq.s32.totalorder %s19, 1
    %p105 = por %p103, %p104
    %p106 = scmp.ne.s32.totalorder %s97, %s98
    %p107 = scmp.eq.s32.totalorder %s19, 0
    %p108 = por %p106, %p107
    %p109 = scmp.ne.s32.totalorder %s97, %s98
    %p110 = scmp.eq.s32.totalorder %s20, 1
    %p111 = por %p109, %p110
    %p113 = scmp.ne.s32.totalorder %s98, %s112
    %p114 = scmp.eq.s32.totalorder %s20, 0
    %p115 = por %p113, %p114
    %s117 = sadd.s32 %s116, 1
    %p120 = scmp.eq.s32.totalorder %s14, 1
    %p121 = scmp.ne.s32.totalorder %s116, %s118
    %p122 = scmp.eq.s32.totalorder %s14, 0
    %p123 = por %p121, %p122
    %p124 = scmp.ne.s32.totalorder %s116, %s118
    %p125 = scmp.eq.s32.totalorder %s19, 1
    %p126 = por %p124, %p125
    %p127 = scmp.ne.s32.totalorder %s118, %s119
    %p128 = scmp.eq.s32.totalorder %s19, 0
    %p129 = por %p127, %p128
    %p130 = scmp.ne.s32.totalorder %s118, %s119
    %p131 = scmp.eq.s32.totalorder %s20, 1
    %p132 = por %p130, %p131
    %p134 = scmp.ne.s32.totalorder %s119, %s133
    %p135 = scmp.eq.s32.totalorder %s20, 0
    %p136 = por %p134, %p135
    %s138 = sadd.s32 %s137, 1
    %p141 = scmp.eq.s32.totalorder %s14, 1
    %p142 = scmp.ne.s32.totalorder %s137, %s139
    %p143 = scmp.eq.s32.totalorder %s14, 0
    %p144 = por %p142, %p143
    %p145 = scmp.ne.s32.totalorder %s137, %s139
    %p146 = scmp.eq.s32.totalorder %s19, 1
    %p147 = por %p145, %p146
    %p148 = scmp.ne.s32.totalorder %s139, %s140
    %p149 = scmp.eq.s32.totalorder %s19, 0
    %p150 = por %p148, %p149
    %p151 = scmp.ne.s32.totalorder %s139, %s140
    %p152 = scmp.eq.s32.totalorder %s20, 1
    %p153 = por %p151, %p152
    %p155 = scmp.ne.s32.totalorder %s140, %s154
    %p156 = scmp.eq.s32.totalorder %s20, 0
    %p157 = por %p155, %p156
    %s159 = sadd.s32 %s158, 1
    %p162 = scmp.eq.s32.totalorder %s14, 1
    %p163 = scmp.ne.s32.totalorder %s158, %s160
    %p164 = scmp.eq.s32.totalorder %s14, 0
    %p165 = por %p163, %p164
    %p166 = scmp.ne.s32.totalorder %s158, %s160
    %p167 = scmp.eq.s32.totalorder %s19, 1
    %p168 = por %p166, %p167
    %p169 = scmp.ne.s32.totalorder %s160, %s161
    %p170 = scmp.eq.s32.totalorder %s19, 0
    %p171 = por %p169, %p170
    %p172 = scmp.ne.s32.totalorder %s160, %s161
    %p173 = scmp.eq.s32.totalorder %s20, 1
    %p174 = por %p172, %p173
    %p176 = scmp.ne.s32.totalorder %s161, %s175
    %p177 = scmp.eq.s32.totalorder %s20, 0
    %p178 = por %p176, %p177
    %s180 = sadd.s32 %s179, 1
    %p183 = scmp.eq.s32.totalorder %s14, 1
    %p184 = scmp.ne.s32.totalorder %s179, %s181
    %p185 = scmp.eq.s32.totalorder %s14, 0
    %p186 = por %p184, %p185
    %p187 = scmp.ne.s32.totalorder %s179, %s181
    %p188 = scmp.eq.s32.totalorder %s19, 1
    %p189 = por %p187, %p188
    %p190 = scmp.ne.s32.totalorder %s181, %s182
    %p191 = scmp.eq.s32.totalorder %s19, 0
    %p192 = por %p190, %p191
    %p193 = scmp.ne.s32.totalorder %s181, %s182
    %p194 = scmp.eq.s32.totalorder %s20, 1
    %p195 = por %p193, %p194
    %p197 = scmp.ne.s32.totalorder %s182, %s196
    %p198 = scmp.eq.s32.totalorder %s20, 0
    %p199 = por %p197, %p198
    %s200 = ssub.s32 %s14, %s21
    %p201 = scmp.eq.s32.totalorder %s200, 0
    %s203 = sadd.s32 %s202, 1
    %s204 = scalar_select %p201, %s202, %s203
    %p207 = pneg %p201
    %p208 = scmp.eq.s32.totalorder %s14, 1
    %p209 = por %p207, %p208
    %p210 = scmp.ne.s32.totalorder %s202, %s205
    %p211 = scmp.eq.s32.totalorder %s14, 0
    %p212 = por %p210, %p211
    %p213 = scmp.ne.s32.totalorder %s202, %s205
    %p214 = scmp.eq.s32.totalorder %s19, 1
    %p215 = por %p213, %p214
    %p216 = scmp.ne.s32.totalorder %s205, %s206
    %p217 = scmp.eq.s32.totalorder %s19, 0
    %p218 = por %p216, %p217
    %p219 = scmp.ne.s32.totalorder %s205, %s206
    %p220 = scmp.eq.s32.totalorder %s20, 1
    %p221 = por %p219, %p220
    %p223 = scmp.ne.s32.totalorder %s206, %s222
    %p224 = scmp.eq.s32.totalorder %s20, 0
    %p225 = por %p223, %p224
    %p226 = scmp.le.s32.totalorder 1, %s14
    %p227 = scmp.lt.s32.totalorder %s14, 3
    %p228 = pnand %p226, %p227
    %p229 = pneg %p228
    // Predicated region
    $region9: #{_lambda_.6} parent=5 // pred_check
      _
    $region10: #{_lambda_.6} parent=5 // pred_check_branch
      %231 = sbr.rel (%p228) target = $region12
    $region11: #{_lambda_.6} parent=5 // pred_region
      %s232 = ssub.s32 %s14, 1
      // Predicated region
      $region13: #{_lambda_.6} parent=11 // pred_check
        %p233 = pneg %p87
      $region14: #{_lambda_.6} parent=11 // pred_check_branch
        %235 = sbr.rel (%p233) target = $region16
      $region15: #{_lambda_.6} parent=11 // pred_region
        _
      $region16: #{_lambda_.6} parent=11 // pred_fallthru
        _
      // Predicated region
      $region17: #{_lambda_.6} parent=11 // pred_check
        %p236 = pneg %p108
      $region18: #{_lambda_.6} parent=11 // pred_check_branch
        %238 = sbr.rel (%p236) target = $region20
      $region19: #{_lambda_.6} parent=11 // pred_region
        _
      $region20: #{_lambda_.6} parent=11 // pred_fallthru
        _
      // Predicated region
      $region21: #{_lambda_.6} parent=11 // pred_check
        %p239 = pneg %p129
      $region22: #{_lambda_.6} parent=11 // pred_check_branch
        %241 = sbr.rel (%p239) target = $region24
      $region23: #{_lambda_.6} parent=11 // pred_region
        _
      $region24: #{_lambda_.6} parent=11 // pred_fallthru
        _
      // Predicated region
      $region25: #{_lambda_.6} parent=11 // pred_check
        %p242 = pneg %p150
      $region26: #{_lambda_.6} parent=11 // pred_check_branch
        %244 = sbr.rel (%p242) target = $region28
      $region27: #{_lambda_.6} parent=11 // pred_region
        _
      $region28: #{_lambda_.6} parent=11 // pred_fallthru
        _
      // Predicated region
      $region29: #{_lambda_.6} parent=11 // pred_check
        %p245 = pneg %p171
      $region30: #{_lambda_.6} parent=11 // pred_check_branch
        %247 = sbr.rel (%p245) target = $region32
      $region31: #{_lambda_.6} parent=11 // pred_region
        _
      $region32: #{_lambda_.6} parent=11 // pred_fallthru
        _
      // Predicated region
      $region33: #{_lambda_.6} parent=11 // pred_check
        %p248 = pneg %p192
      $region34: #{_lambda_.6} parent=11 // pred_check_branch
        %250 = sbr.rel (%p248) target = $region36
      $region35: #{_lambda_.6} parent=11 // pred_region
        _
      $region36: #{_lambda_.6} parent=11 // pred_fallthru
        _
    $region12: #{_lambda_.6} parent=5 // pred_fallthru
      _
    %p251 = scmp.lt.s32.totalorder %s14, 2
    // Predicated region
    $region37: #{_lambda_.6} parent=5 // pred_check
      %p252 = pneg %p251
    $region38: #{_lambda_.6} parent=5 // pred_check_branch
      %254 = sbr.rel (%p252) target = $region40
    $region39: #{_lambda_.6} parent=5 // pred_region
      // Predicated region
      $region41: #{_lambda_.6} parent=39 // pred_check
        %p255 = pneg %p34
      $region42: #{_lambda_.6} parent=39 // pred_check_branch
        %257 = sbr.rel (%p255) target = $region44
      $region43: #{_lambda_.6} parent=39 // pred_region
        %p258 = scmp.lt.s32.totalorder %s14, 1
        %s259 = scalar_select %p258, %s14, 1
        %s260 = smul.addr %s259, 2
        %s261 = smul.addr %s260, 8
        %s262 = scalar_lea.vmem %s0, %s261
      $region44: #{_lambda_.6} parent=39 // pred_fallthru
        _
      // Predicated region
      $region45: #{_lambda_.6} parent=39 // pred_check
        %p263 = pneg %p60
      $region46: #{_lambda_.6} parent=39 // pred_check_branch
        %265 = sbr.rel (%p263) target = $region48
      $region47: #{_lambda_.6} parent=39 // pred_region
        %p266 = scmp.lt.s32.totalorder %s14, 1
        %s267 = scalar_select %p266, %s14, 1
        %s268 = smul.addr %s267, 2
        %s269 = smul.addr %s268, 8
        %s270 = scalar_lea.vmem %s1, %s269
      $region48: #{_lambda_.6} parent=39 // pred_fallthru
        _
    $region40: #{_lambda_.6} parent=5 // pred_fallthru
      _
    %p271 = scmp.le.s32.totalorder 1, %s14
    %p272 = scmp.lt.s32.totalorder %s14, 3
    %p273 = pnand %p271, %p272
    %p274 = pneg %p273
    // Predicated region
    $region49: #{_lambda_.6} parent=5 // pred_check
      _
    $region50: #{_lambda_.6} parent=5 // pred_check_branch
      %276 = sbr.rel (%p273) target = $region52
    $region51: #{_lambda_.6} parent=5 // pred_region
      %s277 = ssub.s32 %s14, 1
      %p278 = scmp.lt.s32.totalorder %s19, 1
      %s279 = scalar_select %p278, %s19, 1
      %s280 = smul.addr %s279, 2
      %s281 = smul.addr %s280, 8
      %s282 = scalar_lea.vmem %s0, %s281
      %p283 = pneg %p40
      %p284 = pneg %p37
      %p285 = scmp.lt.s32.totalorder %s19, 1
      %s286 = scalar_select %p285, %s19, 1
      %s287 = smul.addr %s286, 2
      %s288 = smul.addr %s287, 8
      %s289 = scalar_lea.vmem %s1, %s288
      %p290 = pneg %p66
      %p291 = pneg %p63
      %p292 = pneg %p87
      %p293 = pneg %p84
      %p294 = pneg %p108
      %p295 = pneg %p105
      %p296 = pneg %p129
      %p297 = pneg %p126
      %p298 = pneg %p150
      %p299 = pneg %p147
      %p300 = pneg %p171
      %p301 = pneg %p168
      %p302 = pneg %p192
      %p303 = pneg %p189
      %p304 = pneg %p218
      %p305 = pneg %p215
      %p306 = scmp.lt.s32.totalorder %s19, 1
      %s307 = scalar_select %p306, %s19, 1
      %s308 = smul.addr %s307, 2
      %s309 = smul.addr %s308, 8
      %s310 = scalar_lea.vmem %s8, %s309
      %p311 = scmp.lt.s32.totalorder %s19, 1
      %s312 = scalar_select %p311, %s19, 1
      %s313 = smul.addr %s312, 2
      %s314 = smul.addr %s313, 8
      %s315 = scalar_lea.vmem %s0, %s314
      %p316 = scmp.lt.s32.totalorder %s19, 1
      %s317 = scalar_select %p316, %s19, 1
      %s318 = smul.addr %s317, 2
      %s319 = smul.addr %s318, 8
      %s320 = scalar_lea.vmem %s1, %s319
      %p321 = scmp.lt.s32.totalorder %s19, 1
      %s322 = scalar_select %p321, %s19, 1
      %s323 = smul.addr %s322, 2
      %s324 = smul.addr %s323, 8
      %s325 = scalar_lea.vmem %s8, %s324
      %v327 = vld [vmem:[%s315] sm:$0xff]
      %v328 = vld [vmem:[%s315 + $0x8] sm:$0xff]
      %vm329 = vcmask 261120
      %v330 = vsel %vm329, %v327, 0.0
      %v331 = vsel %vm329, %v328, 0.0
      %v332 = vadd.f32 %v330, %v331
      %v333 = vrot.slane %v332, 4
      %v334 = vadd.f32 %v332, %v333
      %v335 = vrot.slane %v334, 2
      %v336 = vadd.f32 %v334, %v335
      %v337 = vrot.slane %v336, 1
      %v338 = vadd.f32 %v336, %v337
      %v339 = vrcp.pop 16.0
      %v340 = vmul.f32 %v338, %v339
      %v341 = vsub.f32 %v327, %v340
      %v342 = vsub.f32 %v328, %v340
      %v343 = vmul.f32 %v341, %v341
      %v344 = vmul.f32 %v342, %v342
      %v345 = vsel %vm329, %v343, 0.0
      %v346 = vsel %vm329, %v344, 0.0
      %v347 = vadd.f32 %v345, %v346
      %v348 = vrot.slane %v347, 4
      %v349 = vadd.f32 %v347, %v348
      %v350 = vrot.slane %v349, 2
      %v351 = vadd.f32 %v349, %v350
      %v352 = vrot.slane %v351, 1
      %v353 = vadd.f32 %v351, %v352
      %v354 = vmul.f32 %v353, %v339
      %v355 = vadd.f32 %v354, 1e-05
      %v356 = vrsqrt.pop %v355
      %v357 = vmul.f32 %v341, %v356
      %v358 = vmul.f32 %v342, %v356
      %v359 = vpack.c.bf16 %v358, %v357
      %v360 = vld [vmem:[%s2] sm:$0xf]
      %v361 = vld [vmem:[%s2 + $0x4] sm:$0xf]
      %v362 = vld [vmem:[%s2 + $0x8] sm:$0xf]
      %v363 = vld [vmem:[%s2 + $0xc] sm:$0xf]
      %v364 = vld [vmem:[%s3] sm:$0x1]
      %v366 = vlaneseq
      %v367 = vshrl.u32 %v366, 7
      %v368 = vsub.s32 0, %v367
      %v369 = vrot.slane %v364, %v368
      %v375 = vunpack.c.l.b16 %v360
      %v376 = vunpack.c.l.b16 %v361
      %v377 = vunpack.c.l.b16 %v362
      %v378 = vunpack.c.l.b16 %v363
      %v379 = vpack.c.b16 %v376, %v375
      %v380 = vpack.c.b16 %v378, %v377
      %v384 = vsel %vm329, %v359, 0
      %386 = vmatprep.subr.bf16.mxu0 0
      %387 = vmatpush1.bf16.msra.mxu0 %v379
      %388 = vmatprep.subr.bf16.mxu0 0
      %389 = vmatpush1.bf16.msra.mxu0 %v380
      %390 = vmatprep.subr.bf16.mxu0 0
      %391 = vmatpush1.bf16.msra.mxu0 0
      %392 = vmatprep.subr.bf16.mxu0 0
      %393 = vmatpush1.bf16.msra.mxu0 0
      %394 = vmatprep.subr.bf16.mxu0 0
      %395 = vmatpush1.bf16.msra.mxu0 0
      %396 = vmatprep.subr.bf16.mxu0 0
      %397 = vmatpush1.bf16.msra.mxu0 0
      %398 = vmatprep.subr.bf16.mxu0 0
      %399 = vmatpush1.bf16.msra.mxu0 0
      %400 = vmatprep.subr.bf16.mxu0 0
      %401 = vmatpush1.bf16.msra.mxu0 0
      %402 = vmatprep.subr.bf16.mxu0 0
      %403 = vmatpush1.bf16.msra.mxu0 0
      %404 = vmatprep.subr.bf16.mxu0 0
      %405 = vmatpush1.bf16.msra.mxu0 0
      %406 = vmatprep.subr.bf16.mxu0 0
      %407 = vmatpush1.bf16.msra.mxu0 0
      %408 = vmatprep.subr.bf16.mxu0 0
      %409 = vmatpush1.bf16.msra.mxu0 0
      %410 = vmatprep.subr.bf16.mxu0 0
      %411 = vmatpush1.bf16.msra.mxu0 0
      %412 = vmatprep.subr.bf16.mxu0 0
      %413 = vmatpush1.bf16.msra.mxu0 0
      %414 = vmatprep.subr.bf16.mxu0 0
      %415 = vmatpush1.bf16.msra.mxu0 0
      %416 = vmatprep.subr.bf16.mxu0 0
      %417 = vmatpush1.bf16.msra.mxu0 0
      %418 = vmatprep.mubr.bf16.mxu0 0
      %419 = vmatmul.mubr.bf16.gmra.mrb[0].mxu0 %v384
      %v420 = vpop.f32.mrb[0].mxu0
      %v421 = vadd.f32 %v369, %v420
      %v422 = vpop.f32.mrb[0].mxu0
      %v423 = vpop.f32.mrb[0].mxu0
      %v424 = vadd.f32 %v369, %v423
      %v425 = vpop.f32.mrb[0].mxu0
      %426 = vdwg.mxu0
      %vm427 = vcmask 130048
      %v428 = vsel %vm427, %v421, 0.0
      %429 = vadd.xlane.f32.xlu0 %v428
      %v430 = vpop.xlane.xlu0 %429
      %v431 = vsel %vm427, %v424, 0.0
      %432 = vadd.xlane.f32.xlu0 %v431
      %v433 = vpop.xlane.xlu0 %432
      %v434 = vmul.f32 %v430, %v339
      %v435 = vmul.f32 %v433, %v339
      %v436 = vsub.f32 %v421, %v434
      %v437 = vsub.f32 %v424, %v435
      %v438 = vmul.f32 %v436, %v436
      %v439 = vmul.f32 %v437, %v437
      %v440 = vsel %vm427, %v438, 0.0
      %441 = vadd.xlane.f32.xlu0 %v440
      %v442 = vpop.xlane.xlu0 %441
      %v443 = vsel %vm427, %v439, 0.0
      %444 = vadd.xlane.f32.xlu0 %v443
      %v445 = vpop.xlane.xlu0 %444
      %v446 = vmul.f32 %v442, %v339
      %v447 = vmul.f32 %v445, %v339
      %v448 = vadd.f32 %v446, 1e-05
      %v449 = vadd.f32 %v447, 1e-05
      %v450 = vrsqrt.pop %v448
      %v451 = vrsqrt.pop %v449
      %v452 = vmul.f32 %v436, %v450
      %v453 = vmul.f32 %v437, %v451
      %vm454 = vcmp.ge.f32.partialorder %v452, 0.0
      %vm455 = vcmp.ge.f32.partialorder %v453, 0.0
      %v456 = vmul.f32 %v452, 0.01
      %v457 = vmul.f32 %v453, 0.01
      %v458 = vsel %vm454, %v452, %v456
      %v459 = vsel %vm455, %v453, %v457
      %v460 = vpack.c.bf16 %v459, %v458
      %v461 = vld [vmem:[%s4] sm:$0xf]
      %v462 = vld [vmem:[%s4 + $0x4] sm:$0xf]
      %v463 = vld [vmem:[%s5] sm:$0x1]
      %v465 = vlaneseq
      %v466 = vshrl.u32 %v465, 7
      %v467 = vsub.s32 0, %v466
      %v468 = vrot.slane %v463, %v467
      %v472 = vunpack.c.l.b16 %v461
      %v473 = vunpack.c.l.b16 %v462
      %v474 = vpack.c.b16 %v473, %v472
      %v477 = vsel %vm427, %v460, 0
      %479 = vmatprep.subr.bf16.mxu0 0
      %480 = vmatpush1.bf16.msra.mxu0 %v474
      %481 = vmatprep.subr.bf16.mxu0 0
      %482 = vmatpush1.bf16.msra.mxu0 0
      %483 = vmatprep.subr.bf16.mxu0 0
      %484 = vmatpush1.bf16.msra.mxu0 0
      %485 = vmatprep.subr.bf16.mxu0 0
      %486 = vmatpush1.bf16.msra.mxu0 0
      %487 = vmatprep.subr.bf16.mxu0 0
      %488 = vmatpush1.bf16.msra.mxu0 0
      %489 = vmatprep.subr.bf16.mxu0 0
      %490 = vmatpush1.bf16.msra.mxu0 0
      %491 = vmatprep.subr.bf16.mxu0 0
      %492 = vmatpush1.bf16.msra.mxu0 0
      %493 = vmatprep.subr.bf16.mxu0 0
      %494 = vmatpush1.bf16.msra.mxu0 0
      %495 = vmatprep.subr.bf16.mxu0 0
      %496 = vmatpush1.bf16.msra.mxu0 0
      %497 = vmatprep.subr.bf16.mxu0 0
      %498 = vmatpush1.bf16.msra.mxu0 0
      %499 = vmatprep.subr.bf16.mxu0 0
      %500 = vmatpush1.bf16.msra.mxu0 0
      %501 = vmatprep.subr.bf16.mxu0 0
      %502 = vmatpush1.bf16.msra.mxu0 0
      %503 = vmatprep.subr.bf16.mxu0 0
      %504 = vmatpush1.bf16.msra.mxu0 0
      %505 = vmatprep.subr.bf16.mxu0 0
      %506 = vmatpush1.bf16.msra.mxu0 0
      %507 = vmatprep.subr.bf16.mxu0 0
      %508 = vmatpush1.bf16.msra.mxu0 0
      %509 = vmatprep.subr.bf16.mxu0 0
      %510 = vmatpush1.bf16.msra.mxu0 0
      %511 = vmatprep.mubr.bf16.mxu0 0
      %512 = vmatmul.mubr.bf16.gmra.mrb[0].mxu0 %v477
      %v513 = vpop.f32.mrb[0].mxu0
      %v514 = vadd.f32 %v468, %v513
      %v515 = vpop.f32.mrb[0].mxu0
      %v516 = vpop.f32.mrb[0].mxu0
      %v517 = vadd.f32 %v468, %v516
      %v518 = vpop.f32.mrb[0].mxu0
      %519 = vdwg.mxu0
      %vm520 = vcmask 64512
      %v521 = vsel %vm520, %v514, 0.0
      %522 = vadd.xlane.f32.xlu0 %v521
      %v523 = vpop.xlane.xlu0 %522
      %v524 = vsel %vm520, %v517, 0.0
      %525 = vadd.xlane.f32.xlu0 %v524
      %v526 = vpop.xlane.xlu0 %525
      %v527 = vrcp.pop 8.0
      %v528 = vmul.f32 %v523, %v527
      %v529 = vmul.f32 %v526, %v527
      %v530 = vsub.f32 %v514, %v528
      %v531 = vsub.f32 %v517, %v529
      %v532 = vmul.f32 %v530, %v530
      %v533 = vmul.f32 %v531, %v531
      %v534 = vsel %vm520, %v532, 0.0
      %535 = vadd.xlane.f32.xlu0 %v534
      %v536 = vpop.xlane.xlu0 %535
      %v537 = vsel %vm520, %v533, 0.0
      %538 = vadd.xlane.f32.xlu0 %v537
      %v539 = vpop.xlane.xlu0 %538
      %v540 = vmul.f32 %v536, %v527
      %v541 = vmul.f32 %v539, %v527
      %v542 = vadd.f32 %v540, 1e-05
      %v543 = vadd.f32 %v541, 1e-05
      %v544 = vrsqrt.pop %v542
      %v545 = vrsqrt.pop %v543
      %v546 = vmul.f32 %v530, %v544
      %v547 = vmul.f32 %v531, %v545
      %vm548 = vcmp.ge.f32.partialorder %v546, 0.0
      %vm549 = vcmp.ge.f32.partialorder %v547, 0.0
      %v550 = vmul.f32 %v546, 0.01
      %v551 = vmul.f32 %v547, 0.01
      %v552 = vsel %vm548, %v546, %v550
      %v553 = vsel %vm549, %v547, %v551
      %v554 = vpack.c.bf16 %v553, %v552
      %v555 = vld [vmem:[%s6] sm:$0xf]
      %v556 = vld [vmem:[%s7] sm:$0x1]
      %v558 = vlaneseq
      %v559 = vshrl.u32 %v558, 7
      %v560 = vsub.s32 0, %v559
      %v561 = vrot.slane %v556, %v560
      %v564 = vsel %vm520, %v554, 0
      %vm566 = vcmask 1043456
      %v568 = vsel %vm566, %v555, 0
      %570 = vmatprep.subr.bf16.mxu0 0
      %571 = vmatpush1.bf16.msra.mxu0 %v568
      %572 = vmatprep.subr.bf16.mxu0 0
      %573 = vmatpush1.bf16.msra.mxu0 0
      %574 = vmatprep.subr.bf16.mxu0 0
      %575 = vmatpush1.bf16.msra.mxu0 0
      %576 = vmatprep.subr.bf16.mxu0 0
      %577 = vmatpush1.bf16.msra.mxu0 0
      %578 = vmatprep.subr.bf16.mxu0 0
      %579 = vmatpush1.bf16.msra.mxu0 0
      %580 = vmatprep.subr.bf16.mxu0 0
      %581 = vmatpush1.bf16.msra.mxu0 0
      %582 = vmatprep.subr.bf16.mxu0 0
      %583 = vmatpush1.bf16.msra.mxu0 0
      %584 = vmatprep.subr.bf16.mxu0 0
      %585 = vmatpush1.bf16.msra.mxu0 0
      %586 = vmatprep.subr.bf16.mxu0 0
      %587 = vmatpush1.bf16.msra.mxu0 0
      %588 = vmatprep.subr.bf16.mxu0 0
      %589 = vmatpush1.bf16.msra.mxu0 0
      %590 = vmatprep.subr.bf16.mxu0 0
      %591 = vmatpush1.bf16.msra.mxu0 0
      %592 = vmatprep.subr.bf16.mxu0 0
      %593 = vmatpush1.bf16.msra.mxu0 0
      %594 = vmatprep.subr.bf16.mxu0 0
      %595 = vmatpush1.bf16.msra.mxu0 0
      %596 = vmatprep.subr.bf16.mxu0 0
      %597 = vmatpush1.bf16.msra.mxu0 0
      %598 = vmatprep.subr.bf16.mxu0 0
      %599 = vmatpush1.bf16.msra.mxu0 0
      %600 = vmatprep.subr.bf16.mxu0 0
      %601 = vmatpush1.bf16.msra.mxu0 0
      %602 = vmatprep.mubr.bf16.mxu0 0
      %603 = vmatmul.mubr.bf16.gmra.mrb[0].mxu0 %v564
      %v604 = vpop.f32.mrb[0].mxu0
      %v605 = vadd.f32 %v561, %v604
      %v606 = vpop.f32.mrb[0].mxu0
      %v607 = vpop.f32.mrb[0].mxu0
      %v608 = vadd.f32 %v561, %v607
      %v609 = vpop.f32.mrb[0].mxu0
      %610 = vdwg.mxu0
      %v611 = vld [vmem:[%s320] sm:$0xff]
      %v612 = vld [vmem:[%s320 + $0x8] sm:$0xff]
      %615 = vrot.lane.b32.xlu0 %v611, 8
      %v616 = vpop.permute.xlu0 %615
      %617 = vrot.lane.b32.xlu0 %v612, 8
      %v618 = vpop.permute.xlu0 %617
      %v621 = vsel %vm520, %v605, %v616
      %v622 = vsel %vm520, %v608, %v618
      %v623 = vsel %vm427, %v621, 0.0
      %v624 = vsel %vm427, %v622, 0.0
      %v625 = vadd.f32 %v623, %v624
      %v626 = vrot.slane %v625, 4
      %v627 = vadd.f32 %v625, %v626
      %v628 = vrot.slane %v627, 2
      %v629 = vadd.f32 %v627, %v628
      %v630 = vrot.slane %v629, 1
      %v631 = vadd.f32 %v629, %v630
      %v632 = vmul.f32 %v631, %v339
      %v633 = vsub.f32 %v621, %v632
      %v634 = vsub.f32 %v622, %v632
      %v635 = vmul.f32 %v633, %v633
      %v636 = vmul.f32 %v634, %v634
      %v637 = vsel %vm427, %v635, 0.0
      %v638 = vsel %vm427, %v636, 0.0
      %v639 = vadd.f32 %v637, %v638
      %v640 = vrot.slane %v639, 4
      %v641 = vadd.f32 %v639, %v640
      %v642 = vrot.slane %v641, 2
      %v643 = vadd.f32 %v641, %v642
      %v644 = vrot.slane %v643, 1
      %v645 = vadd.f32 %v643, %v644
      %v646 = vmul.f32 %v645, %v339
      %v647 = vadd.f32 %v646, 1e-05
      %v648 = vrsqrt.pop %v647
      %v649 = vmul.f32 %v633, %v648
      %v650 = vmul.f32 %v634, %v648
      %651 = vst.msk [vmem:[%s325] sm:$0xff] %vm427, %v649
      %652 = vst.msk [vmem:[%s325 + $0x8] sm:$0xff] %vm427, %v650
      %p653 = scmp.lt.s32.totalorder %s19, 1
      %s654 = scalar_select %p653, %s19, 1
      %s655 = smul.addr %s654, 2
      %s656 = smul.addr %s655, 8
      %s657 = scalar_lea.vmem %s8, %s656
      // Predicated region
      $region53: #{_lambda_.6} parent=51 // pred_check
        %p658 = pneg %p215
      $region54: #{_lambda_.6} parent=51 // pred_check_branch
        %660 = sbr.rel (%p658) target = $region56
      $region55: #{_lambda_.6} parent=51 // pred_region
        _
      $region56: #{_lambda_.6} parent=51 // pred_fallthru
        _
    $region52: #{_lambda_.6} parent=5 // pred_fallthru
      _
    %p661 = scmp.le.s32.totalorder 2, %s14
    // Predicated region
    $region57: #{_lambda_.6} parent=5 // pred_check
      %p662 = pneg %p661
    $region58: #{_lambda_.6} parent=5 // pred_check_branch
      %664 = sbr.rel (%p662) target = $region60
    $region59: #{_lambda_.6} parent=5 // pred_region
      %s665 = ssub.s32 %s14, 2
      // Predicated region
      $region61: #{_lambda_.6} parent=59 // pred_check
        %p666 = pneg %p221
      $region62: #{_lambda_.6} parent=59 // pred_check_branch
        %668 = sbr.rel (%p666) target = $region64
      $region63: #{_lambda_.6} parent=59 // pred_region
        %p669 = scmp.lt.s32.totalorder %s20, 1
        %s670 = scalar_select %p669, %s20, 1
        %s671 = smul.addr %s670, 2
        %s672 = smul.addr %s671, 8
        %s673 = scalar_lea.vmem %s8, %s672
      $region64: #{_lambda_.6} parent=59 // pred_fallthru
        _
    $region60: #{_lambda_.6} parent=5 // pred_fallthru
      _
  $region6: #{_lambda_.6} parent=0 // loop_footer
    %s18 = sadd.s32 1, %s14
  $region7: #{_lambda_.6} parent=0 // loop_footer_branch
    %13 = sbr.rel target = $region3
  $region8: #{_lambda_.6} parent=0 // loop_exit
    _

// kernel: _lambda_.9
$region0: #{_lambda_.9}
  #allocation0 [shape = 'u32[]', space=smem, size = 0x4, offset = 0x4, fixed_abs, tag = 'smem constant byte address 0x4 - core index']
  #allocation1 [shape = 'u32[144,128]{1,0:T(1,128)}', space=vmem, size = 0x12000, scoped, tag = 'internal scratch']
  #allocation2 [shape = 'f32[2,120]{1,0:T(2,128)}', space=vmem, size = 0x400, scoped, tag = 'scratch operand']
  %s0 = inlined_call_operand.vmem [shape: f32[2,120], index: 0, kind: input, shape index: {}]
  %s1 = inlined_call_operand.vmem [shape: bf16[120,120], index: 1, kind: input, shape index: {}]
  %s2 = inlined_call_operand.vmem [shape: f32[1,120], index: 2, kind: input, shape index: {}]
  %s3 = inlined_call_operand.vmem [shape: f32[2,120], index: 3, kind: output, shape index: {}]
  %s4 = sld [smem:[#allocation0]]
  $region30: #{_lambda_.9} parent=0
    _
  %s6 = ssub.s32 1, %s4
  %s7 = scalar_select 0, %s6, %s4
  // Predicated region
  $region2: #{_lambda_.9} parent=0 // pred_check
    _
  $region3: #{_lambda_.9} parent=0 // pred_check_branch
    %9 = sbr.rel (0) target = $region5
  $region4: #{_lambda_.9} parent=0 // pred_region
    _
  $region5: #{_lambda_.9} parent=0 // pred_fallthru
    _
  // Predicated region
  $region6: #{_lambda_.9} parent=0 // pred_check
    _
  $region7: #{_lambda_.9} parent=0 // pred_check_branch
    %11 = sbr.rel (0) target = $region9
  $region8: #{_lambda_.9} parent=0 // pred_region
    _
  $region9: #{_lambda_.9} parent=0 // pred_fallthru
    _
  // Predicated region
  $region10: #{_lambda_.9} parent=0 // pred_check
    _
  $region11: #{_lambda_.9} parent=0 // pred_check_branch
    %13 = sbr.rel (0) target = $region13
  $region12: #{_lambda_.9} parent=0 // pred_region
    _
  $region13: #{_lambda_.9} parent=0 // pred_fallthru
    _
  %p15 = scmp.eq.s32.totalorder 0, 0
  // Predicated region
  $region14: #{_lambda_.9} parent=0 // pred_check
    %p16 = pneg %p15
  $region15: #{_lambda_.9} parent=0 // pred_check_branch
    %18 = sbr.rel (%p16) target = $region17
  $region16: #{_lambda_.9} parent=0 // pred_region
    %vm19 = vcmask 975872
    %20 = vst.msk [vmem:[#allocation2] sm:$0x3] %vm19, 0.0
  $region17: #{_lambda_.9} parent=0 // pred_fallthru
    _
  %v21 = vld [vmem:[#allocation2] sm:$0x3]
  %v22 = vld [vmem:[%s0] sm:$0x3]
  %v23 = vpack.c.bf16 %v22, %v22
  %v24 = vld [vmem:[%s1] sm:$0xf]
  %v25 = vld [vmem:[%s1 + $0x4] sm:$0xf]
  %v26 = vld [vmem:[%s1 + $0x8] sm:$0xf]
  %v27 = vld [vmem:[%s1 + $0xc] sm:$0xf]
  %v28 = vld [vmem:[%s1 + $0x10] sm:$0xf]
  %v29 = vld [vmem:[%s1 + $0x14] sm:$0xf]
  %v30 = vld [vmem:[%s1 + $0x18] sm:$0xf]
  %v31 = vld [vmem:[%s1 + $0x1c] sm:$0xf]
  %v32 = vld [vmem:[%s1 + $0x20] sm:$0xf]
  %v33 = vld [vmem:[%s1 + $0x24] sm:$0xf]
  %v34 = vld [vmem:[%s1 + $0x28] sm:$0xf]
  %v35 = vld [vmem:[%s1 + $0x2c] sm:$0xf]
  %v36 = vld [vmem:[%s1 + $0x30] sm:$0xf]
  %v37 = vld [vmem:[%s1 + $0x34] sm:$0xf]
  %v38 = vld [vmem:[%s1 + $0x38] sm:$0xf]
  %v54 = vunpack.c.l.b16 %v24
  %v55 = vunpack.c.l.b16 %v25
  %v56 = vunpack.c.l.b16 %v26
  %v57 = vunpack.c.l.b16 %v27
  %v58 = vunpack.c.l.b16 %v28
  %v59 = vunpack.c.l.b16 %v29
  %v60 = vunpack.c.l.b16 %v30
  %v61 = vunpack.c.l.b16 %v31
  %v62 = vunpack.c.l.b16 %v32
  %v63 = vunpack.c.l.b16 %v33
  %v64 = vunpack.c.l.b16 %v34
  %v65 = vunpack.c.l.b16 %v35
  %v66 = vunpack.c.l.b16 %v36
  %v67 = vunpack.c.l.b16 %v37
  %v68 = vunpack.c.l.b16 %v38
  %v69 = vpack.c.b16 %v55, %v54
  %v70 = vpack.c.b16 %v57, %v56
  %v71 = vpack.c.b16 %v59, %v58
  %v72 = vpack.c.b16 %v61, %v60
  %v73 = vpack.c.b16 %v63, %v62
  %v74 = vpack.c.b16 %v65, %v64
  %v75 = vpack.c.b16 %v67, %v66
  %v76 = vpack.c.b16 %v68, %v68
  %vm84 = vcmask 982016
  %v86 = vsel %vm84, %v23, 0
  %vm88 = vcmask 1043456
  %v90 = vsel %vm88, %v76, 0
  %92 = vmatprep.subr.bf16.mxu0 0
  %93 = vmatpush1.bf16.msra.mxu0 %v69
  %94 = vmatprep.subr.bf16.mxu0 0
  %95 = vmatpush1.bf16.msra.mxu0 %v70
  %96 = vmatprep.subr.bf16.mxu0 0
  %97 = vmatpush1.bf16.msra.mxu0 %v71
  %98 = vmatprep.subr.bf16.mxu0 0
  %99 = vmatpush1.bf16.msra.mxu0 %v72
  %100 = vmatprep.subr.bf16.mxu0 0
  %101 = vmatpush1.bf16.msra.mxu0 %v73
  %102 = vmatprep.subr.bf16.mxu0 0
  %103 = vmatpush1.bf16.msra.mxu0 %v74
  %104 = vmatprep.subr.bf16.mxu0 0
  %105 = vmatpush1.bf16.msra.mxu0 %v75
  %106 = vmatprep.subr.bf16.mxu0 0
  %107 = vmatpush1.bf16.msra.mxu0 %v90
  %108 = vmatprep.subr.bf16.mxu0 0
  %109 = vmatpush1.bf16.msra.mxu0 0
  %110 = vmatprep.subr.bf16.mxu0 0
  %111 = vmatpush1.bf16.msra.mxu0 0
  %112 = vmatprep.subr.bf16.mxu0 0
  %113 = vmatpush1.bf16.msra.mxu0 0
  %114 = vmatprep.subr.bf16.mxu0 0
  %115 = vmatpush1.bf16.msra.mxu0 0
  %116 = vmatprep.subr.bf16.mxu0 0
  %117 = vmatpush1.bf16.msra.mxu0 0
  %118 = vmatprep.subr.bf16.mxu0 0
  %119 = vmatpush1.bf16.msra.mxu0 0
  %120 = vmatprep.subr.bf16.mxu0 0
  %121 = vmatpush1.bf16.msra.mxu0 0
  %122 = vmatprep.subr.bf16.mxu0 0
  %123 = vmatpush1.bf16.msra.mxu0 0
  %124 = vmatprep.mubr.bf16.mxu0 0
  %125 = vmatmul.mubr.bf16.gmra.mrb[0].mxu0 %v86
  %v126 = vpop.f32.mrb[0].mxu0
  %v127 = vadd.f32 0.0, %v126
  %v128 = vpop.f32.mrb[0].mxu0
  %v129 = vpop.f32.mrb[0].mxu0
  %v130 = vpop.f32.mrb[0].mxu0
  %131 = vdwg.mxu0
  %v132 = vadd.f32 %v21, %v127
  %vm133 = vcmask 975872
  %134 = vst.msk [vmem:[#allocation2] sm:$0x3] %vm133, %v132
  // Predicated region
  $region18: #{_lambda_.9} parent=0 // pred_check
    %p135 = pneg %p15
  $region19: #{_lambda_.9} parent=0 // pred_check_branch
    %137 = sbr.rel (%p135) target = $region21
  $region20: #{_lambda_.9} parent=0 // pred_region
    %v138 = vld [vmem:[#allocation2] sm:$0x3]
    %v139 = vld [vmem:[%s2] sm:$0x1]
    %v141 = vlaneseq
    %v142 = vshrl.u32 %v141, 7
    %v143 = vsub.s32 0, %v142
    %v144 = vrot.slane %v139, %v143
    %v146 = vadd.f32 %v138, %v144
    %vm147 = vcmp.ge.f32.partialorder %v146, 0.0
    %v148 = vmul.f32 %v146, 0.01
    %v149 = vsel %vm147, %v146, %v148
    %150 = vst.msk [vmem:[%s3] sm:$0x3] %vm133, %v149
  $region21: #{_lambda_.9} parent=0 // pred_fallthru
    _
  // Predicated region
  $region22: #{_lambda_.9} parent=0 // pred_check
    _
  $region23: #{_lambda_.9} parent=0 // pred_check_branch
    %152 = sbr.rel (0) target = $region25
  $region24: #{_lambda_.9} parent=0 // pred_region
    _
  $region25: #{_lambda_.9} parent=0 // pred_fallthru
    _
  // Predicated region
  $region26: #{_lambda_.9} parent=0 // pred_check
    _
  $region27: #{_lambda_.9} parent=0 // pred_check_branch
    %154 = sbr.rel (0) target = $region29
  $region28: #{_lambda_.9} parent=0 // pred_region
    _
  $region29: #{_lambda_.9} parent=0 // pred_fallthru
    _

// kernel: _lambda_.8
$region0: #{_lambda_.8}
  #allocation0 [shape = 'u32[]', space=smem, size = 0x4, offset = 0x4, fixed_abs, tag = 'smem constant byte address 0x4 - core index']
  #allocation1 [shape = 'u32[144,128]{1,0:T(1,128)}', space=vmem, size = 0x12000, scoped, tag = 'internal scratch']
  %s0 = inlined_call_operand.vmem [shape: f32[2,16,16], index: 0, kind: input, shape index: {}]
  %s1 = inlined_call_operand.vmem [shape: bf16[16,16], index: 1, kind: input, shape index: {}]
  %s2 = inlined_call_operand.vmem [shape: f32[1,16], index: 2, kind: input, shape index: {}]
  %s3 = inlined_call_operand.vmem [shape: bf16[16,4], index: 3, kind: input, shape index: {}]
  %s4 = inlined_call_operand.vmem [shape: f32[1,4], index: 4, kind: input, shape index: {}]
  %s5 = inlined_call_operand.vmem [shape: bf16[20,10], index: 5, kind: input, shape index: {}]
  %s6 = inlined_call_operand.vmem [shape: f32[1,10], index: 6, kind: input, shape index: {}]
  %s7 = inlined_call_operand.vmem [shape: f32[1,10], index: 7, kind: input, shape index: {}]
  %s8 = inlined_call_operand.vmem [shape: f32[2,12,10], index: 8, kind: output, shape index: {}]
  %s9 = sld [smem:[#allocation0]]
  $region65: #{_lambda_.8} parent=0
    _
  %s11 = ssub.s32 1, %s9
  %s12 = scalar_select 0, %s11, %s9
  loop: start=0, step=1, limit=4
  $region2: #{_lambda_.8} parent=0 // loop_pre_header
    _
  $region3: #{_lambda_.8} parent=0 // loop_header
    %s14 = sphi 0, %s18
    %p15 = scmp.ge.s32.totalorder %s14, 4
    %s24 = sphi 0, %s26
    %s27 = sphi 0, %s24
    %s28 = sphi 0, %s27
    %s44 = sphi 0, %s28
    %s48 = sphi 0, %s48
    %s50 = sphi 0, %s48
    %s51 = sphi 0, %s50
    %s65 = sphi 0, %s51
    %s69 = sphi 0, %s69
    %s71 = sphi 0, %s69
    %s72 = sphi 0, %s71
    %s86 = sphi 0, %s72
    %s90 = sphi 0, %s90
    %s92 = sphi 0, %s90
    %s93 = sphi 0, %s92
    %s107 = sphi 0, %s93
    %s111 = sphi 0, %s111
    %s113 = sphi 0, %s111
    %s114 = sphi 0, %s113
    %s128 = sphi 0, %s114
    %s132 = sphi 0, %s132
    %s134 = sphi 0, %s132
    %s135 = sphi 0, %s134
    %s149 = sphi 0, %s135
    %s153 = sphi 0, %s153
    %s155 = sphi 0, %s153
    %s156 = sphi 0, %s155
    %s170 = sphi 0, %s156
    %s174 = sphi 0, %s174
    %s176 = sphi 0, %s174
    %s177 = sphi 0, %s176
    %s191 = sphi 0, %s177
    %s197 = sphi 0, %s199
    %s200 = sphi 0, %s197
    %s201 = sphi 0, %s200
    %s217 = sphi 0, %s201
  $region4: #{_lambda_.8} parent=0 // loop_header_branch
    %17 = sbr.rel (%p15) target = $region8
  $region5: #{_lambda_.8} parent=0 // loop_body
    %s19 = ssub.s32 %s14, 1
    %s20 = ssub.s32 %s14, 2
    %s21 = sadd.s32 %s14, 1
    %s22 = ssub.s32 %s14, %s21
    %p23 = scmp.eq.s32.totalorder %s22, 0
    %s25 = sadd.s32 %s24, 1
    %s26 = scalar_select %p23, %s24, %s25
    %p29 = pneg %p23
    %p30 = scmp.eq.s32.totalorder %s14, 1
    %p31 = por %p29, %p30
    %p32 = scmp.ne.s32.totalorder %s24, %s27
    %p33 = scmp.eq.s32.totalorder %s14, 0
    %p34 = por %p32, %p33
    %p35 = scmp.ne.s32.totalorder %s24, %s27
    %p36 = scmp.eq.s32.totalorder %s19, 1
    %p37 = por %p35, %p36
    %p38 = scmp.ne.s32.totalorder %s27, %s28
    %p39 = scmp.eq.s32.totalorder %s19, 0
    %p40 = por %p38, %p39
    %p41 = scmp.ne.s32.totalorder %s27, %s28
    %p42 = scmp.eq.s32.totalorder %s20, 1
    %p43 = por %p41, %p42
    %p45 = scmp.ne.s32.totalorder %s28, %s44
    %p46 = scmp.eq.s32.totalorder %s20, 0
    %p47 = por %p45, %p46
    %s49 = sadd.s32 %s48, 1
    %p52 = scmp.eq.s32.totalorder %s14, 1
    %p53 = scmp.ne.s32.totalorder %s48, %s50
    %p54 = scmp.eq.s32.totalorder %s14, 0
    %p55 = por %p53, %p54
    %p56 = scmp.ne.s32.totalorder %s48, %s50
    %p57 = scmp.eq.s32.totalorder %s19, 1
    %p58 = por %p56, %p57
    %p59 = scmp.ne.s32.totalorder %s50, %s51
    %p60 = scmp.eq.s32.totalorder %s19, 0
    %p61 = por %p59, %p60
    %p62 = scmp.ne.s32.totalorder %s50, %s51
    %p63 = scmp.eq.s32.totalorder %s20, 1
    %p64 = por %p62, %p63
    %p66 = scmp.ne.s32.totalorder %s51, %s65
    %p67 = scmp.eq.s32.totalorder %s20, 0
    %p68 = por %p66, %p67
    %s70 = sadd.s32 %s69, 1
    %p73 = scmp.eq.s32.totalorder %s14, 1
    %p74 = scmp.ne.s32.totalorder %s69, %s71
    %p75 = scmp.eq.s32.totalorder %s14, 0
    %p76 = por %p74, %p75
    %p77 = scmp.ne.s32.totalorder %s69, %s71
    %p78 = scmp.eq.s32.totalorder %s19, 1
    %p79 = por %p77, %p78
    %p80 = scmp.ne.s32.totalorder %s71, %s72
    %p81 = scmp.eq.s32.totalorder %s19, 0
    %p82 = por %p80, %p81
    %p83 = scmp.ne.s32.totalorder %s71, %s72
    %p84 = scmp.eq.s32.totalorder %s20, 1
    %p85 = por %p83, %p84
    %p87 = scmp.ne.s32.totalorder %s72, %s86
    %p88 = scmp.eq.s32.totalorder %s20, 0
    %p89 = por %p87, %p88
    %s91 = sadd.s32 %s90, 1
    %p94 = scmp.eq.s32.totalorder %s14, 1
    %p95 = scmp.ne.s32.totalorder %s90, %s92
    %p96 = scmp.eq.s32.totalorder %s14, 0
    %p97 = por %p95, %p96
    %p98 = scmp.ne.s32.totalorder %s90, %s92
    %p99 = scmp.eq.s32.totalorder %s19, 1
    %p100 = por %p98, %p99
    %p101 = scmp.ne.s32.totalorder %s92, %s93
    %p102 = scmp.eq.s32.totalorder %s19, 0
    %p103 = por %p101, %p102
    %p104 = scmp.ne.s32.totalorder %s92, %s93
    %p105 = scmp.eq.s32.totalorder %s20, 1
    %p106 = por %p104, %p105
    %p108 = scmp.ne.s32.totalorder %s93, %s107
    %p109 = scmp.eq.s32.totalorder %s20, 0
    %p110 = por %p108, %p109
    %s112 = sadd.s32 %s111, 1
    %p115 = scmp.eq.s32.totalorder %s14, 1
    %p116 = scmp.ne.s32.totalorder %s111, %s113
    %p117 = scmp.eq.s32.totalorder %s14, 0
    %p118 = por %p116, %p117
    %p119 = scmp.ne.s32.totalorder %s111, %s113
    %p120 = scmp.eq.s32.totalorder %s19, 1
    %p121 = por %p119, %p120
    %p122 = scmp.ne.s32.totalorder %s113, %s114
    %p123 = scmp.eq.s32.totalorder %s19, 0
    %p124 = por %p122, %p123
    %p125 = scmp.ne.s32.totalorder %s113, %s114
    %p126 = scmp.eq.s32.totalorder %s20, 1
    %p127 = por %p125, %p126
    %p129 = scmp.ne.s32.totalorder %s114, %s128
    %p130 = scmp.eq.s32.totalorder %s20, 0
    %p131 = por %p129, %p130
    %s133 = sadd.s32 %s132, 1
    %p136 = scmp.eq.s32.totalorder %s14, 1
    %p137 = scmp.ne.s32.totalorder %s132, %s134
    %p138 = scmp.eq.s32.totalorder %s14, 0
    %p139 = por %p137, %p138
    %p140 = scmp.ne.s32.totalorder %s132, %s134
    %p141 = scmp.eq.s32.totalorder %s19, 1
    %p142 = por %p140, %p141
    %p143 = scmp.ne.s32.totalorder %s134, %s135
    %p144 = scmp.eq.s32.totalorder %s19, 0
    %p145 = por %p143, %p144
    %p146 = scmp.ne.s32.totalorder %s134, %s135
    %p147 = scmp.eq.s32.totalorder %s20, 1
    %p148 = por %p146, %p147
    %p150 = scmp.ne.s32.totalorder %s135, %s149
    %p151 = scmp.eq.s32.totalorder %s20, 0
    %p152 = por %p150, %p151
    %s154 = sadd.s32 %s153, 1
    %p157 = scmp.eq.s32.totalorder %s14, 1
    %p158 = scmp.ne.s32.totalorder %s153, %s155
    %p159 = scmp.eq.s32.totalorder %s14, 0
    %p160 = por %p158, %p159
    %p161 = scmp.ne.s32.totalorder %s153, %s155
    %p162 = scmp.eq.s32.totalorder %s19, 1
    %p163 = por %p161, %p162
    %p164 = scmp.ne.s32.totalorder %s155, %s156
    %p165 = scmp.eq.s32.totalorder %s19, 0
    %p166 = por %p164, %p165
    %p167 = scmp.ne.s32.totalorder %s155, %s156
    %p168 = scmp.eq.s32.totalorder %s20, 1
    %p169 = por %p167, %p168
    %p171 = scmp.ne.s32.totalorder %s156, %s170
    %p172 = scmp.eq.s32.totalorder %s20, 0
    %p173 = por %p171, %p172
    %s175 = sadd.s32 %s174, 1
    %p178 = scmp.eq.s32.totalorder %s14, 1
    %p179 = scmp.ne.s32.totalorder %s174, %s176
    %p180 = scmp.eq.s32.totalorder %s14, 0
    %p181 = por %p179, %p180
    %p182 = scmp.ne.s32.totalorder %s174, %s176
    %p183 = scmp.eq.s32.totalorder %s19, 1
    %p184 = por %p182, %p183
    %p185 = scmp.ne.s32.totalorder %s176, %s177
    %p186 = scmp.eq.s32.totalorder %s19, 0
    %p187 = por %p185, %p186
    %p188 = scmp.ne.s32.totalorder %s176, %s177
    %p189 = scmp.eq.s32.totalorder %s20, 1
    %p190 = por %p188, %p189
    %p192 = scmp.ne.s32.totalorder %s177, %s191
    %p193 = scmp.eq.s32.totalorder %s20, 0
    %p194 = por %p192, %p193
    %s195 = ssub.s32 %s14, %s21
    %p196 = scmp.eq.s32.totalorder %s195, 0
    %s198 = sadd.s32 %s197, 1
    %s199 = scalar_select %p196, %s197, %s198
    %p202 = pneg %p196
    %p203 = scmp.eq.s32.totalorder %s14, 1
    %p204 = por %p202, %p203
    %p205 = scmp.ne.s32.totalorder %s197, %s200
    %p206 = scmp.eq.s32.totalorder %s14, 0
    %p207 = por %p205, %p206
    %p208 = scmp.ne.s32.totalorder %s197, %s200
    %p209 = scmp.eq.s32.totalorder %s19, 1
    %p210 = por %p208, %p209
    %p211 = scmp.ne.s32.totalorder %s200, %s201
    %p212 = scmp.eq.s32.totalorder %s19, 0
    %p213 = por %p211, %p212
    %p214 = scmp.ne.s32.totalorder %s200, %s201
    %p215 = scmp.eq.s32.totalorder %s20, 1
    %p216 = por %p214, %p215
    %p218 = scmp.ne.s32.totalorder %s201, %s217
    %p219 = scmp.eq.s32.totalorder %s20, 0
    %p220 = por %p218, %p219
    %p221 = scmp.le.s32.totalorder 1, %s14
    %p222 = scmp.lt.s32.totalorder %s14, 3
    %p223 = pnand %p221, %p222
    %p224 = pneg %p223
    // Predicated region
    $region9: #{_lambda_.8} parent=5 // pred_check
      _
    $region10: #{_lambda_.8} parent=5 // pred_check_branch
      %226 = sbr.rel (%p223) target = $region12
    $region11: #{_lambda_.8} parent=5 // pred_region
      %s227 = ssub.s32 %s14, 1
      // Predicated region
      $region13: #{_lambda_.8} parent=11 // pred_check
        %p228 = pneg %p61
      $region14: #{_lambda_.8} parent=11 // pred_check_branch
        %230 = sbr.rel (%p228) target = $region16
      $region15: #{_lambda_.8} parent=11 // pred_region
        _
      $region16: #{_lambda_.8} parent=11 // pred_fallthru
        _
      // Predicated region
      $region17: #{_lambda_.8} parent=11 // pred_check
        %p231 = pneg %p82
      $region18: #{_lambda_.8} parent=11 // pred_check_branch
        %233 = sbr.rel (%p231) target = $region20
      $region19: #{_lambda_.8} parent=11 // pred_region
        _
      $region20: #{_lambda_.8} parent=11 // pred_fallthru
        _
      // Predicated region
      $region21: #{_lambda_.8} parent=11 // pred_check
        %p234 = pneg %p103
      $region22: #{_lambda_.8} parent=11 // pred_check_branch
        %236 = sbr.rel (%p234) target = $region24
      $region23: #{_lambda_.8} parent=11 // pred_region
        _
      $region24: #{_lambda_.8} parent=11 // pred_fallthru
        _
      // Predicated region
      $region25: #{_lambda_.8} parent=11 // pred_check
        %p237 = pneg %p124
      $region26: #{_lambda_.8} parent=11 // pred_check_branch
        %239 = sbr.rel (%p237) target = $region28
      $region27: #{_lambda_.8} parent=11 // pred_region
        _
      $region28: #{_lambda_.8} parent=11 // pred_fallthru
        _
      // Predicated region
      $region29: #{_lambda_.8} parent=11 // pred_check
        %p240 = pneg %p145
      $region30: #{_lambda_.8} parent=11 // pred_check_branch
        %242 = sbr.rel (%p240) target = $region32
      $region31: #{_lambda_.8} parent=11 // pred_region
        _
      $region32: #{_lambda_.8} parent=11 // pred_fallthru
        _
      // Predicated region
      $region33: #{_lambda_.8} parent=11 // pred_check
        %p243 = pneg %p166
      $region34: #{_lambda_.8} parent=11 // pred_check_branch
        %245 = sbr.rel (%p243) target = $region36
      $region35: #{_lambda_.8} parent=11 // pred_region
        _
      $region36: #{_lambda_.8} parent=11 // pred_fallthru
        _
      // Predicated region
      $region37: #{_lambda_.8} parent=11 // pred_check
        %p246 = pneg %p187
      $region38: #{_lambda_.8} parent=11 // pred_check_branch
        %248 = sbr.rel (%p246) target = $region40
      $region39: #{_lambda_.8} parent=11 // pred_region
        _
      $region40: #{_lambda_.8} parent=11 // pred_fallthru
        _
    $region12: #{_lambda_.8} parent=5 // pred_fallthru
      _
    %p249 = scmp.lt.s32.totalorder %s14, 2
    // Predicated region
    $region41: #{_lambda_.8} parent=5 // pred_check
      %p250 = pneg %p249
    $region42: #{_lambda_.8} parent=5 // pred_check_branch
      %252 = sbr.rel (%p250) target = $region44
    $region43: #{_lambda_.8} parent=5 // pred_region
      // Predicated region
      $region45: #{_lambda_.8} parent=43 // pred_check
        %p253 = pneg %p34
      $region46: #{_lambda_.8} parent=43 // pred_check_branch
        %255 = sbr.rel (%p253) target = $region48
      $region47: #{_lambda_.8} parent=43 // pred_region
        %p256 = scmp.lt.s32.totalorder %s14, 1
        %s257 = scalar_select %p256, %s14, 1
        %s258 = smul.addr %s257, 2
        %s259 = smul.addr %s258, 8
        %s260 = scalar_lea.vmem %s0, %s259
      $region48: #{_lambda_.8} parent=43 // pred_fallthru
        _
    $region44: #{_lambda_.8} parent=5 // pred_fallthru
      _
    %p261 = scmp.le.s32.totalorder 1, %s14
    %p262 = scmp.lt.s32.totalorder %s14, 3
    %p263 = pnand %p261, %p262
    %p264 = pneg %p263
    // Predicated region
    $region49: #{_lambda_.8} parent=5 // pred_check
      _
    $region50: #{_lambda_.8} parent=5 // pred_check_branch
      %266 = sbr.rel (%p263) target = $region52
    $region51: #{_lambda_.8} parent=5 // pred_region
      %s267 = ssub.s32 %s14, 1
      %p268 = scmp.lt.s32.totalorder %s19, 1
      %s269 = scalar_select %p268, %s19, 1
      %s270 = smul.addr %s269, 2
      %s271 = smul.addr %s270, 8
      %s272 = scalar_lea.vmem %s0, %s271
      %p273 = pneg %p40
      %p274 = pneg %p37
      %p275 = pneg %p61
      %p276 = pneg %p58
      %p277 = pneg %p82
      %p278 = pneg %p79
      %p279 = pneg %p103
      %p280 = pneg %p100
      %p281 = pneg %p124
      %p282 = pneg %p121
      %p283 = pneg %p145
      %p284 = pneg %p142
      %p285 = pneg %p166
      %p286 = pneg %p163
      %p287 = pneg %p187
      %p288 = pneg %p184
      %p289 = pneg %p213
      %p290 = pneg %p210
      %p291 = scmp.lt.s32.totalorder %s19, 1
      %s292 = scalar_select %p291, %s19, 1
      %s293 = smul.addr %s292, 2
      %s294 = smul.addr %s293, 8
      %s295 = scalar_lea.vmem %s8, %s294
      %p296 = scmp.lt.s32.totalorder %s19, 1
      %s297 = scalar_select %p296, %s19, 1
      %s298 = smul.addr %s297, 2
      %s299 = smul.addr %s298, 8
      %s300 = scalar_lea.vmem %s0, %s299
      %p301 = scmp.lt.s32.totalorder %s19, 1
      %s302 = scalar_select %p301, %s19, 1
      %s303 = smul.addr %s302, 2
      %s304 = smul.addr %s303, 8
      %s305 = scalar_lea.vmem %s8, %s304
      %v307 = vld [vmem:[%s300] sm:$0xff]
      %v308 = vld [vmem:[%s300 + $0x8] sm:$0xff]
      %v309 = vpack.c.bf16 %v308, %v307
      %v310 = vld [vmem:[%s1] sm:$0xf]
      %v311 = vld [vmem:[%s1 + $0x4] sm:$0xf]
      %v312 = vld [vmem:[%s2] sm:$0x1]
      %v314 = vlaneseq
      %v315 = vshrl.u32 %v314, 7
      %v316 = vsub.s32 0, %v315
      %v317 = vrot.slane %v312, %v316
      %v321 = vunpack.c.l.b16 %v310
      %v322 = vunpack.c.l.b16 %v311
      %v323 = vpack.c.b16 %v322, %v321
      %vm325 = vcmask 130048
      %v327 = vsel %vm325, %v309, 0
      %329 = vmatprep.subr.bf16.mxu0 0
      %330 = vmatpush1.bf16.msra.mxu0 %v323
      %331 = vmatprep.subr.bf16.mxu0 0
      %332 = vmatpush1.bf16.msra.mxu0 0
      %333 = vmatprep.subr.bf16.mxu0 0
      %334 = vmatpush1.bf16.msra.mxu0 0
      %335 = vmatprep.subr.bf16.mxu0 0
      %336 = vmatpush1.bf16.msra.mxu0 0
      %337 = vmatprep.subr.bf16.mxu0 0
      %338 = vmatpush1.bf16.msra.mxu0 0
      %339 = vmatprep.subr.bf16.mxu0 0
      %340 = vmatpush1.bf16.msra.mxu0 0
      %341 = vmatprep.subr.bf16.mxu0 0
      %342 = vmatpush1.bf16.msra.mxu0 0
      %343 = vmatprep.subr.bf16.mxu0 0
      %344 = vmatpush1.bf16.msra.mxu0 0
      %345 = vmatprep.subr.bf16.mxu0 0
      %346 = vmatpush1.bf16.msra.mxu0 0
      %347 = vmatprep.subr.bf16.mxu0 0
      %348 = vmatpush1.bf16.msra.mxu0 0
      %349 = vmatprep.subr.bf16.mxu0 0
      %350 = vmatpush1.bf16.msra.mxu0 0
      %351 = vmatprep.subr.bf16.mxu0 0
      %352 = vmatpush1.bf16.msra.mxu0 0
      %353 = vmatprep.subr.bf16.mxu0 0
      %354 = vmatpush1.bf16.msra.mxu0 0
      %355 = vmatprep.subr.bf16.mxu0 0
      %356 = vmatpush1.bf16.msra.mxu0 0
      %357 = vmatprep.subr.bf16.mxu0 0
      %358 = vmatpush1.bf16.msra.mxu0 0
      %359 = vmatprep.subr.bf16.mxu0 0
      %360 = vmatpush1.bf16.msra.mxu0 0
      %361 = vmatprep.mubr.bf16.mxu0 0
      %362 = vmatmul.mubr.bf16.gmra.mrb[0].mxu0 %v327
      %v363 = vpop.f32.mrb[0].mxu0
      %v364 = vadd.f32 %v317, %v363
      %v365 = vpop.f32.mrb[0].mxu0
      %v366 = vpop.f32.mrb[0].mxu0
      %v367 = vadd.f32 %v317, %v366
      %v368 = vpop.f32.mrb[0].mxu0
      %369 = vdwg.mxu0
      %vm370 = vcmp.ge.f32.partialorder %v364, 0.0
      %vm371 = vcmp.ge.f32.partialorder %v367, 0.0
      %v372 = vmul.f32 %v364, 0.01
      %v373 = vmul.f32 %v367, 0.01
      %v374 = vsel %vm370, %v364, %v372
      %v375 = vsel %vm371, %v367, %v373
      %v376 = vpack.c.bf16 %v375, %v374
      %v377 = vld [vmem:[%s3] sm:$0xf]
      %v378 = vld [vmem:[%s3 + $0x4] sm:$0xf]
      %v379 = vld [vmem:[%s4] sm:$0x1]
      %v381 = vlaneseq
      %v382 = vshrl.u32 %v381, 7
      %v383 = vsub.s32 0, %v382
      %v384 = vrot.slane %v379, %v383
      %v388 = vunpack.c.l.b16 %v377
      %v389 = vunpack.c.l.b16 %v378
      %v390 = vpack.c.b16 %v389, %v388
      %v393 = vsel %vm325, %v376, 0
      %395 = vmatprep.subr.bf16.mxu0 0
      %396 = vmatpush1.bf16.msra.mxu0 %v390
      %397 = vmatprep.subr.bf16.mxu0 0
      %398 = vmatpush1.bf16.msra.mxu0 0
      %399 = vmatprep.subr.bf16.mxu0 0
      %400 = vmatpush1.bf16.msra.mxu0 0
      %401 = vmatprep.subr.bf16.mxu0 0
      %402 = vmatpush1.bf16.msra.mxu0 0
      %403 = vmatprep.subr.bf16.mxu0 0
      %404 = vmatpush1.bf16.msra.mxu0 0
      %405 = vmatprep.subr.bf16.mxu0 0
      %406 = vmatpush1.bf16.msra.mxu0 0
      %407 = vmatprep.subr.bf16.mxu0 0
      %408 = vmatpush1.bf16.msra.mxu0 0
      %409 = vmatprep.subr.bf16.mxu0 0
      %410 = vmatpush1.bf16.msra.mxu0 0
      %411 = vmatprep.subr.bf16.mxu0 0
      %412 = vmatpush1.bf16.msra.mxu0 0
      %413 = vmatprep.subr.bf16.mxu0 0
      %414 = vmatpush1.bf16.msra.mxu0 0
      %415 = vmatprep.subr.bf16.mxu0 0
      %416 = vmatpush1.bf16.msra.mxu0 0
      %417 = vmatprep.subr.bf16.mxu0 0
      %418 = vmatpush1.bf16.msra.mxu0 0
      %419 = vmatprep.subr.bf16.mxu0 0
      %420 = vmatpush1.bf16.msra.mxu0 0
      %421 = vmatprep.subr.bf16.mxu0 0
      %422 = vmatpush1.bf16.msra.mxu0 0
      %423 = vmatprep.subr.bf16.mxu0 0
      %424 = vmatpush1.bf16.msra.mxu0 0
      %425 = vmatprep.subr.bf16.mxu0 0
      %426 = vmatpush1.bf16.msra.mxu0 0
      %427 = vmatprep.mubr.bf16.mxu0 0
      %428 = vmatmul.mubr.bf16.gmra.mrb[0].mxu0 %v393
      %v429 = vpop.f32.mrb[0].mxu0
      %v430 = vadd.f32 %v384, %v429
      %v431 = vpop.f32.mrb[0].mxu0
      %v432 = vpop.f32.mrb[0].mxu0
      %v433 = vadd.f32 %v384, %v432
      %v434 = vpop.f32.mrb[0].mxu0
      %435 = vdwg.mxu0
      %v436 = vpack.c.bf16 %v433, %v430
      %v438 = vshrl.u32 %v436, 16
      %v440 = vshll.u32 %v436, 16
      %v442 = vrot.slane %v440, 1
      %v443 = vor.u32 %v438, %v442
      %444 = vrot.lane.b32.xlu0 %v443, 4
      %v445 = vpop.permute.xlu0 %444
      %v447 = vrot.slane %v436, 1
      %448 = vrot.lane.b32.xlu0 %v447, 8
      %v449 = vpop.permute.xlu0 %448
      %v450 = vrot.slane %v438, 1
      %v451 = vrot.slane %v440, 2
      %v452 = vor.u32 %v450, %v451
      %453 = vrot.lane.b32.xlu0 %v452, 12
      %v454 = vpop.permute.xlu0 %453
      %v455 = vrot.slane %v436, 2
      %456 = vrot.lane.b32.xlu0 %v455, 16
      %v457 = vpop.permute.xlu0 %456
      %vm458 = vcmask 31744
      %v460 = vsel %vm458, %v436, %v445
      %vm461 = vcmask 64512
      %v463 = vsel %vm461, %v460, %v449
      %vm464 = vcmask 97280
      %v466 = vsel %vm464, %v463, %v454
      %v468 = vsel %vm325, %v466, %v457
      %v469 = vld [vmem:[%s5] sm:$0xf]
      %v470 = vld [vmem:[%s5 + $0x4] sm:$0xf]
      %v471 = vld [vmem:[%s5 + $0x8] sm:$0x3]
      %v475 = vunpack.c.l.b16 %v469
      %v476 = vunpack.c.l.b16 %v470
      %v477 = vunpack.c.l.b16 %v471
      %v478 = vpack.c.b16 %v476, %v475
      %v479 = vpack.c.b16 %v477, %v477
      %vm481 = vcmask 162816
      %v482 = vsel %vm481, %v468, 0
      %vm484 = vcmask 1041408
      %v486 = vsel %vm484, %v479, 0
      %488 = vmatprep.subr.bf16.mxu0 0
      %489 = vmatpush1.bf16.msra.mxu0 %v478
      %490 = vmatprep.subr.bf16.mxu0 0
      %491 = vmatpush1.bf16.msra.mxu0 %v486
      %492 = vmatprep.subr.bf16.mxu0 0
      %493 = vmatpush1.bf16.msra.mxu0 0
      %494 = vmatprep.subr.bf16.mxu0 0
      %495 = vmatpush1.bf16.msra.mxu0 0
      %496 = vmatprep.subr.bf16.mxu0 0
      %497 = vmatpush1.bf16.msra.mxu0 0
      %498 = vmatprep.subr.bf16.mxu0 0
      %499 = vmatpush1.bf16.msra.mxu0 0
      %500 = vmatprep.subr.bf16.mxu0 0
      %501 = vmatpush1.bf16.msra.mxu0 0
      %502 = vmatprep.subr.bf16.mxu0 0
      %503 = vmatpush1.bf16.msra.mxu0 0
      %504 = vmatprep.subr.bf16.mxu0 0
      %505 = vmatpush1.bf16.msra.mxu0 0
      %506 = vmatprep.subr.bf16.mxu0 0
      %507 = vmatpush1.bf16.msra.mxu0 0
      %508 = vmatprep.subr.bf16.mxu0 0
      %509 = vmatpush1.bf16.msra.mxu0 0
      %510 = vmatprep.subr.bf16.mxu0 0
      %511 = vmatpush1.bf16.msra.mxu0 0
      %512 = vmatprep.subr.bf16.mxu0 0
      %513 = vmatpush1.bf16.msra.mxu0 0
      %514 = vmatprep.subr.bf16.mxu0 0
      %515 = vmatpush1.bf16.msra.mxu0 0
      %516 = vmatprep.subr.bf16.mxu0 0
      %517 = vmatpush1.bf16.msra.mxu0 0
      %518 = vmatprep.subr.bf16.mxu0 0
      %519 = vmatpush1.bf16.msra.mxu0 0
      %520 = vmatprep.mubr.bf16.mxu0 0
      %521 = vmatmul.mubr.bf16.gmra.mrb[0].mxu0 %v482
      %v522 = vpop.f32.mrb[0].mxu0
      %v523 = vadd.f32 0.0, %v522
      %v524 = vpop.f32.mrb[0].mxu0
      %v525 = vpop.f32.mrb[0].mxu0
      %v526 = vadd.f32 0.0, %v525
      %v527 = vpop.f32.mrb[0].mxu0
      %528 = vdwg.mxu0
      %v529 = vld [vmem:[%s6] sm:$0x1]
      %v531 = vlaneseq
      %v532 = vshrl.u32 %v531, 7
      %v533 = vsub.s32 0, %v532
      %v534 = vrot.slane %v529, %v533
      %v536 = vmul.f32 %v523, %v534
      %v537 = vmul.f32 %v526, %v534
      %v538 = vld [vmem:[%s7] sm:$0x1]
      %v540 = vlaneseq
      %v541 = vshrl.u32 %v540, 7
      %v542 = vsub.s32 0, %v541
      %v543 = vrot.slane %v538, %v542
      %v545 = vadd.f32 %v536, %v543
      %v546 = vadd.f32 %v537, %v543
      %vm547 = vcmask 80896
      %548 = vst.msk [vmem:[%s305] sm:$0xff] %vm547, %v545
      %vm549 = vcmask 76800
      %550 = vst.msk [vmem:[%s305 + $0x8] sm:$0xf] %vm549, %v546
      %p551 = scmp.lt.s32.totalorder %s19, 1
      %s552 = scalar_select %p551, %s19, 1
      %s553 = smul.addr %s552, 2
      %s554 = smul.addr %s553, 8
      %s555 = scalar_lea.vmem %s8, %s554
      // Predicated region
      $region53: #{_lambda_.8} parent=51 // pred_check
        %p556 = pneg %p210
      $region54: #{_lambda_.8} parent=51 // pred_check_branch
        %558 = sbr.rel (%p556) target = $region56
      $region55: #{_lambda_.8} parent=51 // pred_region
        _
      $region56: #{_lambda_.8} parent=51 // pred_fallthru
        _
    $region52: #{_lambda_.8} parent=5 // pred_fallthru
      _
    %p559 = scmp.le.s32.totalorder 2, %s14
    // Predicated region
    $region57: #{_lambda_.8} parent=5 // pred_check
      %p560 = pneg %p559
    $region58: #{_lambda_.8} parent=5 // pred_check_branch
      %562 = sbr.rel (%p560) target = $region60
    $region59: #{_lambda_.8} parent=5 // pred_region
      %s563 = ssub.s32 %s14, 2
      // Predicated region
      $region61: #{_lambda_.8} parent=59 // pred_check
        %p564 = pneg %p216
      $region62: #{_lambda_.8} parent=59 // pred_check_branch
        %566 = sbr.rel (%p564) target = $region64
      $region63: #{_lambda_.8} parent=59 // pred_region
        %p567 = scmp.lt.s32.totalorder %s20, 1
        %s568 = scalar_select %p567, %s20, 1
        %s569 = smul.addr %s568, 2
        %s570 = smul.addr %s569, 8
        %s571 = scalar_lea.vmem %s8, %s570
      $region64: #{_lambda_.8} parent=59 // pred_fallthru
        _
    $region60: #{_lambda_.8} parent=5 // pred_fallthru
      _
  $region6: #{_lambda_.8} parent=0 // loop_footer
    %s18 = sadd.s32 1, %s14
  $region7: #{_lambda_.8} parent=0 // loop_footer_branch
    %13 = sbr.rel target = $region3
  $region8: #{_lambda_.8} parent=0 // loop_exit
    _

// kernel: _lambda_.7
$region0: #{_lambda_.7}
  #allocation0 [shape = 'u32[]', space=smem, size = 0x4, offset = 0x4, fixed_abs, tag = 'smem constant byte address 0x4 - core index']
  #allocation1 [shape = 'u32[144,128]{1,0:T(1,128)}', space=vmem, size = 0x12000, scoped, tag = 'internal scratch']
  #allocation2 [shape = 'f32[16,16]{1,0:T(8,128)}', space=vmem, size = 0x2000, scoped, tag = 'scratch operand']
  #allocation3 [shape = 'f32[16,128]{1,0:T(8,128)}', space=vmem, size = 0x2000, scoped, tag = 'scratch operand']
  %s0 = inlined_call_operand.vmem [shape: f32[2,16,16], index: 0, kind: input, shape index: {}]
  %s1 = inlined_call_operand.vmem [shape: bf16[2,16,384], index: 1, kind: input, shape index: {}]
  %s2 = inlined_call_operand.vmem [shape: f32[2,1,384], index: 2, kind: input, shape index: {}]
  %s3 = inlined_call_operand.vmem [shape: bf16[2,128,16], index: 3, kind: input, shape index: {}]
  %s4 = inlined_call_operand.vmem [shape: f32[2,1,16], index: 4, kind: input, shape index: {}]
  %s5 = inlined_call_operand.vmem [shape: f32[2,1,16], index: 5, kind: input, shape index: {}]
  %s6 = inlined_call_operand.vmem [shape: f32[2,1,16], index: 6, kind: input, shape index: {}]
  %s7 = inlined_call_operand.vmem [shape: bf16[2,16,32], index: 7, kind: input, shape index: {}]
  %s8 = inlined_call_operand.vmem [shape: f32[2,1,32], index: 8, kind: input, shape index: {}]
  %s9 = inlined_call_operand.vmem [shape: bf16[2,32,16], index: 9, kind: input, shape index: {}]
  %s10 = inlined_call_operand.vmem [shape: f32[2,1,16], index: 10, kind: input, shape index: {}]
  %s11 = inlined_call_operand.vmem [shape: f32[2,1,16], index: 11, kind: input, shape index: {}]
  %s12 = inlined_call_operand.vmem [shape: f32[2,1,16], index: 12, kind: input, shape index: {}]
  %s13 = inlined_call_operand.vmem [shape: f32[2,16,16], index: 13, kind: output, shape index: {}]
  %s14 = sld [smem:[#allocation0]]
  $region93: #{_lambda_.7} parent=0
    _
  %s16 = ssub.s32 1, %s14
  %s17 = scalar_select 0, %s16, %s14
  loop: start=0, step=1, limit=6
  $region2: #{_lambda_.7} parent=0 // loop_pre_header
    _
  $region3: #{_lambda_.7} parent=0 // loop_header
    %s19 = sphi 0, %s23
    %p20 = scmp.ge.s32.totalorder %s19, 6
    %s26 = sphi 0, %s38
    %s27 = sphi 0, %s34
    %s28 = sphi 0, %s26
    %s29 = sphi 0, %s27
    %s30 = sphi 0, %s28
    %s31 = sphi 0, %s29
    %s41 = sphi 0, %s43
    %s44 = sphi 0, %s41
    %s45 = sphi 0, %s44
    %s61 = sphi 0, %s45
    %s67 = sphi 0, %s69
    %s70 = sphi 0, %s67
    %s71 = sphi 0, %s70
    %s87 = sphi 0, %s71
    %s93 = sphi 0, %s95
    %s96 = sphi 0, %s93
    %s97 = sphi 0, %s96
    %s113 = sphi 0, %s97
    %s119 = sphi 0, %s121
    %s122 = sphi 0, %s119
    %s123 = sphi 0, %s122
    %s139 = sphi 0, %s123
    %s145 = sphi 0, %s147
    %s148 = sphi 0, %s145
    %s149 = sphi 0, %s148
    %s165 = sphi 0, %s149
    %s171 = sphi 0, %s173
    %s174 = sphi 0, %s171
    %s175 = sphi 0, %s174
    %s191 = sphi 0, %s175
    %s197 = sphi 0, %s199
    %s200 = sphi 0, %s197
    %s201 = sphi 0, %s200
    %s217 = sphi 0, %s201
    %s223 = sphi 0, %s225
    %s226 = sphi 0, %s223
    %s227 = sphi 0, %s226
    %s243 = sphi 0, %s227
    %s249 = sphi 0, %s251
    %s252 = sphi 0, %s249
    %s253 = sphi 0, %s252
    %s269 = sphi 0, %s253
    %s275 = sphi 0, %s277
    %s278 = sphi 0, %s275
    %s279 = sphi 0, %s278
    %s295 = sphi 0, %s279
    %s301 = sphi 0, %s303
    %s304 = sphi 0, %s301
    %s305 = sphi 0, %s304
    %s321 = sphi 0, %s305
    %s327 = sphi 0, %s329
    %s330 = sphi 0, %s327
    %s331 = sphi 0, %s330
    %s347 = sphi 0, %s331
    %s353 = sphi 0, %s355
    %s356 = sphi 0, %s353
    %s357 = sphi 0, %s356
    %s373 = sphi 0, %s357
    %s379 = sphi 0, %s381
    %s382 = sphi 0, %s379
    %s383 = sphi 0, %s382
    %s399 = sphi 0, %s383
  $region4: #{_lambda_.7} parent=0 // loop_header_branch
    %22 = sbr.rel (%p20) target = $region8
  $region5: #{_lambda_.7} parent=0 // loop_body
    %s24 = ssub.s32 %s19, 1
    %s25 = ssub.s32 %s19, 2
    %s32 = sadd.s32 1, %s27
    %p33 = scmp.ge.s32.totalorder %s32, 2
    %s34 = scalar_select %p33, 0, %s32
    %s35 = sadd.s32 1, %s26
    %s36 = scalar_select %p33, %s35, %s26
    %p37 = scmp.ge.s32.totalorder %s36, 2
    %s38 = scalar_select %p37, 0, %s36
    %s39 = ssub.s32 %s26, %s38
    %p40 = scmp.eq.s32.totalorder %s39, 0
    %s42 = sadd.s32 %s41, 1
    %s43 = scalar_select %p40, %s41, %s42
    %p46 = pneg %p40
    %p47 = scmp.eq.s32.totalorder %s19, 3
    %p48 = por %p46, %p47
    %p49 = scmp.ne.s32.totalorder %s41, %s44
    %p50 = scmp.eq.s32.totalorder %s19, 0
    %p51 = por %p49, %p50
    %p52 = scmp.ne.s32.totalorder %s41, %s44
    %p53 = scmp.eq.s32.totalorder %s24, 3
    %p54 = por %p52, %p53
    %p55 = scmp.ne.s32.totalorder %s44, %s45
    %p56 = scmp.eq.s32.totalorder %s24, 0
    %p57 = por %p55, %p56
    %p58 = scmp.ne.s32.totalorder %s44, %s45
    %p59 = scmp.eq.s32.totalorder %s25, 3
    %p60 = por %p58, %p59
    %p62 = scmp.ne.s32.totalorder %s45, %s61
    %p63 = scmp.eq.s32.totalorder %s25, 0
    %p64 = por %p62, %p63
    %s65 = ssub.s32 %s27, %s34
    %p66 = scmp.eq.s32.totalorder %s65, 0
    %s68 = sadd.s32 %s67, 1
    %s69 = scalar_select %p66, %s67, %s68
    %p72 = pneg %p66
    %p73 = scmp.eq.s32.totalorder %s19, 3
    %p74 = por %p72, %p73
    %p75 = scmp.ne.s32.totalorder %s67, %s70
    %p76 = scmp.eq.s32.totalorder %s19, 0
    %p77 = por %p75, %p76
    %p78 = scmp.ne.s32.totalorder %s67, %s70
    %p79 = scmp.eq.s32.totalorder %s24, 3
    %p80 = por %p78, %p79
    %p81 = scmp.ne.s32.totalorder %s70, %s71
    %p82 = scmp.eq.s32.totalorder %s24, 0
    %p83 = por %p81, %p82
    %p84 = scmp.ne.s32.totalorder %s70, %s71
    %p85 = scmp.eq.s32.totalorder %s25, 3
    %p86 = por %p84, %p85
    %p88 = scmp.ne.s32.totalorder %s71, %s87
    %p89 = scmp.eq.s32.totalorder %s25, 0
    %p90 = por %p88, %p89
    %s91 = ssub.s32 %s27, %s34
    %p92 = scmp.eq.s32.totalorder %s91, 0
    %s94 = sadd.s32 %s93, 1
    %s95 = scalar_select %p92, %s93, %s94
    %p98 = pneg %p92
    %p99 = scmp.eq.s32.totalorder %s19, 3
    %p100 = por %p98, %p99
    %p101 = scmp.ne.s32.totalorder %s93, %s96
    %p102 = scmp.eq.s32.totalorder %s19, 0
    %p103 = por %p101, %p102
    %p104 = scmp.ne.s32.totalorder %s93, %s96
    %p105 = scmp.eq.s32.totalorder %s24, 3
    %p106 = por %p104, %p105
    %p107 = scmp.ne.s32.totalorder %s96, %s97
    %p108 = scmp.eq.s32.totalorder %s24, 0
    %p109 = por %p107, %p108
    %p110 = scmp.ne.s32.totalorder %s96, %s97
    %p111 = scmp.eq.s32.totalorder %s25, 3
    %p112 = por %p110, %p111
    %p114 = scmp.ne.s32.totalorder %s97, %s113
    %p115 = scmp.eq.s32.totalorder %s25, 0
    %p116 = por %p114, %p115
    %s117 = ssub.s32 %s27, %s34
    %p118 = scmp.eq.s32.totalorder %s117, 0
    %s120 = sadd.s32 %s119, 1
    %s121 = scalar_select %p118, %s119, %s120
    %p124 = pneg %p118
    %p125 = scmp.eq.s32.totalorder %s19, 3
    %p126 = por %p124, %p125
    %p127 = scmp.ne.s32.totalorder %s119, %s122
    %p128 = scmp.eq.s32.totalorder %s19, 0
    %p129 = por %p127, %p128
    %p130 = scmp.ne.s32.totalorder %s119, %s122
    %p131 = scmp.eq.s32.totalorder %s24, 3
    %p132 = por %p130, %p131
    %p133 = scmp.ne.s32.totalorder %s122, %s123
    %p134 = scmp.eq.s32.totalorder %s24, 0
    %p135 = por %p133, %p134
    %p136 = scmp.ne.s32.totalorder %s122, %s123
    %p137 = scmp.eq.s32.totalorder %s25, 3
    %p138 = por %p136, %p137
    %p140 = scmp.ne.s32.totalorder %s123, %s139
    %p141 = scmp.eq.s32.totalorder %s25, 0
    %p142 = por %p140, %p141
    %s143 = ssub.s32 %s27, %s34
    %p144 = scmp.eq.s32.totalorder %s143, 0
    %s146 = sadd.s32 %s145, 1
    %s147 = scalar_select %p144, %s145, %s146
    %p150 = pneg %p144
    %p151 = scmp.eq.s32.totalorder %s19, 3
    %p152 = por %p150, %p151
    %p153 = scmp.ne.s32.totalorder %s145, %s148
    %p154 = scmp.eq.s32.totalorder %s19, 0
    %p155 = por %p153, %p154
    %p156 = scmp.ne.s32.totalorder %s145, %s148
    %p157 = scmp.eq.s32.totalorder %s24, 3
    %p158 = por %p156, %p157
    %p159 = scmp.ne.s32.totalorder %s148, %s149
    %p160 = scmp.eq.s32.totalorder %s24, 0
    %p161 = por %p159, %p160
    %p162 = scmp.ne.s32.totalorder %s148, %s149
    %p163 = scmp.eq.s32.totalorder %s25, 3
    %p164 = por %p162, %p163
    %p166 = scmp.ne.s32.totalorder %s149, %s165
    %p167 = scmp.eq.s32.totalorder %s25, 0
    %p168 = por %p166, %p167
    %s169 = ssub.s32 %s27, %s34
    %p170 = scmp.eq.s32.totalorder %s169, 0
    %s172 = sadd.s32 %s171, 1
    %s173 = scalar_select %p170, %s171, %s172
    %p176 = pneg %p170
    %p177 = scmp.eq.s32.totalorder %s19, 3
    %p178 = por %p176, %p177
    %p179 = scmp.ne.s32.totalorder %s171, %s174
    %p180 = scmp.eq.s32.totalorder %s19, 0
    %p181 = por %p179, %p180
    %p182 = scmp.ne.s32.totalorder %s171, %s174
    %p183 = scmp.eq.s32.totalorder %s24, 3
    %p184 = por %p182, %p183
    %p185 = scmp.ne.s32.totalorder %s174, %s175
    %p186 = scmp.eq.s32.totalorder %s24, 0
    %p187 = por %p185, %p186
    %p188 = scmp.ne.s32.totalorder %s174, %s175
    %p189 = scmp.eq.s32.totalorder %s25, 3
    %p190 = por %p188, %p189
    %p192 = scmp.ne.s32.totalorder %s175, %s191
    %p193 = scmp.eq.s32.totalorder %s25, 0
    %p194 = por %p192, %p193
    %s195 = ssub.s32 %s27, %s34
    %p196 = scmp.eq.s32.totalorder %s195, 0
    %s198 = sadd.s32 %s197, 1
    %s199 = scalar_select %p196, %s197, %s198
    %p202 = pneg %p196
    %p203 = scmp.eq.s32.totalorder %s19, 3
    %p204 = por %p202, %p203
    %p205 = scmp.ne.s32.totalorder %s197, %s200
    %p206 = scmp.eq.s32.totalorder %s19, 0
    %p207 = por %p205, %p206
    %p208 = scmp.ne.s32.totalorder %s197, %s200
    %p209 = scmp.eq.s32.totalorder %s24, 3
    %p210 = por %p208, %p209
    %p211 = scmp.ne.s32.totalorder %s200, %s201
    %p212 = scmp.eq.s32.totalorder %s24, 0
    %p213 = por %p211, %p212
    %p214 = scmp.ne.s32.totalorder %s200, %s201
    %p215 = scmp.eq.s32.totalorder %s25, 3
    %p216 = por %p214, %p215
    %p218 = scmp.ne.s32.totalorder %s201, %s217
    %p219 = scmp.eq.s32.totalorder %s25, 0
    %p220 = por %p218, %p219
    %s221 = ssub.s32 %s27, %s34
    %p222 = scmp.eq.s32.totalorder %s221, 0
    %s224 = sadd.s32 %s223, 1
    %s225 = scalar_select %p222, %s223, %s224
    %p228 = pneg %p222
    %p229 = scmp.eq.s32.totalorder %s19, 3
    %p230 = por %p228, %p229
    %p231 = scmp.ne.s32.totalorder %s223, %s226
    %p232 = scmp.eq.s32.totalorder %s19, 0
    %p233 = por %p231, %p232
    %p234 = scmp.ne.s32.totalorder %s223, %s226
    %p235 = scmp.eq.s32.totalorder %s24, 3
    %p236 = por %p234, %p235
    %p237 = scmp.ne.s32.totalorder %s226, %s227
    %p238 = scmp.eq.s32.totalorder %s24, 0
    %p239 = por %p237, %p238
    %p240 = scmp.ne.s32.totalorder %s226, %s227
    %p241 = scmp.eq.s32.totalorder %s25, 3
    %p242 = por %p240, %p241
    %p244 = scmp.ne.s32.totalorder %s227, %s243
    %p245 = scmp.eq.s32.totalorder %s25, 0
    %p246 = por %p244, %p245
    %s247 = ssub.s32 %s27, %s34
    %p248 = scmp.eq.s32.totalorder %s247, 0
    %s250 = sadd.s32 %s249, 1
    %s251 = scalar_select %p248, %s249, %s250
    %p254 = pneg %p248
    %p255 = scmp.eq.s32.totalorder %s19, 3
    %p256 = por %p254, %p255
    %p257 = scmp.ne.s32.totalorder %s249, %s252
    %p258 = scmp.eq.s32.totalorder %s19, 0
    %p259 = por %p257, %p258
    %p260 = scmp.ne.s32.totalorder %s249, %s252
    %p261 = scmp.eq.s32.totalorder %s24, 3
    %p262 = por %p260, %p261
    %p263 = scmp.ne.s32.totalorder %s252, %s253
    %p264 = scmp.eq.s32.totalorder %s24, 0
    %p265 = por %p263, %p264
    %p266 = scmp.ne.s32.totalorder %s252, %s253
    %p267 = scmp.eq.s32.totalorder %s25, 3
    %p268 = por %p266, %p267
    %p270 = scmp.ne.s32.totalorder %s253, %s269
    %p271 = scmp.eq.s32.totalorder %s25, 0
    %p272 = por %p270, %p271
    %s273 = ssub.s32 %s27, %s34
    %p274 = scmp.eq.s32.totalorder %s273, 0
    %s276 = sadd.s32 %s275, 1
    %s277 = scalar_select %p274, %s275, %s276
    %p280 = pneg %p274
    %p281 = scmp.eq.s32.totalorder %s19, 3
    %p282 = por %p280, %p281
    %p283 = scmp.ne.s32.totalorder %s275, %s278
    %p284 = scmp.eq.s32.totalorder %s19, 0
    %p285 = por %p283, %p284
    %p286 = scmp.ne.s32.totalorder %s275, %s278
    %p287 = scmp.eq.s32.totalorder %s24, 3
    %p288 = por %p286, %p287
    %p289 = scmp.ne.s32.totalorder %s278, %s279
    %p290 = scmp.eq.s32.totalorder %s24, 0
    %p291 = por %p289, %p290
    %p292 = scmp.ne.s32.totalorder %s278, %s279
    %p293 = scmp.eq.s32.totalorder %s25, 3
    %p294 = por %p292, %p293
    %p296 = scmp.ne.s32.totalorder %s279, %s295
    %p297 = scmp.eq.s32.totalorder %s25, 0
    %p298 = por %p296, %p297
    %s299 = ssub.s32 %s27, %s34
    %p300 = scmp.eq.s32.totalorder %s299, 0
    %s302 = sadd.s32 %s301, 1
    %s303 = scalar_select %p300, %s301, %s302
    %p306 = pneg %p300
    %p307 = scmp.eq.s32.totalorder %s19, 3
    %p308 = por %p306, %p307
    %p309 = scmp.ne.s32.totalorder %s301, %s304
    %p310 = scmp.eq.s32.totalorder %s19, 0
    %p311 = por %p309, %p310
    %p312 = scmp.ne.s32.totalorder %s301, %s304
    %p313 = scmp.eq.s32.totalorder %s24, 3
    %p314 = por %p312, %p313
    %p315 = scmp.ne.s32.totalorder %s304, %s305
    %p316 = scmp.eq.s32.totalorder %s24, 0
    %p317 = por %p315, %p316
    %p318 = scmp.ne.s32.totalorder %s304, %s305
    %p319 = scmp.eq.s32.totalorder %s25, 3
    %p320 = por %p318, %p319
    %p322 = scmp.ne.s32.totalorder %s305, %s321
    %p323 = scmp.eq.s32.totalorder %s25, 0
    %p324 = por %p322, %p323
    %s325 = ssub.s32 %s27, %s34
    %p326 = scmp.eq.s32.totalorder %s325, 0
    %s328 = sadd.s32 %s327, 1
    %s329 = scalar_select %p326, %s327, %s328
    %p332 = pneg %p326
    %p333 = scmp.eq.s32.totalorder %s19, 3
    %p334 = por %p332, %p333
    %p335 = scmp.ne.s32.totalorder %s327, %s330
    %p336 = scmp.eq.s32.totalorder %s19, 0
    %p337 = por %p335, %p336
    %p338 = scmp.ne.s32.totalorder %s327, %s330
    %p339 = scmp.eq.s32.totalorder %s24, 3
    %p340 = por %p338, %p339
    %p341 = scmp.ne.s32.totalorder %s330, %s331
    %p342 = scmp.eq.s32.totalorder %s24, 0
    %p343 = por %p341, %p342
    %p344 = scmp.ne.s32.totalorder %s330, %s331
    %p345 = scmp.eq.s32.totalorder %s25, 3
    %p346 = por %p344, %p345
    %p348 = scmp.ne.s32.totalorder %s331, %s347
    %p349 = scmp.eq.s32.totalorder %s25, 0
    %p350 = por %p348, %p349
    %s351 = ssub.s32 %s27, %s34
    %p352 = scmp.eq.s32.totalorder %s351, 0
    %s354 = sadd.s32 %s353, 1
    %s355 = scalar_select %p352, %s353, %s354
    %p358 = pneg %p352
    %p359 = scmp.eq.s32.totalorder %s19, 3
    %p360 = por %p358, %p359
    %p361 = scmp.ne.s32.totalorder %s353, %s356
    %p362 = scmp.eq.s32.totalorder %s19, 0
    %p363 = por %p361, %p362
    %p364 = scmp.ne.s32.totalorder %s353, %s356
    %p365 = scmp.eq.s32.totalorder %s24, 3
    %p366 = por %p364, %p365
    %p367 = scmp.ne.s32.totalorder %s356, %s357
    %p368 = scmp.eq.s32.totalorder %s24, 0
    %p369 = por %p367, %p368
    %p370 = scmp.ne.s32.totalorder %s356, %s357
    %p371 = scmp.eq.s32.totalorder %s25, 3
    %p372 = por %p370, %p371
    %p374 = scmp.ne.s32.totalorder %s357, %s373
    %p375 = scmp.eq.s32.totalorder %s25, 0
    %p376 = por %p374, %p375
    %s377 = ssub.s32 %s26, %s38
    %p378 = scmp.eq.s32.totalorder %s377, 0
    %s380 = sadd.s32 %s379, 1
    %s381 = scalar_select %p378, %s379, %s380
    %p384 = pneg %p378
    %p385 = scmp.eq.s32.totalorder %s19, 3
    %p386 = por %p384, %p385
    %p387 = scmp.ne.s32.totalorder %s379, %s382
    %p388 = scmp.eq.s32.totalorder %s19, 0
    %p389 = por %p387, %p388
    %p390 = scmp.ne.s32.totalorder %s379, %s382
    %p391 = scmp.eq.s32.totalorder %s24, 3
    %p392 = por %p390, %p391
    %p393 = scmp.ne.s32.totalorder %s382, %s383
    %p394 = scmp.eq.s32.totalorder %s24, 0
    %p395 = por %p393, %p394
    %p396 = scmp.ne.s32.totalorder %s382, %s383
    %p397 = scmp.eq.s32.totalorder %s25, 3
    %p398 = por %p396, %p397
    %p400 = scmp.ne.s32.totalorder %s383, %s399
    %p401 = scmp.eq.s32.totalorder %s25, 0
    %p402 = por %p400, %p401
    %p403 = scmp.le.s32.totalorder 1, %s19
    %p404 = scmp.lt.s32.totalorder %s19, 5
    %p405 = pnand %p403, %p404
    %p406 = pneg %p405
    // Predicated region
    $region9: #{_lambda_.7} parent=5 // pred_check
      _
    $region10: #{_lambda_.7} parent=5 // pred_check_branch
      %408 = sbr.rel (%p405) target = $region12
    $region11: #{_lambda_.7} parent=5 // pred_region
      %s409 = ssub.s32 %s19, 1
    $region12: #{_lambda_.7} parent=5 // pred_fallthru
      _
    %p410 = scmp.lt.s32.totalorder %s19, 4
    // Predicated region
    $region13: #{_lambda_.7} parent=5 // pred_check
      %p411 = pneg %p410
    $region14: #{_lambda_.7} parent=5 // pred_check_branch
      %413 = sbr.rel (%p411) target = $region16
    $region15: #{_lambda_.7} parent=5 // pred_region
      // Predicated region
      $region17: #{_lambda_.7} parent=15 // pred_check
        %p414 = pneg %p51
      $region18: #{_lambda_.7} parent=15 // pred_check_branch
        %416 = sbr.rel (%p414) target = $region20
      $region19: #{_lambda_.7} parent=15 // pred_region
        %p417 = scmp.lt.s32.totalorder %s26, 1
        %s418 = scalar_select %p417, %s26, 1
        %s419 = smul.addr %s418, 2
        %s420 = smul.addr %s419, 8
        %s421 = scalar_lea.vmem %s0, %s420
      $region20: #{_lambda_.7} parent=15 // pred_fallthru
        _
      // Predicated region
      $region21: #{_lambda_.7} parent=15 // pred_check
        %p422 = pneg %p77
      $region22: #{_lambda_.7} parent=15 // pred_check_branch
        %424 = sbr.rel (%p422) target = $region24
      $region23: #{_lambda_.7} parent=15 // pred_region
        %p425 = scmp.lt.s32.totalorder %s27, 1
        %s426 = scalar_select %p425, %s27, 1
        %s427 = smul.addr %s426, 6
        %s428 = smul.addr %s427, 4
        %s429 = scalar_lea.vmem %s1, %s428
      $region24: #{_lambda_.7} parent=15 // pred_fallthru
        _
      // Predicated region
      $region25: #{_lambda_.7} parent=15 // pred_check
        %p430 = pneg %p103
      $region26: #{_lambda_.7} parent=15 // pred_check_branch
        %432 = sbr.rel (%p430) target = $region28
      $region27: #{_lambda_.7} parent=15 // pred_region
        %p433 = scmp.lt.s32.totalorder %s27, 1
        %s434 = scalar_select %p433, %s27, 1
        %s435 = smul.addr %s434, 3
        %s436 = scalar_lea.vmem %s2, %s435
      $region28: #{_lambda_.7} parent=15 // pred_fallthru
        _
      // Predicated region
      $region29: #{_lambda_.7} parent=15 // pred_check
        %p437 = pneg %p129
      $region30: #{_lambda_.7} parent=15 // pred_check_branch
        %439 = sbr.rel (%p437) target = $region32
      $region31: #{_lambda_.7} parent=15 // pred_region
        %p440 = scmp.lt.s32.totalorder %s27, 1
        %s441 = scalar_select %p440, %s27, 1
        %s442 = smul.addr %s441, 16
        %s443 = smul.addr %s442, 4
        %s444 = scalar_lea.vmem %s3, %s443
      $region32: #{_lambda_.7} parent=15 // pred_fallthru
        _
      // Predicated region
      $region33: #{_lambda_.7} parent=15 // pred_check
        %p445 = pneg %p155
      $region34: #{_lambda_.7} parent=15 // pred_check_branch
        %447 = sbr.rel (%p445) target = $region36
      $region35: #{_lambda_.7} parent=15 // pred_region
        %p448 = scmp.lt.s32.totalorder %s27, 1
        %s449 = scalar_select %p448, %s27, 1
        %s450 = scalar_lea.vmem %s4, %s449
      $region36: #{_lambda_.7} parent=15 // pred_fallthru
        _
      // Predicated region
      $region37: #{_lambda_.7} parent=15 // pred_check
        %p451 = pneg %p181
      $region38: #{_lambda_.7} parent=15 // pred_check_branch
        %453 = sbr.rel (%p451) target = $region40
      $region39: #{_lambda_.7} parent=15 // pred_region
        %p454 = scmp.lt.s32.totalorder %s27, 1
        %s455 = scalar_select %p454, %s27, 1
        %s456 = scalar_lea.vmem %s5, %s455
      $region40: #{_lambda_.7} parent=15 // pred_fallthru
        _
      // Predicated region
      $region41: #{_lambda_.7} parent=15 // pred_check
        %p457 = pneg %p207
      $region42: #{_lambda_.7} parent=15 // pred_check_branch
        %459 = sbr.rel (%p457) target = $region44
      $region43: #{_lambda_.7} parent=15 // pred_region
        %p460 = scmp.lt.s32.totalorder %s27, 1
        %s461 = scalar_select %p460, %s27, 1
        %s462 = scalar_lea.vmem %s6, %s461
      $region44: #{_lambda_.7} parent=15 // pred_fallthru
        _
      // Predicated region
      $region45: #{_lambda_.7} parent=15 // pred_check
        %p463 = pneg %p233
      $region46: #{_lambda_.7} parent=15 // pred_check_branch
        %465 = sbr.rel (%p463) target = $region48
      $region47: #{_lambda_.7} parent=15 // pred_region
        %p466 = scmp.lt.s32.totalorder %s27, 1
        %s467 = scalar_select %p466, %s27, 1
        %s468 = smul.addr %s467, 2
        %s469 = smul.addr %s468, 4
        %s470 = scalar_lea.vmem %s7, %s469
      $region48: #{_lambda_.7} parent=15 // pred_fallthru
        _
      // Predicated region
      $region49: #{_lambda_.7} parent=15 // pred_check
        %p471 = pneg %p259
      $region50: #{_lambda_.7} parent=15 // pred_check_branch
        %473 = sbr.rel (%p471) target = $region52
      $region51: #{_lambda_.7} parent=15 // pred_region
        %p474 = scmp.lt.s32.totalorder %s27, 1
        %s475 = scalar_select %p474, %s27, 1
        %s476 = scalar_lea.vmem %s8, %s475
      $region52: #{_lambda_.7} parent=15 // pred_fallthru
        _
      // Predicated region
      $region53: #{_lambda_.7} parent=15 // pred_check
        %p477 = pneg %p285
      $region54: #{_lambda_.7} parent=15 // pred_check_branch
        %479 = sbr.rel (%p477) target = $region56
      $region55: #{_lambda_.7} parent=15 // pred_region
        %p480 = scmp.lt.s32.totalorder %s27, 1
        %s481 = scalar_select %p480, %s27, 1
        %s482 = smul.addr %s481, 4
        %s483 = smul.addr %s482, 4
        %s484 = scalar_lea.vmem %s9, %s483
      $region56: #{_lambda_.7} parent=15 // pred_fallthru
        _
      // Predicated region
      $region57: #{_lambda_.7} parent=15 // pred_check
        %p485 = pneg %p311
      $region58: #{_lambda_.7} parent=15 // pred_check_branch
        %487 = sbr.rel (%p485) target = $region60
      $region59: #{_lambda_.7} parent=15 // pred_region
        %p488 = scmp.lt.s32.totalorder %s27, 1
        %s489 = scalar_select %p488, %s27, 1
        %s490 = scalar_lea.vmem %s10, %s489
      $region60: #{_lambda_.7} parent=15 // pred_fallthru
        _
      // Predicated region
      $region61: #{_lambda_.7} parent=15 // pred_check
        %p491 = pneg %p337
      $region62: #{_lambda_.7} parent=15 // pred_check_branch
        %493 = sbr.rel (%p491) target = $region64
      $region63: #{_lambda_.7} parent=15 // pred_region
        %p494 = scmp.lt.s32.totalorder %s27, 1
        %s495 = scalar_select %p494, %s27, 1
        %s496 = scalar_lea.vmem %s11, %s495
      $region64: #{_lambda_.7} parent=15 // pred_fallthru
        _
      // Predicated region
      $region65: #{_lambda_.7} parent=15 // pred_check
        %p497 = pneg %p363
      $region66: #{_lambda_.7} parent=15 // pred_check_branch
        %499 = sbr.rel (%p497) target = $region68
      $region67: #{_lambda_.7} parent=15 // pred_region
        %p500 = scmp.lt.s32.totalorder %s27, 1
        %s501 = scalar_select %p500, %s27, 1
        %s502 = scalar_lea.vmem %s12, %s501
      $region68: #{_lambda_.7} parent=15 // pred_fallthru
        _
    $region16: #{_lambda_.7} parent=5 // pred_fallthru
      _
    %p503 = scmp.le.s32.totalorder 1, %s19
    %p504 = scmp.lt.s32.totalorder %s19, 5
    %p505 = pnand %p503, %p504
    %p506 = pneg %p505
    // Predicated region
    $region69: #{_lambda_.7} parent=5 // pred_check
      _
    $region70: #{_lambda_.7} parent=5 // pred_check_branch
      %508 = sbr.rel (%p505) target = $region72
    $region71: #{_lambda_.7} parent=5 // pred_region
      %s509 = ssub.s32 %s19, 1
      %p510 = scmp.lt.s32.totalorder %s28, 1
      %s511 = scalar_select %p510, %s28, 1
      %s512 = smul.addr %s511, 2
      %s513 = smul.addr %s512, 8
      %s514 = scalar_lea.vmem %s0, %s513
      %p515 = pneg %p57
      %p516 = pneg %p54
      %p517 = scmp.lt.s32.totalorder %s29, 1
      %s518 = scalar_select %p517, %s29, 1
      %s519 = smul.addr %s518, 6
      %s520 = smul.addr %s519, 4
      %s521 = scalar_lea.vmem %s1, %s520
      %p522 = pneg %p83
      %p523 = pneg %p80
      %p524 = scmp.lt.s32.totalorder %s29, 1
      %s525 = scalar_select %p524, %s29, 1
      %s526 = smul.addr %s525, 3
      %s527 = scalar_lea.vmem %s2, %s526
      %p528 = pneg %p109
      %p529 = pneg %p106
      %p530 = scmp.lt.s32.totalorder %s29, 1
      %s531 = scalar_select %p530, %s29, 1
      %s532 = smul.addr %s531, 16
      %s533 = smul.addr %s532, 4
      %s534 = scalar_lea.vmem %s3, %s533
      %p535 = pneg %p135
      %p536 = pneg %p132
      %p537 = scmp.lt.s32.totalorder %s29, 1
      %s538 = scalar_select %p537, %s29, 1
      %s539 = scalar_lea.vmem %s4, %s538
      %p540 = pneg %p161
      %p541 = pneg %p158
      %p542 = scmp.lt.s32.totalorder %s29, 1
      %s543 = scalar_select %p542, %s29, 1
      %s544 = scalar_lea.vmem %s5, %s543
      %p545 = pneg %p187
      %p546 = pneg %p184
      %p547 = scmp.lt.s32.totalorder %s29, 1
      %s548 = scalar_select %p547, %s29, 1
      %s549 = scalar_lea.vmem %s6, %s548
      %p550 = pneg %p213
      %p551 = pneg %p210
      %p552 = scmp.lt.s32.totalorder %s29, 1
      %s553 = scalar_select %p552, %s29, 1
      %s554 = smul.addr %s553, 2
      %s555 = smul.addr %s554, 4
      %s556 = scalar_lea.vmem %s7, %s555
      %p557 = pneg %p239
      %p558 = pneg %p236
      %p559 = scmp.lt.s32.totalorder %s29, 1
      %s560 = scalar_select %p559, %s29, 1
      %s561 = scalar_lea.vmem %s8, %s560
      %p562 = pneg %p265
      %p563 = pneg %p262
      %p564 = scmp.lt.s32.totalorder %s29, 1
      %s565 = scalar_select %p564, %s29, 1
      %s566 = smul.addr %s565, 4
      %s567 = smul.addr %s566, 4
      %s568 = scalar_lea.vmem %s9, %s567
      %p569 = pneg %p291
      %p570 = pneg %p288
      %p571 = scmp.lt.s32.totalorder %s29, 1
      %s572 = scalar_select %p571, %s29, 1
      %s573 = scalar_lea.vmem %s10, %s572
      %p574 = pneg %p317
      %p575 = pneg %p314
      %p576 = scmp.lt.s32.totalorder %s29, 1
      %s577 = scalar_select %p576, %s29, 1
      %s578 = scalar_lea.vmem %s11, %s577
      %p579 = pneg %p343
      %p580 = pneg %p340
      %p581 = scmp.lt.s32.totalorder %s29, 1
      %s582 = scalar_select %p581, %s29, 1
      %s583 = scalar_lea.vmem %s12, %s582
      %p584 = pneg %p369
      %p585 = pneg %p366
      %p586 = pneg %p395
      %p587 = pneg %p392
      %p588 = scmp.lt.s32.totalorder %s28, 1
      %s589 = scalar_select %p588, %s28, 1
      %s590 = smul.addr %s589, 2
      %s591 = smul.addr %s590, 8
      %s592 = scalar_lea.vmem %s13, %s591
      %p593 = scmp.lt.s32.totalorder %s28, 1
      %s594 = scalar_select %p593, %s28, 1
      %s595 = smul.addr %s594, 2
      %s596 = smul.addr %s595, 8
      %s597 = scalar_lea.vmem %s0, %s596
      %p598 = scmp.lt.s32.totalorder %s29, 1
      %s599 = scalar_select %p598, %s29, 1
      %s600 = smul.addr %s599, 6
      %s601 = smul.addr %s600, 4
      %s602 = scalar_lea.vmem %s1, %s601
      %p603 = scmp.lt.s32.totalorder %s29, 1
      %s604 = scalar_select %p603, %s29, 1
      %s605 = smul.addr %s604, 3
      %s606 = scalar_lea.vmem %s2, %s605
      %p607 = scmp.lt.s32.totalorder %s29, 1
      %s608 = scalar_select %p607, %s29, 1
      %s609 = smul.addr %s608, 16
      %s610 = smul.addr %s609, 4
      %s611 = scalar_lea.vmem %s3, %s610
      %p612 = scmp.lt.s32.totalorder %s29, 1
      %s613 = scalar_select %p612, %s29, 1
      %s614 = scalar_lea.vmem %s4, %s613
      %p615 = scmp.lt.s32.totalorder %s29, 1
      %s616 = scalar_select %p615, %s29, 1
      %s617 = scalar_lea.vmem %s5, %s616
      %p618 = scmp.lt.s32.totalorder %s29, 1
      %s619 = scalar_select %p618, %s29, 1
      %s620 = scalar_lea.vmem %s6, %s619
      %p621 = scmp.lt.s32.totalorder %s29, 1
      %s622 = scalar_select %p621, %s29, 1
      %s623 = smul.addr %s622, 2
      %s624 = smul.addr %s623, 4
      %s625 = scalar_lea.vmem %s7, %s624
      %p626 = scmp.lt.s32.totalorder %s29, 1
      %s627 = scalar_select %p626, %s29, 1
      %s628 = scalar_lea.vmem %s8, %s627
      %p629 = scmp.lt.s32.totalorder %s29, 1
      %s630 = scalar_select %p629, %s29, 1
      %s631 = smul.addr %s630, 4
      %s632 = smul.addr %s631, 4
      %s633 = scalar_lea.vmem %s9, %s632
      %p634 = scmp.lt.s32.totalorder %s29, 1
      %s635 = scalar_select %p634, %s29, 1
      %s636 = scalar_lea.vmem %s10, %s635
      %p637 = scmp.lt.s32.totalorder %s29, 1
      %s638 = scalar_select %p637, %s29, 1
      %s639 = scalar_lea.vmem %s11, %s638
      %p640 = scmp.lt.s32.totalorder %s29, 1
      %s641 = scalar_select %p640, %s29, 1
      %s642 = scalar_lea.vmem %s12, %s641
      %p643 = scmp.lt.s32.totalorder %s28, 1
      %s644 = scalar_select %p643, %s28, 1
      %s645 = smul.addr %s644, 2
      %s646 = smul.addr %s645, 8
      %s647 = scalar_lea.vmem %s13, %s646
      %p649 = scmp.eq.s32.totalorder %s29, 0
      // Predicated region
      $region73: #{_lambda_.7} parent=71 // pred_check
        %p650 = pneg %p649
      $region74: #{_lambda_.7} parent=71 // pred_check_branch
        %652 = sbr.rel (%p650) target = $region76
      $region75: #{_lambda_.7} parent=71 // pred_region
        %v653 = vld [vmem:[%s597] sm:$0xff]
        %v654 = vld [vmem:[%s597 + $0x8] sm:$0xff]
        %vm655 = vcmask 130048
        %656 = vst.msk [vmem:[#allocation2] sm:$0xff] %vm655, %v653
        %657 = vst.msk [vmem:[#allocation2 + $0x8] sm:$0xff] %vm655, %v654
      $region76: #{_lambda_.7} parent=71 // pred_fallthru
        _
      %v658 = vld [vmem:[#allocation2] sm:$0xff]
      %v659 = vld [vmem:[#allocation2 + $0x8] sm:$0xff]
      %v660 = vpack.c.bf16 %v659, %v658
      %v661 = vld [vmem:[%s602] sm:$0xff]
      %v662 = vld [vmem:[%s602 + $0x8] sm:$0xf]
      %v663 = vld [vmem:[%s602 + $0xc] sm:$0xff]
      %v664 = vld [vmem:[%s602 + $0x14] sm:$0xf]
      %v665 = vld [vmem:[%s606] sm:$0x7]
      %v667 = vlaneseq
      %v668 = vshrl.u32 %v667, 7
      %v669 = vsub.s32 0, %v668
      %v670 = vrot.slane %v665, %v669
      %v671 = vlaneseq
      %v672 = vshrl.u32 %v671, 7
      %v673 = vsub.s32 1, %v672
      %v674 = vrot.slane %v665, %v673
      %v675 = vlaneseq
      %v676 = vshrl.u32 %v675, 7
      %v677 = vsub.s32 2, %v676
      %v678 = vrot.slane %v665, %v677
      %v686 = vunpack.c.l.b16 %v661
      %v687 = vunpack.c.h.b16 %v661
      %v688 = vunpack.c.l.b16 %v662
      %v689 = vunpack.c.l.b16 %v663
      %v690 = vunpack.c.h.b16 %v663
      %v691 = vunpack.c.l.b16 %v664
      %v692 = vpack.c.b16 %v689, %v686
      %v693 = vpack.c.b16 %v690, %v687
      %v694 = vpack.c.b16 %v691, %v688
      %vm698 = vcmask 130048
      %v700 = vsel %vm698, %v660, 0
      %702 = vmatprep.subr.bf16.mxu0 %v693
      %703 = vmatpush1.bf16.msra.mxu0 %v692
      %704 = vmatprep.subr.bf16.mxu0 0
      %705 = vmatpush1.bf16.msra.mxu0 0
      %706 = vmatprep.subr.bf16.mxu0 0
      %707 = vmatpush1.bf16.msra.mxu0 0
      %708 = vmatprep.subr.bf16.mxu0 0
      %709 = vmatpush1.bf16.msra.mxu0 0
      %710 = vmatprep.subr.bf16.mxu0 0
      %711 = vmatpush1.bf16.msra.mxu0 0
      %712 = vmatprep.subr.bf16.mxu0 0
      %713 = vmatpush1.bf16.msra.mxu0 0
      %714 = vmatprep.subr.bf16.mxu0 0
      %715 = vmatpush1.bf16.msra.mxu0 0
      %716 = vmatprep.subr.bf16.mxu0 0
      %717 = vmatpush1.bf16.msra.mxu0 0
      %718 = vmatprep.subr.bf16.mxu0 0
      %719 = vmatpush1.bf16.msra.mxu0 0
      %720 = vmatprep.subr.bf16.mxu0 0
      %721 = vmatpush1.bf16.msra.mxu0 0
      %722 = vmatprep.subr.bf16.mxu0 0
      %723 = vmatpush1.bf16.msra.mxu0 0
      %724 = vmatprep.subr.bf16.mxu0 0
      %725 = vmatpush1.bf16.msra.mxu0 0
      %726 = vmatprep.subr.bf16.mxu0 0
      %727 = vmatpush1.bf16.msra.mxu0 0
      %728 = vmatprep.subr.bf16.mxu0 0
      %729 = vmatpush1.bf16.msra.mxu0 0
      %730 = vmatprep.subr.bf16.mxu0 0
      %731 = vmatpush1.bf16.msra.mxu0 0
      %732 = vmatprep.subr.bf16.mxu0 0
      %733 = vmatpush1.bf16.msra.mxu0 0
      %734 = vmatprep.mubr.bf16.mxu0 0
      %735 = vmatmul.mubr.bf16.gmra.mrb[0].mxu0 %v700
      %v736 = vpop.f32.mrb[0].mxu0
      %v737 = vadd.f32 %v670, %v736
      %v738 = vpop.f32.mrb[0].mxu0
      %v739 = vadd.f32 %v674, %v738
      %v740 = vpop.f32.mrb[0].mxu0
      %v741 = vadd.f32 %v670, %v740
      %v742 = vpop.f32.mrb[0].mxu0
      %v743 = vadd.f32 %v674, %v742
      %744 = vdwg.mxu0
      %745 = vmatprep.subr.bf16.mxu0 0
      %746 = vmatpush1.bf16.msra.mxu0 %v694
      %747 = vmatprep.subr.bf16.mxu0 0
      %748 = vmatpush1.bf16.msra.mxu0 0
      %749 = vmatprep.subr.bf16.mxu0 0
      %750 = vmatpush1.bf16.msra.mxu0 0
      %751 = vmatprep.subr.bf16.mxu0 0
      %752 = vmatpush1.bf16.msra.mxu0 0
      %753 = vmatprep.subr.bf16.mxu0 0
      %754 = vmatpush1.bf16.msra.mxu0 0
      %755 = vmatprep.subr.bf16.mxu0 0
      %756 = vmatpush1.bf16.msra.mxu0 0
      %757 = vmatprep.subr.bf16.mxu0 0
      %758 = vmatpush1.bf16.msra.mxu0 0
      %759 = vmatprep.subr.bf16.mxu0 0
      %760 = vmatpush1.bf16.msra.mxu0 0
      %761 = vmatprep.subr.bf16.mxu0 0
      %762 = vmatpush1.bf16.msra.mxu0 0
      %763 = vmatprep.subr.bf16.mxu0 0
      %764 = vmatpush1.bf16.msra.mxu0 0
      %765 = vmatprep.subr.bf16.mxu0 0
      %766 = vmatpush1.bf16.msra.mxu0 0
      %767 = vmatprep.subr.bf16.mxu0 0
      %768 = vmatpush1.bf16.msra.mxu0 0
      %769 = vmatprep.subr.bf16.mxu0 0
      %770 = vmatpush1.bf16.msra.mxu0 0
      %771 = vmatprep.subr.bf16.mxu0 0
      %772 = vmatpush1.bf16.msra.mxu0 0
      %773 = vmatprep.subr.bf16.mxu0 0
      %774 = vmatpush1.bf16.msra.mxu0 0
      %775 = vmatprep.subr.bf16.mxu0 0
      %776 = vmatpush1.bf16.msra.mxu0 0
      %777 = vmatprep.mubr.bf16.mxu0 0
      %778 = vmatmul.mubr.bf16.gmra.mrb[0].mxu0 %v700
      %v779 = vpop.f32.mrb[0].mxu0
      %v780 = vadd.f32 %v678, %v779
      %v781 = vpop.f32.mrb[0].mxu0
      %v782 = vpop.f32.mrb[0].mxu0
      %v783 = vadd.f32 %v678, %v782
      %v784 = vpop.f32.mrb[0].mxu0
      %785 = vdwg.mxu0
      %v786 = vpack.c.bf16 %v741, %v737
      %v787 = vpack.c.bf16 %v743, %v739
      %v788 = vpack.c.bf16 %v783, %v780
      %vm789 = vcmask 523264
      %v791 = vsel %vm789, %v786, 0
      %v794 = vsel %vm789, %v787, 0
      %796 = vmatprep.subr.bf16.mxu0 0
      %797 = vmatpush1.bf16.xpose.msra.mxu0 %v794
      %798 = vmatprep.subr.bf16.mxu0 0
      %799 = vmatpush1.bf16.xpose.msra.mxu0 0
      %800 = vmatprep.subr.bf16.mxu0 0
      %801 = vmatpush1.bf16.xpose.msra.mxu0 0
      %802 = vmatprep.subr.bf16.mxu0 0
      %803 = vmatpush1.bf16.xpose.msra.mxu0 0
      %804 = vmatprep.subr.bf16.mxu0 0
      %805 = vmatpush1.bf16.xpose.msra.mxu0 0
      %806 = vmatprep.subr.bf16.mxu0 0
      %807 = vmatpush1.bf16.xpose.msra.mxu0 0
      %808 = vmatprep.subr.bf16.mxu0 0
      %809 = vmatpush1.bf16.xpose.msra.mxu0 0
      %810 = vmatprep.subr.bf16.mxu0 0
      %811 = vmatpush1.bf16.xpose.msra.mxu0 0
      %812 = vmatprep.subr.bf16.mxu0 0
      %813 = vmatpush1.bf16.xpose.msra.mxu0 0
      %814 = vmatprep.subr.bf16.mxu0 0
      %815 = vmatpush1.bf16.xpose.msra.mxu0 0
      %816 = vmatprep.subr.bf16.mxu0 0
      %817 = vmatpush1.bf16.xpose.msra.mxu0 0
      %818 = vmatprep.subr.bf16.mxu0 0
      %819 = vmatpush1.bf16.xpose.msra.mxu0 0
      %820 = vmatprep.subr.bf16.mxu0 0
      %821 = vmatpush1.bf16.xpose.msra.mxu0 0
      %822 = vmatprep.subr.bf16.mxu0 0
      %823 = vmatpush1.bf16.xpose.msra.mxu0 0
      %824 = vmatprep.subr.bf16.mxu0 0
      %825 = vmatpush1.bf16.xpose.msra.mxu0 0
      %826 = vmatprep.subr.bf16.mxu0 0
      %827 = vmatpush1.bf16.xpose.msra.mxu0 0
      %828 = vmatprep.mubr.bf16.mxu0 0
      %829 = vmatmul.mubr.bf16.gmra.mrb[0].mxu0 %v791
      %v830 = vpop.f32.mrb[0].mxu0
      %v831 = vadd.f32 0.0, %v830
      %v832 = vpop.f32.mrb[0].mxu0
      %v833 = vpop.f32.mrb[0].mxu0
      %v834 = vadd.f32 0.0, %v833
      %v835 = vpop.f32.mrb[0].mxu0
      %836 = vdwg.mxu0
      %v837 = vmul.f32 %v831, 0.35355338
      %v838 = vmul.f32 %v834, 0.35355338
      %v839 = vsel %vm698, %v837, -inf
      %840 = vmax.xlane.f32.xlu0 %v839
      %v841 = vpop.xlane.xlu0 %840
      %v842 = vsel %vm698, %v838, -inf
      %843 = vmax.xlane.f32.xlu0 %v842
      %v844 = vpop.xlane.xlu0 %843
      %v845 = vsub.f32 %v837, %v841
      %v846 = vsub.f32 %v838, %v844
      %v847 = vmul.f32 %v845, 1.442695
      %v848 = vpow.pop %v847
      %v849 = vmul.f32 %v846, 1.442695
      %v850 = vpow.pop %v849
      %v851 = vsel %vm698, %v848, 0.0
      %852 = vadd.xlane.f32.xlu0 %v851
      %v853 = vpop.xlane.xlu0 %852
      %v854 = vsel %vm698, %v850, 0.0
      %855 = vadd.xlane.f32.xlu0 %v854
      %v856 = vpop.xlane.xlu0 %855
      %v857 = vrcp.pop %v853
      %v858 = vrcp.pop %v856
      %v859 = vmul.f32 %v848, %v857
      %v860 = vmul.f32 %v850, %v858
      %v861 = vpack.c.bf16 %v860, %v859
      %v863 = vsel %vm698, %v861, 0
      %865 = vmatprep.subr.bf16.mxu0 0
      %866 = vmatpush1.bf16.msra.mxu0 %v788
      %867 = vmatprep.subr.bf16.mxu0 0
      %868 = vmatpush1.bf16.msra.mxu0 0
      %869 = vmatprep.subr.bf16.mxu0 0
      %870 = vmatpush1.bf16.msra.mxu0 0
      %871 = vmatprep.subr.bf16.mxu0 0
      %872 = vmatpush1.bf16.msra.mxu0 0
      %873 = vmatprep.subr.bf16.mxu0 0
      %874 = vmatpush1.bf16.msra.mxu0 0
      %875 = vmatprep.subr.bf16.mxu0 0
      %876 = vmatpush1.bf16.msra.mxu0 0
      %877 = vmatprep.subr.bf16.mxu0 0
      %878 = vmatpush1.bf16.msra.mxu0 0
      %879 = vmatprep.subr.bf16.mxu0 0
      %880 = vmatpush1.bf16.msra.mxu0 0
      %881 = vmatprep.subr.bf16.mxu0 0
      %882 = vmatpush1.bf16.msra.mxu0 0
      %883 = vmatprep.subr.bf16.mxu0 0
      %884 = vmatpush1.bf16.msra.mxu0 0
      %885 = vmatprep.subr.bf16.mxu0 0
      %886 = vmatpush1.bf16.msra.mxu0 0
      %887 = vmatprep.subr.bf16.mxu0 0
      %888 = vmatpush1.bf16.msra.mxu0 0
      %889 = vmatprep.subr.bf16.mxu0 0
      %890 = vmatpush1.bf16.msra.mxu0 0
      %891 = vmatprep.subr.bf16.mxu0 0
      %892 = vmatpush1.bf16.msra.mxu0 0
      %893 = vmatprep.subr.bf16.mxu0 0
      %894 = vmatpush1.bf16.msra.mxu0 0
      %895 = vmatprep.subr.bf16.mxu0 0
      %896 = vmatpush1.bf16.msra.mxu0 0
      %897 = vmatprep.mubr.bf16.mxu0 0
      %898 = vmatmul.mubr.bf16.gmra.mrb[0].mxu0 %v863
      %v899 = vpop.f32.mrb[0].mxu0
      %v900 = vadd.f32 0.0, %v899
      %v901 = vpop.f32.mrb[0].mxu0
      %v902 = vpop.f32.mrb[0].mxu0
      %v903 = vadd.f32 0.0, %v902
      %v904 = vpop.f32.mrb[0].mxu0
      %905 = vdwg.mxu0
      %906 = vst.msk [vmem:[#allocation3] sm:$0xff] %vm789, %v900
      %907 = vst.msk [vmem:[#allocation3 + $0x8] sm:$0xff] %vm789, %v903
      %909 = vrot.lane.b32.xlu0 %v786, 64
      %v910 = vpop.permute.xlu0 %909
      %912 = vrot.lane.b32.xlu0 %v787, 64
      %v913 = vpop.permute.xlu0 %912
      %v915 = vsel %vm789, %v910, 0
      %v918 = vsel %vm789, %v913, 0
      %920 = vmatprep.subr.bf16.mxu0 0
      %921 = vmatpush1.bf16.xpose.msra.mxu0 %v918
      %922 = vmatprep.subr.bf16.mxu0 0
      %923 = vmatpush1.bf16.xpose.msra.mxu0 0
      %924 = vmatprep.subr.bf16.mxu0 0
      %925 = vmatpush1.bf16.xpose.msra.mxu0 0
      %926 = vmatprep.subr.bf16.mxu0 0
      %927 = vmatpush1.bf16.xpose.msra.mxu0 0
      %928 = vmatprep.subr.bf16.mxu0 0
      %929 = vmatpush1.bf16.xpose.msra.mxu0 0
      %930 = vmatprep.subr.bf16.mxu0 0
      %931 = vmatpush1.bf16.xpose.msra.mxu0 0
      %932 = vmatprep.subr.bf16.mxu0 0
      %933 = vmatpush1.bf16.xpose.msra.mxu0 0
      %934 = vmatprep.subr.bf16.mxu0 0
      %935 = vmatpush1.bf16.xpose.msra.mxu0 0
      %936 = vmatprep.subr.bf16.mxu0 0
      %937 = vmatpush1.bf16.xpose.msra.mxu0 0
      %938 = vmatprep.subr.bf16.mxu0 0
      %939 = vmatpush1.bf16.xpose.msra.mxu0 0
      %940 = vmatprep.subr.bf16.mxu0 0
      %941 = vmatpush1.bf16.xpose.msra.mxu0 0
      %942 = vmatprep.subr.bf16.mxu0 0
      %943 = vmatpush1.bf16.xpose.msra.mxu0 0
      %944 = vmatprep.subr.bf16.mxu0 0
      %945 = vmatpush1.bf16.xpose.msra.mxu0 0
      %946 = vmatprep.subr.bf16.mxu0 0
      %947 = vmatpush1.bf16.xpose.msra.mxu0 0
      %948 = vmatprep.subr.bf16.mxu0 0
      %949 = vmatpush1.bf16.xpose.msra.mxu0 0
      %950 = vmatprep.subr.bf16.mxu0 0
      %951 = vmatpush1.bf16.xpose.msra.mxu0 0
      %952 = vmatprep.mubr.bf16.mxu0 0
      %953 = vmatmul.mubr.bf16.gmra.mrb[0].mxu0 %v915
      %v954 = vpop.f32.mrb[0].mxu0
      %v955 = vadd.f32 0.0, %v954
      %v956 = vpop.f32.mrb[0].mxu0
      %v957 = vpop.f32.mrb[0].mxu0
      %v958 = vadd.f32 0.0, %v957
      %v959 = vpop.f32.mrb[0].mxu0
      %960 = vdwg.mxu0
      %v961 = vmul.f32 %v955, 0.35355338
      %v962 = vmul.f32 %v958, 0.35355338
      %v963 = vsel %vm698, %v961, -inf
      %964 = vmax.xlane.f32.xlu0 %v963
      %v965 = vpop.xlane.xlu0 %964
      %v966 = vsel %vm698, %v962, -inf
      %967 = vmax.xlane.f32.xlu0 %v966
      %v968 = vpop.xlane.xlu0 %967
      %v969 = vsub.f32 %v961, %v965
      %v970 = vsub.f32 %v962, %v968
      %v971 = vmul.f32 %v969, 1.442695
      %v972 = vpow.pop %v971
      %v973 = vmul.f32 %v970, 1.442695
      %v974 = vpow.pop %v973
      %v975 = vsel %vm698, %v972, 0.0
      %976 = vadd.xlane.f32.xlu0 %v975
      %v977 = vpop.xlane.xlu0 %976
      %v978 = vsel %vm698, %v974, 0.0
      %979 = vadd.xlane.f32.xlu0 %v978
      %v980 = vpop.xlane.xlu0 %979
      %v981 = vrcp.pop %v977
      %v982 = vrcp.pop %v980
      %v983 = vmul.f32 %v972, %v981
      %v984 = vmul.f32 %v974, %v982
      %v985 = vpack.c.bf16 %v984, %v983
      %987 = vrot.lane.b32.xlu0 %v788, 64
      %v988 = vpop.permute.xlu0 %987
      %v991 = vsel %vm698, %v985, 0
      %993 = vmatprep.subr.bf16.mxu0 0
      %994 = vmatpush1.bf16.msra.mxu0 %v988
      %995 = vmatprep.subr.bf16.mxu0 0
      %996 = vmatpush1.bf16.msra.mxu0 0
      %997 = vmatprep.subr.bf16.mxu0 0
      %998 = vmatpush1.bf16.msra.mxu0 0
      %999 = vmatprep.subr.bf16.mxu0 0
      %1000 = vmatpush1.bf16.msra.mxu0 0
      %1001 = vmatprep.subr.bf16.mxu0 0
      %1002 = vmatpush1.bf16.msra.mxu0 0
      %1003 = vmatprep.subr.bf16.mxu0 0
      %1004 = vmatpush1.bf16.msra.mxu0 0
      %1005 = vmatprep.subr.bf16.mxu0 0
      %1006 = vmatpush1.bf16.msra.mxu0 0
      %1007 = vmatprep.subr.bf16.mxu0 0
      %1008 = vmatpush1.bf16.msra.mxu0 0
      %1009 = vmatprep.subr.bf16.mxu0 0
      %1010 = vmatpush1.bf16.msra.mxu0 0
      %1011 = vmatprep.subr.bf16.mxu0 0
      %1012 = vmatpush1.bf16.msra.mxu0 0
      %1013 = vmatprep.subr.bf16.mxu0 0
      %1014 = vmatpush1.bf16.msra.mxu0 0
      %1015 = vmatprep.subr.bf16.mxu0 0
      %1016 = vmatpush1.bf16.msra.mxu0 0
      %1017 = vmatprep.subr.bf16.mxu0 0
      %1018 = vmatpush1.bf16.msra.mxu0 0
      %1019 = vmatprep.subr.bf16.mxu0 0
      %1020 = vmatpush1.bf16.msra.mxu0 0
      %1021 = vmatprep.subr.bf16.mxu0 0
      %1022 = vmatpush1.bf16.msra.mxu0 0
      %1023 = vmatprep.subr.bf16.mxu0 0
      %1024 = vmatpush1.bf16.msra.mxu0 0
      %1025 = vmatprep.mubr.bf16.mxu0 0
      %1026 = vmatmul.mubr.bf16.gmra.mrb[0].mxu0 %v991
      %v1027 = vpop.f32.mrb[0].mxu0
      %v1028 = vadd.f32 0.0, %v1027
      %v1029 = vpop.f32.mrb[0].mxu0
      %v1030 = vpop.f32.mrb[0].mxu0
      %v1031 = vadd.f32 0.0, %v1030
      %v1032 = vpop.f32.mrb[0].mxu0
      %1033 = vdwg.mxu0
      %1036 = vrot.lane.b32.xlu0 %v1028, 64
      %v1037 = vpop.permute.xlu0 %1036
      %1038 = vrot.lane.b32.xlu0 %v1031, 64
      %v1039 = vpop.permute.xlu0 %1038
      %vm1042 = vcmask 1048064
      %1043 = vst.msk [vmem:[#allocation3] sm:$0xff] %vm1042, %v1037
      %1044 = vst.msk [vmem:[#allocation3 + $0x8] sm:$0xff] %vm1042, %v1039
      %v1045 = vld [vmem:[#allocation3] sm:$0xff]
      %v1046 = vld [vmem:[#allocation3 + $0x8] sm:$0xff]
      %v1047 = vpack.c.bf16 %v1046, %v1045
      %v1048 = vld [vmem:[%s611] sm:$0xf]
      %v1049 = vld [vmem:[%s611 + $0x4] sm:$0xf]
      %v1050 = vld [vmem:[%s611 + $0x8] sm:$0xf]
      %v1051 = vld [vmem:[%s611 + $0xc] sm:$0xf]
      %v1052 = vld [vmem:[%s611 + $0x10] sm:$0xf]
      %v1053 = vld [vmem:[%s611 + $0x14] sm:$0xf]
      %v1054 = vld [vmem:[%s611 + $0x18] sm:$0xf]
      %v1055 = vld [vmem:[%s611 + $0x1c] sm:$0xf]
      %v1056 = vld [vmem:[%s611 + $0x20] sm:$0xf]
      %v1057 = vld [vmem:[%s611 + $0x24] sm:$0xf]
      %v1058 = vld [vmem:[%s611 + $0x28] sm:$0xf]
      %v1059 = vld [vmem:[%s611 + $0x2c] sm:$0xf]
      %v1060 = vld [vmem:[%s611 + $0x30] sm:$0xf]
      %v1061 = vld [vmem:[%s611 + $0x34] sm:$0xf]
      %v1062 = vld [vmem:[%s611 + $0x38] sm:$0xf]
      %v1063 = vld [vmem:[%s611 + $0x3c] sm:$0xf]
      %v1064 = vld [vmem:[%s614] sm:$0x1]
      %v1066 = vlaneseq
      %v1067 = vshrl.u32 %v1066, 7
      %v1068 = vsub.s32 0, %v1067
      %v1069 = vrot.slane %v1064, %v1068
      %v1087 = vunpack.c.l.b16 %v1048
      %v1088 = vunpack.c.l.b16 %v1049
      %v1089 = vunpack.c.l.b16 %v1050
      %v1090 = vunpack.c.l.b16 %v1051
      %v1091 = vunpack.c.l.b16 %v1052
      %v1092 = vunpack.c.l.b16 %v1053
      %v1093 = vunpack.c.l.b16 %v1054
      %v1094 = vunpack.c.l.b16 %v1055
      %v1095 = vunpack.c.l.b16 %v1056
      %v1096 = vunpack.c.l.b16 %v1057
      %v1097 = vunpack.c.l.b16 %v1058
      %v1098 = vunpack.c.l.b16 %v1059
      %v1099 = vunpack.c.l.b16 %v1060
      %v1100 = vunpack.c.l.b16 %v1061
      %v1101 = vunpack.c.l.b16 %v1062
      %v1102 = vunpack.c.l.b16 %v1063
      %v1103 = vpack.c.b16 %v1088, %v1087
      %v1104 = vpack.c.b16 %v1090, %v1089
      %v1105 = vpack.c.b16 %v1092, %v1091
      %v1106 = vpack.c.b16 %v1094, %v1093
      %v1107 = vpack.c.b16 %v1096, %v1095
      %v1108 = vpack.c.b16 %v1098, %v1097
      %v1109 = vpack.c.b16 %v1100, %v1099
      %v1110 = vpack.c.b16 %v1102, %v1101
      %1119 = vmatprep.subr.bf16.mxu0 0
      %1120 = vmatpush1.bf16.msra.mxu0 %v1103
      %1121 = vmatprep.subr.bf16.mxu0 0
      %1122 = vmatpush1.bf16.msra.mxu0 %v1104
      %1123 = vmatprep.subr.bf16.mxu0 0
      %1124 = vmatpush1.bf16.msra.mxu0 %v1105
      %1125 = vmatprep.subr.bf16.mxu0 0
      %1126 = vmatpush1.bf16.msra.mxu0 %v1106
      %1127 = vmatprep.subr.bf16.mxu0 0
      %1128 = vmatpush1.bf16.msra.mxu0 %v1107
      %1129 = vmatprep.subr.bf16.mxu0 0
      %1130 = vmatpush1.bf16.msra.mxu0 %v1108
      %1131 = vmatprep.subr.bf16.mxu0 0
      %1132 = vmatpush1.bf16.msra.mxu0 %v1109
      %1133 = vmatprep.subr.bf16.mxu0 0
      %1134 = vmatpush1.bf16.msra.mxu0 %v1110
      %1135 = vmatprep.subr.bf16.mxu0 0
      %1136 = vmatpush1.bf16.msra.mxu0 0
      %1137 = vmatprep.subr.bf16.mxu0 0
      %1138 = vmatpush1.bf16.msra.mxu0 0
      %1139 = vmatprep.subr.bf16.mxu0 0
      %1140 = vmatpush1.bf16.msra.mxu0 0
      %1141 = vmatprep.subr.bf16.mxu0 0
      %1142 = vmatpush1.bf16.msra.mxu0 0
      %1143 = vmatprep.subr.bf16.mxu0 0
      %1144 = vmatpush1.bf16.msra.mxu0 0
      %1145 = vmatprep.subr.bf16.mxu0 0
      %1146 = vmatpush1.bf16.msra.mxu0 0
      %1147 = vmatprep.subr.bf16.mxu0 0
      %1148 = vmatpush1.bf16.msra.mxu0 0
      %1149 = vmatprep.subr.bf16.mxu0 0
      %1150 = vmatpush1.bf16.msra.mxu0 0
      %1151 = vmatprep.mubr.bf16.mxu0 0
      %1152 = vmatmul.mubr.bf16.gmra.mrb[0].mxu0 %v1047
      %v1153 = vpop.f32.mrb[0].mxu0
      %v1154 = vadd.f32 %v1069, %v1153
      %v1155 = vpop.f32.mrb[0].mxu0
      %v1156 = vpop.f32.mrb[0].mxu0
      %v1157 = vadd.f32 %v1069, %v1156
      %v1158 = vpop.f32.mrb[0].mxu0
      %1159 = vdwg.mxu0
      %v1160 = vadd.f32 %v658, %v1154
      %v1161 = vadd.f32 %v659, %v1157
      %v1162 = vsel %vm698, %v1160, 0.0
      %1163 = vadd.xlane.f32.xlu0 %v1162
      %v1164 = vpop.xlane.xlu0 %1163
      %v1165 = vsel %vm698, %v1161, 0.0
      %1166 = vadd.xlane.f32.xlu0 %v1165
      %v1167 = vpop.xlane.xlu0 %1166
      %v1168 = vrcp.pop 16.0
      %v1169 = vmul.f32 %v1164, %v1168
      %v1170 = vmul.f32 %v1167, %v1168
      %v1171 = vsub.f32 %v1160, %v1169
      %v1172 = vsub.f32 %v1161, %v1170
      %v1173 = vmul.f32 %v1171, %v1171
      %v1174 = vmul.f32 %v1172, %v1172
      %v1175 = vsel %vm698, %v1173, 0.0
      %1176 = vadd.xlane.f32.xlu0 %v1175
      %v1177 = vpop.xlane.xlu0 %1176
      %v1178 = vsel %vm698, %v1174, 0.0
      %1179 = vadd.xlane.f32.xlu0 %v1178
      %v1180 = vpop.xlane.xlu0 %1179
      %v1181 = vmul.f32 %v1177, %v1168
      %v1182 = vmul.f32 %v1180, %v1168
      %v1183 = vadd.f32 %v1181, 1e-05
      %v1184 = vadd.f32 %v1182, 1e-05
      %v1185 = vrsqrt.pop %v1183
      %v1186 = vrsqrt.pop %v1184
      %v1187 = vmul.f32 %v1171, %v1185
      %v1188 = vmul.f32 %v1172, %v1186
      %v1189 = vld [vmem:[%s617] sm:$0x1]
      %v1191 = vlaneseq
      %v1192 = vshrl.u32 %v1191, 7
      %v1193 = vsub.s32 0, %v1192
      %v1194 = vrot.slane %v1189, %v1193
      %v1196 = vmul.f32 %v1187, %v1194
      %v1197 = vmul.f32 %v1188, %v1194
      %v1198 = vld [vmem:[%s620] sm:$0x1]
      %v1200 = vlaneseq
      %v1201 = vshrl.u32 %v1200, 7
      %v1202 = vsub.s32 0, %v1201
      %v1203 = vrot.slane %v1198, %v1202
      %v1205 = vadd.f32 %v1196, %v1203
      %v1206 = vadd.f32 %v1197, %v1203
      %v1207 = vpack.c.bf16 %v1206, %v1205
      %v1208 = vld [vmem:[%s625] sm:$0xf]
      %v1209 = vld [vmem:[%s625 + $0x4] sm:$0xf]
      %v1210 = vld [vmem:[%s628] sm:$0x1]
      %v1212 = vlaneseq
      %v1213 = vshrl.u32 %v1212, 7
      %v1214 = vsub.s32 0, %v1213
      %v1215 = vrot.slane %v1210, %v1214
      %v1219 = vunpack.c.l.b16 %v1208
      %v1220 = vunpack.c.l.b16 %v1209
      %v1221 = vpack.c.b16 %v1220, %v1219
      %v1224 = vsel %vm698, %v1207, 0
      %1226 = vmatprep.subr.bf16.mxu0 0
      %1227 = vmatpush1.bf16.msra.mxu0 %v1221
      %1228 = vmatprep.subr.bf16.mxu0 0
      %1229 = vmatpush1.bf16.msra.mxu0 0
      %1230 = vmatprep.subr.bf16.mxu0 0
      %1231 = vmatpush1.bf16.msra.mxu0 0
      %1232 = vmatprep.subr.bf16.mxu0 0
      %1233 = vmatpush1.bf16.msra.mxu0 0
      %1234 = vmatprep.subr.bf16.mxu0 0
      %1235 = vmatpush1.bf16.msra.mxu0 0
      %1236 = vmatprep.subr.bf16.mxu0 0
      %1237 = vmatpush1.bf16.msra.mxu0 0
      %1238 = vmatprep.subr.bf16.mxu0 0
      %1239 = vmatpush1.bf16.msra.mxu0 0
      %1240 = vmatprep.subr.bf16.mxu0 0
      %1241 = vmatpush1.bf16.msra.mxu0 0
      %1242 = vmatprep.subr.bf16.mxu0 0
      %1243 = vmatpush1.bf16.msra.mxu0 0
      %1244 = vmatprep.subr.bf16.mxu0 0
      %1245 = vmatpush1.bf16.msra.mxu0 0
      %1246 = vmatprep.subr.bf16.mxu0 0
      %1247 = vmatpush1.bf16.msra.mxu0 0
      %1248 = vmatprep.subr.bf16.mxu0 0
      %1249 = vmatpush1.bf16.msra.mxu0 0
      %1250 = vmatprep.subr.bf16.mxu0 0
      %1251 = vmatpush1.bf16.msra.mxu0 0
      %1252 = vmatprep.subr.bf16.mxu0 0
      %1253 = vmatpush1.bf16.msra.mxu0 0
      %1254 = vmatprep.subr.bf16.mxu0 0
      %1255 = vmatpush1.bf16.msra.mxu0 0
      %1256 = vmatprep.subr.bf16.mxu0 0
      %1257 = vmatpush1.bf16.msra.mxu0 0
      %1258 = vmatprep.mubr.bf16.mxu0 0
      %1259 = vmatmul.mubr.bf16.gmra.mrb[0].mxu0 %v1224
      %v1260 = vpop.f32.mrb[0].mxu0
      %v1261 = vadd.f32 %v1215, %v1260
      %v1262 = vpop.f32.mrb[0].mxu0
      %v1263 = vpop.f32.mrb[0].mxu0
      %v1264 = vadd.f32 %v1215, %v1263
      %v1265 = vpop.f32.mrb[0].mxu0
      %1266 = vdwg.mxu0
      %v1267 = vmax.f32 %v1261, 0.0
      %v1268 = vmax.f32 %v1264, 0.0
      %v1269 = vpack.c.bf16 %v1268, %v1267
      %v1270 = vld [vmem:[%s633] sm:$0xf]
      %v1271 = vld [vmem:[%s633 + $0x4] sm:$0xf]
      %v1272 = vld [vmem:[%s633 + $0x8] sm:$0xf]
      %v1273 = vld [vmem:[%s633 + $0xc] sm:$0xf]
      %v1274 = vld [vmem:[%s636] sm:$0x1]
      %v1276 = vlaneseq
      %v1277 = vshrl.u32 %v1276, 7
      %v1278 = vsub.s32 0, %v1277
      %v1279 = vrot.slane %v1274, %v1278
      %v1285 = vunpack.c.l.b16 %v1270
      %v1286 = vunpack.c.l.b16 %v1271
      %v1287 = vunpack.c.l.b16 %v1272
      %v1288 = vunpack.c.l.b16 %v1273
      %v1289 = vpack.c.b16 %v1286, %v1285
      %v1290 = vpack.c.b16 %v1288, %v1287
      %vm1293 = vcmask 261120
      %v1295 = vsel %vm1293, %v1269, 0
      %1297 = vmatprep.subr.bf16.mxu0 0
      %1298 = vmatpush1.bf16.msra.mxu0 %v1289
      %1299 = vmatprep.subr.bf16.mxu0 0
      %1300 = vmatpush1.bf16.msra.mxu0 %v1290
      %1301 = vmatprep.subr.bf16.mxu0 0
      %1302 = vmatpush1.bf16.msra.mxu0 0
      %1303 = vmatprep.subr.bf16.mxu0 0
      %1304 = vmatpush1.bf16.msra.mxu0 0
      %1305 = vmatprep.subr.bf16.mxu0 0
      %1306 = vmatpush1.bf16.msra.mxu0 0
      %1307 = vmatprep.subr.bf16.mxu0 0
      %1308 = vmatpush1.bf16.msra.mxu0 0
      %1309 = vmatprep.subr.bf16.mxu0 0
      %1310 = vmatpush1.bf16.msra.mxu0 0
      %1311 = vmatprep.subr.bf16.mxu0 0
      %1312 = vmatpush1.bf16.msra.mxu0 0
      %1313 = vmatprep.subr.bf16.mxu0 0
      %1314 = vmatpush1.bf16.msra.mxu0 0
      %1315 = vmatprep.subr.bf16.mxu0 0
      %1316 = vmatpush1.bf16.msra.mxu0 0
      %1317 = vmatprep.subr.bf16.mxu0 0
      %1318 = vmatpush1.bf16.msra.mxu0 0
      %1319 = vmatprep.subr.bf16.mxu0 0
      %1320 = vmatpush1.bf16.msra.mxu0 0
      %1321 = vmatprep.subr.bf16.mxu0 0
      %1322 = vmatpush1.bf16.msra.mxu0 0
      %1323 = vmatprep.subr.bf16.mxu0 0
      %1324 = vmatpush1.bf16.msra.mxu0 0
      %1325 = vmatprep.subr.bf16.mxu0 0
      %1326 = vmatpush1.bf16.msra.mxu0 0
      %1327 = vmatprep.subr.bf16.mxu0 0
      %1328 = vmatpush1.bf16.msra.mxu0 0
      %1329 = vmatprep.mubr.bf16.mxu0 0
      %1330 = vmatmul.mubr.bf16.gmra.mrb[0].mxu0 %v1295
      %v1331 = vpop.f32.mrb[0].mxu0
      %v1332 = vadd.f32 %v1279, %v1331
      %v1333 = vpop.f32.mrb[0].mxu0
      %v1334 = vpop.f32.mrb[0].mxu0
      %v1335 = vadd.f32 %v1279, %v1334
      %v1336 = vpop.f32.mrb[0].mxu0
      %1337 = vdwg.mxu0
      %v1338 = vadd.f32 %v1205, %v1332
      %v1339 = vadd.f32 %v1206, %v1335
      %v1340 = vsel %vm698, %v1338, 0.0
      %1341 = vadd.xlane.f32.xlu0 %v1340
      %v1342 = vpop.xlane.xlu0 %1341
      %v1343 = vsel %vm698, %v1339, 0.0
      %1344 = vadd.xlane.f32.xlu0 %v1343
      %v1345 = vpop.xlane.xlu0 %1344
      %v1346 = vmul.f32 %v1342, %v1168
      %v1347 = vmul.f32 %v1345, %v1168
      %v1348 = vsub.f32 %v1338, %v1346
      %v1349 = vsub.f32 %v1339, %v1347
      %v1350 = vmul.f32 %v1348, %v1348
      %v1351 = vmul.f32 %v1349, %v1349
      %v1352 = vsel %vm698, %v1350, 0.0
      %1353 = vadd.xlane.f32.xlu0 %v1352
      %v1354 = vpop.xlane.xlu0 %1353
      %v1355 = vsel %vm698, %v1351, 0.0
      %1356 = vadd.xlane.f32.xlu0 %v1355
      %v1357 = vpop.xlane.xlu0 %1356
      %v1358 = vmul.f32 %v1354, %v1168
      %v1359 = vmul.f32 %v1357, %v1168
      %v1360 = vadd.f32 %v1358, 1e-05
      %v1361 = vadd.f32 %v1359, 1e-05
      %v1362 = vrsqrt.pop %v1360
      %v1363 = vrsqrt.pop %v1361
      %v1364 = vmul.f32 %v1348, %v1362
      %v1365 = vmul.f32 %v1349, %v1363
      %v1366 = vld [vmem:[%s639] sm:$0x1]
      %v1368 = vlaneseq
      %v1369 = vshrl.u32 %v1368, 7
      %v1370 = vsub.s32 0, %v1369
      %v1371 = vrot.slane %v1366, %v1370
      %v1373 = vmul.f32 %v1364, %v1371
      %v1374 = vmul.f32 %v1365, %v1371
      %v1375 = vld [vmem:[%s642] sm:$0x1]
      %v1377 = vlaneseq
      %v1378 = vshrl.u32 %v1377, 7
      %v1379 = vsub.s32 0, %v1378
      %v1380 = vrot.slane %v1375, %v1379
      %v1382 = vadd.f32 %v1373, %v1380
      %v1383 = vadd.f32 %v1374, %v1380
      %1384 = vst.msk [vmem:[#allocation2] sm:$0xff] %vm698, %v1382
      %1385 = vst.msk [vmem:[#allocation2 + $0x8] sm:$0xff] %vm698, %v1383
      %p1386 = scmp.eq.s32.totalorder %s29, 1
      // Predicated region
      $region77: #{_lambda_.7} parent=71 // pred_check
        %p1387 = pneg %p1386
      $region78: #{_lambda_.7} parent=71 // pred_check_branch
        %1389 = sbr.rel (%p1387) target = $region80
      $region79: #{_lambda_.7} parent=71 // pred_region
        %1390 = vst.msk [vmem:[%s647] sm:$0xff] %vm698, %v1382
        %1391 = vst.msk [vmem:[%s647 + $0x8] sm:$0xff] %vm698, %v1383
      $region80: #{_lambda_.7} parent=71 // pred_fallthru
        _
      %p1392 = scmp.lt.s32.totalorder %s28, 1
      %s1393 = scalar_select %p1392, %s28, 1
      %s1394 = smul.addr %s1393, 2
      %s1395 = smul.addr %s1394, 8
      %s1396 = scalar_lea.vmem %s13, %s1395
      // Predicated region
      $region81: #{_lambda_.7} parent=71 // pred_check
        %p1397 = pneg %p392
      $region82: #{_lambda_.7} parent=71 // pred_check_branch
        %1399 = sbr.rel (%p1397) target = $region84
      $region83: #{_lambda_.7} parent=71 // pred_region
        _
      $region84: #{_lambda_.7} parent=71 // pred_fallthru
        _
    $region72: #{_lambda_.7} parent=5 // pred_fallthru
      _
    %p1400 = scmp.le.s32.totalorder 2, %s19
    // Predicated region
    $region85: #{_lambda_.7} parent=5 // pred_check
      %p1401 = pneg %p1400
    $region86: #{_lambda_.7} parent=5 // pred_check_branch
      %1403 = sbr.rel (%p1401) target = $region88
    $region87: #{_lambda_.7} parent=5 // pred_region
      %s1404 = ssub.s32 %s19, 2
      // Predicated region
      $region89: #{_lambda_.7} parent=87 // pred_check
        %p1405 = pneg %p398
      $region90: #{_lambda_.7} parent=87 // pred_check_branch
        %1407 = sbr.rel (%p1405) target = $region92
      $region91: #{_lambda_.7} parent=87 // pred_region
        %p1408 = scmp.lt.s32.totalorder %s30, 1
        %s1409 = scalar_select %p1408, %s30, 1
        %s1410 = smul.addr %s1409, 2
        %s1411 = smul.addr %s1410, 8
        %s1412 = scalar_lea.vmem %s13, %s1411
      $region92: #{_lambda_.7} parent=87 // pred_fallthru
        _
    $region88: #{_lambda_.7} parent=5 // pred_fallthru
      _
  $region6: #{_lambda_.7} parent=0 // loop_footer
    %s23 = sadd.s32 1, %s19
  $region7: #{_lambda_.7} parent=0 // loop_footer_branch
    %18 = sbr.rel target = $region3
  $region8: #{_lambda_.7} parent=0 // loop_exit
    _

// kernel: _lambda_.11
$region0: #{_lambda_.11}
  #allocation0 [shape = 'u32[]', space=smem, size = 0x4, offset = 0x4, fixed_abs, tag = 'smem constant byte address 0x4 - core index']
  #allocation1 [shape = 'u32[144,128]{1,0:T(1,128)}', space=vmem, size = 0x12000, scoped, tag = 'internal scratch']
  #allocation2 [shape = 'f32[2,1]{1,0:T(2,128)}', space=vmem, size = 0x400, scoped, tag = 'scratch operand']
  #allocation3 [shape = 'f32[1,1]{1,0:T(1,128)S(1)}', space=vmem, size = 0x200, scoped, tag = 'scoped memory for _lambda_.11']
  %s0 = inlined_call_operand.vmem [shape: f32[2,32], index: 0, kind: input, shape index: {}]
  %s1 = inlined_call_operand.vmem [shape: bf16[32,1], index: 1, kind: input, shape index: {}]
  %s2 = inlined_call_operand.<no memory space> [shape: f32[1,1], index: 2, kind: input, shape index: {}]
  %s3 = inlined_call_operand.vmem [shape: f32[2,1], index: 3, kind: output, shape index: {}]
  %s4 = sld [smem:[#allocation0]]
  $region30: #{_lambda_.11} parent=0
    _
  %s6 = ssub.s32 1, %s4
  %s7 = scalar_select 0, %s6, %s4
  %v8 = vstv %s2
  %9 = vst [vmem:[#allocation3] sm:$0x1] %v8
  // Predicated region
  $region2: #{_lambda_.11} parent=0 // pred_check
    _
  $region3: #{_lambda_.11} parent=0 // pred_check_branch
    %11 = sbr.rel (0) target = $region5
  $region4: #{_lambda_.11} parent=0 // pred_region
    _
  $region5: #{_lambda_.11} parent=0 // pred_fallthru
    _
  // Predicated region
  $region6: #{_lambda_.11} parent=0 // pred_check
    _
  $region7: #{_lambda_.11} parent=0 // pred_check_branch
    %13 = sbr.rel (0) target = $region9
  $region8: #{_lambda_.11} parent=0 // pred_region
    _
  $region9: #{_lambda_.11} parent=0 // pred_fallthru
    _
  // Predicated region
  $region10: #{_lambda_.11} parent=0 // pred_check
    _
  $region11: #{_lambda_.11} parent=0 // pred_check_branch
    %15 = sbr.rel (0) target = $region13
  $region12: #{_lambda_.11} parent=0 // pred_region
    _
  $region13: #{_lambda_.11} parent=0 // pred_fallthru
    _
  %p17 = scmp.eq.s32.totalorder 0, 0
  // Predicated region
  $region14: #{_lambda_.11} parent=0 // pred_check
    %p18 = pneg %p17
  $region15: #{_lambda_.11} parent=0 // pred_check_branch
    %20 = sbr.rel (%p18) target = $region17
  $region16: #{_lambda_.11} parent=0 // pred_region
    %vm21 = vcmask 1024
    %22 = vst.msk [vmem:[#allocation2] sm:$0x3] %vm21, 0.0
  $region17: #{_lambda_.11} parent=0 // pred_fallthru
    _
  %v23 = vld [vmem:[#allocation2] sm:$0x3]
  %v24 = vld [vmem:[%s0] sm:$0x3]
  %v25 = vpack.c.bf16 %v24, %v24
  %v26 = vld [vmem:[%s1] sm:$0xf]
  %v27 = vld [vmem:[%s1 + $0x4] sm:$0xf]
  %v28 = vld [vmem:[%s1 + $0x8] sm:$0xf]
  %v29 = vld [vmem:[%s1 + $0xc] sm:$0xf]
  %v34 = vunpack.c.l.b16 %v26
  %v35 = vunpack.c.l.b16 %v27
  %v36 = vunpack.c.l.b16 %v28
  %v37 = vunpack.c.l.b16 %v29
  %v38 = vpack.c.b16 %v35, %v34
  %v39 = vpack.c.b16 %v37, %v36
  %vm42 = vcmask 261120
  %v44 = vsel %vm42, %v25, 0
  %46 = vmatprep.subr.bf16.mxu0 0
  %47 = vmatpush1.bf16.msra.mxu0 %v38
  %48 = vmatprep.subr.bf16.mxu0 0
  %49 = vmatpush1.bf16.msra.mxu0 %v39
  %50 = vmatprep.subr.bf16.mxu0 0
  %51 = vmatpush1.bf16.msra.mxu0 0
  %52 = vmatprep.subr.bf16.mxu0 0
  %53 = vmatpush1.bf16.msra.mxu0 0
  %54 = vmatprep.subr.bf16.mxu0 0
  %55 = vmatpush1.bf16.msra.mxu0 0
  %56 = vmatprep.subr.bf16.mxu0 0
  %57 = vmatpush1.bf16.msra.mxu0 0
  %58 = vmatprep.subr.bf16.mxu0 0
  %59 = vmatpush1.bf16.msra.mxu0 0
  %60 = vmatprep.subr.bf16.mxu0 0
  %61 = vmatpush1.bf16.msra.mxu0 0
  %62 = vmatprep.subr.bf16.mxu0 0
  %63 = vmatpush1.bf16.msra.mxu0 0
  %64 = vmatprep.subr.bf16.mxu0 0
  %65 = vmatpush1.bf16.msra.mxu0 0
  %66 = vmatprep.subr.bf16.mxu0 0
  %67 = vmatpush1.bf16.msra.mxu0 0
  %68 = vmatprep.subr.bf16.mxu0 0
  %69 = vmatpush1.bf16.msra.mxu0 0
  %70 = vmatprep.subr.bf16.mxu0 0
  %71 = vmatpush1.bf16.msra.mxu0 0
  %72 = vmatprep.subr.bf16.mxu0 0
  %73 = vmatpush1.bf16.msra.mxu0 0
  %74 = vmatprep.subr.bf16.mxu0 0
  %75 = vmatpush1.bf16.msra.mxu0 0
  %76 = vmatprep.subr.bf16.mxu0 0
  %77 = vmatpush1.bf16.msra.mxu0 0
  %78 = vmatprep.mubr.bf16.mxu0 0
  %79 = vmatmul.mubr.bf16.gmra.mrb[0].mxu0 %v44
  %v80 = vpop.f32.mrb[0].mxu0
  %v81 = vadd.f32 0.0, %v80
  %v82 = vpop.f32.mrb[0].mxu0
  %v83 = vpop.f32.mrb[0].mxu0
  %v84 = vpop.f32.mrb[0].mxu0
  %85 = vdwg.mxu0
  %v86 = vadd.f32 %v23, %v81
  %vm87 = vcmask 1024
  %88 = vst.msk [vmem:[#allocation2] sm:$0x3] %vm87, %v86
  // Predicated region
  $region18: #{_lambda_.11} parent=0 // pred_check
    %p89 = pneg %p17
  $region19: #{_lambda_.11} parent=0 // pred_check_branch
    %91 = sbr.rel (%p89) target = $region21
  $region20: #{_lambda_.11} parent=0 // pred_region
    %v92 = vld [vmem:[#allocation2] sm:$0x3]
    %v93 = vld [vmem:[#allocation3] sm:$0x1]
    %v95 = vlaneseq
    %v96 = vshrl.u32 %v95, 7
    %v97 = vsub.s32 0, %v96
    %v98 = vrot.slane %v93, %v97
    %v100 = vadd.f32 %v92, %v98
    %101 = vst.msk [vmem:[%s3] sm:$0x3] %vm87, %v100
  $region21: #{_lambda_.11} parent=0 // pred_fallthru
    _
  // Predicated region
  $region22: #{_lambda_.11} parent=0 // pred_check
    _
  $region23: #{_lambda_.11} parent=0 // pred_check_branch
    %103 = sbr.rel (0) target = $region25
  $region24: #{_lambda_.11} parent=0 // pred_region
    _
  $region25: #{_lambda_.11} parent=0 // pred_fallthru
    _
  // Predicated region
  $region26: #{_lambda_.11} parent=0 // pred_check
    _
  $region27: #{_lambda_.11} parent=0 // pred_check_branch
    %105 = sbr.rel (0) target = $region29
  $region28: #{_lambda_.11} parent=0 // pred_region
    _
  $region29: #{_lambda_.11} parent=0 // pred_fallthru
    _

// kernel: _lambda_.10
$region0: #{_lambda_.10}
  #allocation0 [shape = 'u32[]', space=smem, size = 0x4, offset = 0x4, fixed_abs, tag = 'smem constant byte address 0x4 - core index']
  #allocation1 [shape = 'u32[144,128]{1,0:T(1,128)}', space=vmem, size = 0x12000, scoped, tag = 'internal scratch']
  #allocation2 [shape = 'f32[2,32]{1,0:T(2,128)}', space=vmem, size = 0x400, scoped, tag = 'scratch operand']
  %s0 = inlined_call_operand.vmem [shape: f32[2,120], index: 0, kind: input, shape index: {}]
  %s1 = inlined_call_operand.vmem [shape: bf16[120,32], index: 1, kind: input, shape index: {}]
  %s2 = inlined_call_operand.vmem [shape: f32[1,32], index: 2, kind: input, shape index: {}]
  %s3 = inlined_call_operand.vmem [shape: f32[2,32], index: 3, kind: output, shape index: {}]
  %s4 = sld [smem:[#allocation0]]
  $region30: #{_lambda_.10} parent=0
    _
  %s6 = ssub.s32 1, %s4
  %s7 = scalar_select 0, %s6, %s4
  // Predicated region
  $region2: #{_lambda_.10} parent=0 // pred_check
    _
  $region3: #{_lambda_.10} parent=0 // pred_check_branch
    %9 = sbr.rel (0) target = $region5
  $region4: #{_lambda_.10} parent=0 // pred_region
    _
  $region5: #{_lambda_.10} parent=0 // pred_fallthru
    _
  // Predicated region
  $region6: #{_lambda_.10} parent=0 // pred_check
    _
  $region7: #{_lambda_.10} parent=0 // pred_check_branch
    %11 = sbr.rel (0) target = $region9
  $region8: #{_lambda_.10} parent=0 // pred_region
    _
  $region9: #{_lambda_.10} parent=0 // pred_fallthru
    _
  // Predicated region
  $region10: #{_lambda_.10} parent=0 // pred_check
    _
  $region11: #{_lambda_.10} parent=0 // pred_check_branch
    %13 = sbr.rel (0) target = $region13
  $region12: #{_lambda_.10} parent=0 // pred_region
    _
  $region13: #{_lambda_.10} parent=0 // pred_fallthru
    _
  %p15 = scmp.eq.s32.totalorder 0, 0
  // Predicated region
  $region14: #{_lambda_.10} parent=0 // pred_check
    %p16 = pneg %p15
  $region15: #{_lambda_.10} parent=0 // pred_check_branch
    %18 = sbr.rel (%p16) target = $region17
  $region16: #{_lambda_.10} parent=0 // pred_region
    %vm19 = vcmask 254976
    %20 = vst.msk [vmem:[#allocation2] sm:$0x3] %vm19, 0.0
  $region17: #{_lambda_.10} parent=0 // pred_fallthru
    _
  %v21 = vld [vmem:[#allocation2] sm:$0x3]
  %v22 = vld [vmem:[%s0] sm:$0x3]
  %v23 = vpack.c.bf16 %v22, %v22
  %v24 = vld [vmem:[%s1] sm:$0xf]
  %v25 = vld [vmem:[%s1 + $0x4] sm:$0xf]
  %v26 = vld [vmem:[%s1 + $0x8] sm:$0xf]
  %v27 = vld [vmem:[%s1 + $0xc] sm:$0xf]
  %v28 = vld [vmem:[%s1 + $0x10] sm:$0xf]
  %v29 = vld [vmem:[%s1 + $0x14] sm:$0xf]
  %v30 = vld [vmem:[%s1 + $0x18] sm:$0xf]
  %v31 = vld [vmem:[%s1 + $0x1c] sm:$0xf]
  %v32 = vld [vmem:[%s1 + $0x20] sm:$0xf]
  %v33 = vld [vmem:[%s1 + $0x24] sm:$0xf]
  %v34 = vld [vmem:[%s1 + $0x28] sm:$0xf]
  %v35 = vld [vmem:[%s1 + $0x2c] sm:$0xf]
  %v36 = vld [vmem:[%s1 + $0x30] sm:$0xf]
  %v37 = vld [vmem:[%s1 + $0x34] sm:$0xf]
  %v38 = vld [vmem:[%s1 + $0x38] sm:$0xf]
  %v54 = vunpack.c.l.b16 %v24
  %v55 = vunpack.c.l.b16 %v25
  %v56 = vunpack.c.l.b16 %v26
  %v57 = vunpack.c.l.b16 %v27
  %v58 = vunpack.c.l.b16 %v28
  %v59 = vunpack.c.l.b16 %v29
  %v60 = vunpack.c.l.b16 %v30
  %v61 = vunpack.c.l.b16 %v31
  %v62 = vunpack.c.l.b16 %v32
  %v63 = vunpack.c.l.b16 %v33
  %v64 = vunpack.c.l.b16 %v34
  %v65 = vunpack.c.l.b16 %v35
  %v66 = vunpack.c.l.b16 %v36
  %v67 = vunpack.c.l.b16 %v37
  %v68 = vunpack.c.l.b16 %v38
  %v69 = vpack.c.b16 %v55, %v54
  %v70 = vpack.c.b16 %v57, %v56
  %v71 = vpack.c.b16 %v59, %v58
  %v72 = vpack.c.b16 %v61, %v60
  %v73 = vpack.c.b16 %v63, %v62
  %v74 = vpack.c.b16 %v65, %v64
  %v75 = vpack.c.b16 %v67, %v66
  %v76 = vpack.c.b16 %v68, %v68
  %vm84 = vcmask 982016
  %v86 = vsel %vm84, %v23, 0
  %vm88 = vcmask 1043456
  %v90 = vsel %vm88, %v76, 0
  %92 = vmatprep.subr.bf16.mxu0 0
  %93 = vmatpush1.bf16.msra.mxu0 %v69
  %94 = vmatprep.subr.bf16.mxu0 0
  %95 = vmatpush1.bf16.msra.mxu0 %v70
  %96 = vmatprep.subr.bf16.mxu0 0
  %97 = vmatpush1.bf16.msra.mxu0 %v71
  %98 = vmatprep.subr.bf16.mxu0 0
  %99 = vmatpush1.bf16.msra.mxu0 %v72
  %100 = vmatprep.subr.bf16.mxu0 0
  %101 = vmatpush1.bf16.msra.mxu0 %v73
  %102 = vmatprep.subr.bf16.mxu0 0
  %103 = vmatpush1.bf16.msra.mxu0 %v74
  %104 = vmatprep.subr.bf16.mxu0 0
  %105 = vmatpush1.bf16.msra.mxu0 %v75
  %106 = vmatprep.subr.bf16.mxu0 0
  %107 = vmatpush1.bf16.msra.mxu0 %v90
  %108 = vmatprep.subr.bf16.mxu0 0
  %109 = vmatpush1.bf16.msra.mxu0 0
  %110 = vmatprep.subr.bf16.mxu0 0
  %111 = vmatpush1.bf16.msra.mxu0 0
  %112 = vmatprep.subr.bf16.mxu0 0
  %113 = vmatpush1.bf16.msra.mxu0 0
  %114 = vmatprep.subr.bf16.mxu0 0
  %115 = vmatpush1.bf16.msra.mxu0 0
  %116 = vmatprep.subr.bf16.mxu0 0
  %117 = vmatpush1.bf16.msra.mxu0 0
  %118 = vmatprep.subr.bf16.mxu0 0
  %119 = vmatpush1.bf16.msra.mxu0 0
  %120 = vmatprep.subr.bf16.mxu0 0
  %121 = vmatpush1.bf16.msra.mxu0 0
  %122 = vmatprep.subr.bf16.mxu0 0
  %123 = vmatpush1.bf16.msra.mxu0 0
  %124 = vmatprep.mubr.bf16.mxu0 0
  %125 = vmatmul.mubr.bf16.gmra.mrb[0].mxu0 %v86
  %v126 = vpop.f32.mrb[0].mxu0
  %v127 = vadd.f32 0.0, %v126
  %v128 = vpop.f32.mrb[0].mxu0
  %v129 = vpop.f32.mrb[0].mxu0
  %v130 = vpop.f32.mrb[0].mxu0
  %131 = vdwg.mxu0
  %v132 = vadd.f32 %v21, %v127
  %vm133 = vcmask 254976
  %134 = vst.msk [vmem:[#allocation2] sm:$0x3] %vm133, %v132
  // Predicated region
  $region18: #{_lambda_.10} parent=0 // pred_check
    %p135 = pneg %p15
  $region19: #{_lambda_.10} parent=0 // pred_check_branch
    %137 = sbr.rel (%p135) target = $region21
  $region20: #{_lambda_.10} parent=0 // pred_region
    %v138 = vld [vmem:[#allocation2] sm:$0x3]
    %v139 = vld [vmem:[%s2] sm:$0x1]
    %v141 = vlaneseq
    %v142 = vshrl.u32 %v141, 7
    %v143 = vsub.s32 0, %v142
    %v144 = vrot.slane %v139, %v143
    %v146 = vadd.f32 %v138, %v144
    %vm147 = vcmp.ge.f32.partialorder %v146, 0.0
    %v148 = vmul.f32 %v146, 0.01
    %v149 = vsel %vm147, %v146, %v148
    %150 = vst.msk [vmem:[%s3] sm:$0x3] %vm133, %v149
  $region21: #{_lambda_.10} parent=0 // pred_fallthru
    _
  // Predicated region
  $region22: #{_lambda_.10} parent=0 // pred_check
    _
  $region23: #{_lambda_.10} parent=0 // pred_check_branch
    %152 = sbr.rel (0) target = $region25
  $region24: #{_lambda_.10} parent=0 // pred_region
    _
  $region25: #{_lambda_.10} parent=0 // pred_fallthru
    _
  // Predicated region
  $region26: #{_lambda_.10} parent=0 // pred_check
    _
  $region27: #{_lambda_.10} parent=0 // pred_check_branch
    %154 = sbr.rel (0) target = $region29
  $region28: #{_lambda_.10} parent=0 // pred_region
    _
  $region29: #{_lambda_.10} parent=0 // pred_fallthru
    _

</llo_original>
